<compile_context>
chip_gen: v7x
topology: tpu7x:2x2x1
jax: 0.10.0
libtpu: 0.0.40
codegen_flags: <defaults>
</compile_context>

<pallas_src>
import functools

import jax
import jax.numpy as jnp
from jax import lax
from jax.experimental import pallas as pl
from jax.experimental.pallas import tpu as pltpu

KSIZE = 4
LRELU_SLOPE = 0.2
BN_EPS = 1e-5

TM = 256                        # M-tile; raise to 512/1024 on v5e/v6e (128 MiB VMEM)
TN_MAX = 512                    # keep full Cout panel resident when Cout <= TN_MAX
VMEM_LIMIT = 48 * 1024 * 1024   # <= ~48 MiB keeps the plan safe on v7x (64 MiB VMEM)


def _round_up(v, m):
    return (v + m - 1) // m * m


def _pick_div_tile(dim, candidates):
    for c in candidates:
        if dim >= c and dim % c == 0:
            return c
    return dim


def _pad_cols(mat, cp):
    c = mat.shape[-1]
    return mat if c == cp else jnp.pad(mat, ((0, 0), (0, cp - c)))


def _pad_vec(v, cp):
    return v if v.shape[0] == cp else jnp.pad(v, (0, cp - v.shape[0]))


def _act(y, act):
    if act == "leaky_relu":
        return jnp.where(y >= 0, y, LRELU_SLOPE * y)
    if act == "relu":
        return jnp.maximum(y, 0.0)
    return y


# ---------------------------------------------------------------------------
# Fused grouped matmul kernel (bias + BN stats + activation in the epilogue)
# ---------------------------------------------------------------------------
def _mm_kernel(*refs, n_a, n_w, pairs, act, stats, tm, m_valid):
    """For each output group p: o[p] = act(sum_{(a,w) in pairs[p]} a@w + bias).

    bf16 x bf16 MXU dots with f32 accumulation; optional per-channel sum/sumsq
    partials (pre-activation, padded rows masked) for a fused BatchNorm pass.
    """
    a_refs = refs[:n_a]
    w_refs = refs[n_a:n_a + n_w]
    b_ref = refs[n_a + n_w]
    o_ref = refs[n_a + n_w + 1]
    if stats:
        s_ref = refs[n_a + n_w + 2]
        q_ref = refs[n_a + n_w + 3]
        s_acc = jnp.zeros(s_ref.shape[1:], jnp.float32)
        q_acc = jnp.zeros(q_ref.shape[1:], jnp.float32)
        row_mask = None
        if m_valid is not None:
            rows = pl.program_id(1) * tm + lax.broadcasted_iota(
                jnp.int32, (tm, 1), 0)
            row_mask = rows < m_valid

    bias = b_ref[...]                                     # (1, tn) f32

    for p, plist in enumerate(pairs):
        acc = None
        for ai, wi in plist:
            d = jnp.dot(a_refs[ai][...], w_refs[wi][...],
                        preferred_element_type=jnp.float32)
            acc = d if acc is None else acc + d
        y = acc + bias
        if stats:
            ym = jnp.where(row_mask, y, 0.0) if row_mask is not None else y
            s_acc = s_acc + jnp.sum(ym, axis=0, keepdims=True)
            q_acc = q_acc + jnp.sum(ym * ym, axis=0, keepdims=True)
        y = _act(y, act)
        o_ref[p] = y.astype(o_ref.dtype)

    if stats:
        s_ref[0] = s_acc
        q_ref[0] = q_acc


def fused_matmul_groups(a_list, w_list, bias, pairs, *, act=None,
                        compute_stats=False, out_dtype=jnp.bfloat16):
    """a_list: [(M, K_i)] bf16 tap operands, w_list: [(K_i, Cp)] bf16 weights,
    bias: (Cp,) f32, pairs: per-output tuples of (a_idx, w_idx).

    Returns (y (n_out, Mp, Cp), [sum (Cp,), sumsq (Cp,)], Mp)."""
    M = a_list[0].shape[0]
    Cp = w_list[0].shape[1]
    n_out = len(pairs)
    assert all(a.shape[0] == M for a in a_list)
    assert all(w.shape[1] == Cp for w in w_list)
    assert Cp % 128 == 0

    tm = min(TM, _round_up(M, 8))
    Mp = _round_up(M, tm)
    if Mp != M:
        a_list = [jnp.pad(a, ((0, Mp - M), (0, 0))) for a in a_list]
    tn = Cp if Cp <= TN_MAX else _pick_div_tile(Cp, (512, 256, 128))
    n_blocks, m_blocks = Cp // tn, Mp // tm

    kernel = functools.partial(
        _mm_kernel, n_a=len(a_list), n_w=len(w_list), pairs=pairs, act=act,
        stats=compute_stats, tm=tm, m_valid=(M if Mp != M else None))

    in_specs = (
        [pl.BlockSpec((tm, a.shape[1]), lambda n, m: (m, 0)) for a in a_list]
        + [pl.BlockSpec((w.shape[0], tn), lambda n, m: (0, n)) for w in w_list]
        + [pl.BlockSpec((1, tn), lambda n, m: (0, n))])
    out_specs = [pl.BlockSpec((n_out, tm, tn), lambda n, m: (0, m, n))]
    out_shape = [jax.ShapeDtypeStruct((n_out, Mp, Cp), out_dtype)]
    if compute_stats:
        out_specs += [pl.BlockSpec((1, 1, tn), lambda n, m: (m, 0, n))] * 2
        out_shape += [jax.ShapeDtypeStruct((m_blocks, 1, Cp), jnp.float32)] * 2

    results = pl.pallas_call(
        kernel,
        out_shape=tuple(out_shape),
        grid_spec=pltpu.PrefetchScalarGridSpec(
            num_scalar_prefetch=0,
            grid=(n_blocks, m_blocks),
            in_specs=in_specs,
            out_specs=tuple(out_specs)),
        compiler_params=pltpu.CompilerParams(
            dimension_semantics=("parallel", "parallel"),
            vmem_limit_bytes=VMEM_LIMIT),
    )(*a_list, *w_list, bias.reshape(1, Cp).astype(jnp.float32))

    if compute_stats:
        y, s, q = results
        s = s.reshape(m_blocks, Cp).sum(axis=0)
        q = q.reshape(m_blocks, Cp).sum(axis=0)
        return y, s, q, Mp
    return results[0], Mp


# ---------------------------------------------------------------------------
# Fused BatchNorm apply (+ consumer activation + cast)
# ---------------------------------------------------------------------------
def _bn_apply_kernel(x_ref, sc_ref, sh_ref, o_ref, *, act):
    y = x_ref[...].astype(jnp.float32) * sc_ref[...] + sh_ref[...]
    y = _act(y, act)
    o_ref[...] = y.astype(o_ref.dtype)


def bn_apply(x2d, scale, shift, *, act=None, out_dtype=jnp.bfloat16):
    R, Cp = x2d.shape
    tr = _pick_div_tile(R, (2048, 1024, 512, 256, 128, 64, 32, 16, 8))
    return pl.pallas_call(
        functools.partial(_bn_apply_kernel, act=act),
        out_shape=jax.ShapeDtypeStruct((R, Cp), out_dtype),
        grid_spec=pltpu.PrefetchScalarGridSpec(
            num_scalar_prefetch=0,
            grid=(R // tr,),
            in_specs=[pl.BlockSpec((tr, Cp), lambda i: (i, 0)),
                      pl.BlockSpec((1, Cp), lambda i: (0, 0)),
                      pl.BlockSpec((1, Cp), lambda i: (0, 0))],
            out_specs=pl.BlockSpec((tr, Cp), lambda i: (i, 0))),
        compiler_params=pltpu.CompilerParams(
            dimension_semantics=("parallel",),
            vmem_limit_bytes=VMEM_LIMIT),
    )(x2d, scale.reshape(1, Cp).astype(jnp.float32),
      shift.reshape(1, Cp).astype(jnp.float32))


def _bn_scale_shift(s, q, count, gamma_p, beta_p):
    # Training-mode BatchNorm2d: biased batch variance.  Stats come from the f32
    # matmul accumulator via per-tile partial sums (hierarchical combine).
    # TODO(synk): E[x^2]-E[x]^2 can still lose precision for extreme N*H*W; a
    # centered two-pass reduction would be fully robust.
    mean = s / count
    var = jnp.maximum(q / count - mean * mean, 0.0)
    scale = gamma_p * lax.rsqrt(var + BN_EPS)
    shift = beta_p - mean * scale
    return scale, shift


# ---------------------------------------------------------------------------
# Conv / Deconv blocks
# ---------------------------------------------------------------------------
def conv2d_block(x, w, b, act_in, *, gamma=None, beta=None, out_act=None,
                 out_dtype=jnp.bfloat16):
    """out_act([BN](Conv2d(k=4,s=2,p=1)(act_in(x)))); w torch layout (Cout,Cin,4,4).

    16 per-tap (M, Cin) strided-slice operands -> one resident-weight Pallas
    matmul with bias / BN-stats / activation fused."""
    N, H, W_, Cin = x.shape
    Cout = w.shape[0]
    Ho, Wo = H // 2, W_ // 2
    M = N * Ho * Wo
    Cp = _round_up(Cout, 128)

    a = _act(x, act_in)
    xp = jnp.pad(a.astype(jnp.bfloat16), ((0, 0), (1, 1), (1, 1), (0, 0)))

    a_list, w_list = [], []
    for kh in range(KSIZE):
        for kw in range(KSIZE):
            a_list.append(
                xp[:, kh:kh + 2 * Ho:2, kw:kw + 2 * Wo:2, :].reshape(M, Cin))
            wm = jnp.transpose(w[:, :, kh, kw], (1, 0))          # (Cin, Cout)
            w_list.append(_pad_cols(wm, Cp).astype(jnp.bfloat16))
    pairs = (tuple((i, i) for i in range(KSIZE * KSIZE)),)
    bias_p = _pad_vec(b, Cp)

    if gamma is None:
        y, Mp = fused_matmul_groups(a_list, w_list, bias_p, pairs, act=out_act,
                                    compute_stats=False, out_dtype=out_dtype)
        y = y[0, :M, :Cout]
    else:
        y, s, q, Mp = fused_matmul_groups(a_list, w_list, bias_p, pairs,
                                          act=None, compute_stats=True,
                                          out_dtype=jnp.bfloat16)
        scale, shift = _bn_scale_shift(s, q, float(M),
                                       _pad_vec(gamma, Cp), _pad_vec(beta, Cp))
        y = bn_apply(y.reshape(Mp, Cp), scale, shift, act=out_act,
                     out_dtype=out_dtype)
        y = y[:M, :Cout]
    return y.reshape(N, Ho, Wo, Cout)


def _deconv_phases(parts, act_done, w, b):
    """4-phase ConvTranspose2d(k=4,s=2,p=1), ReLU fused on not-yet-activated parts.

    parts: NHWC tensors whose channels concat to the deconv input (the skip
    concat is never materialized).  w: torch layout (Cin_total, Cout, 4, 4).
    Each part contributes 9 shifted-window (M, Cin_p) tap operands shared by all
    4 output phases; all phases + BN stats run in ONE resident-weight pallas_call.
    Returns (y (4, Mp, Cp) bf16, sum (Cp,), sumsq (Cp,), meta)."""
    N, H, W_, _ = parts[0].shape
    M = N * H * W_
    Cout = w.shape[1]
    Cp = _round_up(Cout, 128)

    a_list, w_list = [], []
    pairs = [[], [], [], []]
    off = 0
    for part, done in zip(parts, act_done):
        cin = part.shape[-1]
        xa = part if done else jnp.maximum(part, 0.0)
        xp = jnp.pad(xa.astype(jnp.bfloat16), ((0, 0), (1, 1), (1, 1), (0, 0)))
        a_base = len(a_list)
        for r in range(3):
            for c in range(3):
                a_list.append(xp[:, r:r + H, c:c + W_, :].reshape(M, cin))
        w_base = len(w_list)
        wp = w[off:off + cin]                               # (cin, Cout, 4, 4)
        for kh in range(KSIZE):
            for kw in range(KSIZE):
                w_list.append(_pad_cols(wp[:, :, kh, kw], Cp).astype(jnp.bfloat16))
        # out[2q+di, 2r+dj] = sum_{a,b in {0,1}} xpad[q+di+a, r+dj+b] * w[:,:,3-2a-di, 3-2b-dj]
        for di in range(2):
            for dj in range(2):
                for aa in range(2):
                    for bb in range(2):
                        a_idx = a_base + (di + aa) * 3 + (dj + bb)
                        w_idx = w_base + (3 - 2 * aa - di) * 4 + (3 - 2 * bb - dj)
                        pairs[di * 2 + dj].append((a_idx, w_idx))
        off += cin

    y, s, q, Mp = fused_matmul_groups(
        a_list, w_list, _pad_vec(b, Cp), tuple(tuple(p) for p in pairs),
        compute_stats=True, out_dtype=jnp.bfloat16)
    return y, s, q, (N, H, W_, M, Mp, Cout, Cp)


def _interleave_phases(y4, N, H, W_, C):
    """(4, M, C) phase-major (di, dj) -> NHWC (N, 2H, 2W, C)."""
    y = y4.reshape(2, 2, N, H, W_, C)
    y = jnp.transpose(y, (2, 3, 0, 4, 1, 5))
    return y.reshape(N, 2 * H, 2 * W_, C)


def deconv2d_block(parts, act_done, w, b, gamma, beta, *, out_act=None,
                   out_dtype=jnp.bfloat16):
    """out_act(BN(ConvTranspose2d(k=4,s=2,p=1)(relu(cat(parts, -1)))))."""
    y, s, q, (N, H, W_, M, Mp, Cout, Cp) = _deconv_phases(parts, act_done, w, b)
    scale, shift = _bn_scale_shift(s, q, float(4 * M),
                                   _pad_vec(gamma, Cp), _pad_vec(beta, Cp))
    yn = bn_apply(y.reshape(4 * Mp, Cp), scale, shift, act=out_act,
                  out_dtype=out_dtype)
    yn = yn.reshape(4, Mp, Cp)[:, :M, :Cout]
    return _interleave_phases(yn, N, H, W_, Cout)


# ---------------------------------------------------------------------------
# ShareLayer forward
# ---------------------------------------------------------------------------
def share_layer(x, params):
    p = params
    # encoder: x2/x3 have two consumers (leaky_relu and relu), so they are kept
    # pre-activation (bf16) and activated at consumption.
    x2 = conv2d_block(x, p["rcb1_w"], p["rcb1_b"], "leaky_relu",
                      gamma=p["rcb1_g"], beta=p["rcb1_be"])
    x3 = conv2d_block(x2, p["rcb2_w"], p["rcb2_b"], "leaky_relu",
                      gamma=p["rcb2_g"], beta=p["rcb2_be"])
    x4 = conv2d_block(x3, p["conv_w"], p["conv_b"], "leaky_relu",
                      out_act="relu")                      # conv, no BN; rdcb3's ReLU fused
    # decoder: skip concats fed as separate split-K operand groups.
    d3 = deconv2d_block([x4], [True], p["rdcb3_w"], p["rdcb3_b"],
                        p["rdcb3_g"], p["rdcb3_be"], out_act="relu")
    d2 = deconv2d_block([d3, x3], [True, False], p["rdcb2_w"], p["rdcb2_b"],
                        p["rdcb2_g"], p["rdcb2_be"], out_act="relu")
    d1 = deconv2d_block([d2, x2], [True, False], p["rdcb1_w"], p["rdcb1_b"],
                        p["rdcb1_g"], p["rdcb1_be"], out_act=None,
                        out_dtype=jnp.float32)
    return jnp.concatenate([d1, x], axis=-1)
    # TODO(synk): BatchNorm running_mean/running_var buffer updates (training
    # side effect, unused by this forward pass) are not modeled.


def init_params(key, nsf):
    keys = jax.random.split(key, 12)

    def w(k, shape):
        return 0.05 * jax.random.normal(k, shape, jnp.float32)

    p = {
        "rcb1_w":  w(keys[0],  (nsf, nsf, KSIZE, KSIZE)), "rcb1_b":  w(keys[1],  (nsf,)),
        "rcb2_w":  w(keys[2],  (nsf, nsf, KSIZE, KSIZE)), "rcb2_b":  w(keys[3],  (nsf,)),
        "conv_w":  w(keys[4],  (nsf, nsf, KSIZE, KSIZE)), "conv_b":  w(keys[5],  (nsf,)),
        "rdcb3_w": w(keys[6],  (nsf, nsf, KSIZE, KSIZE)), "rdcb3_b": w(keys[7],  (nsf,)),
        "rdcb2_w": w(keys[8],  (2 * nsf, nsf, KSIZE, KSIZE)), "rdcb2_b": w(keys[9],  (nsf,)),
        "rdcb1_w": w(keys[10], (2 * nsf, nsf, KSIZE, KSIZE)), "rdcb1_b": w(keys[11], (nsf,)),
    }
    for name in ("rcb1", "rcb2", "rdcb3", "rdcb2", "rdcb1"):
        p[name + "_g"] = jnp.ones((nsf,), jnp.float32)    # BatchNorm weight
        p[name + "_be"] = jnp.zeros((nsf,), jnp.float32)  # BatchNorm bias
    return p


if __name__ == "__main__":
    nsf = 32          # stand-in for nsf=512 at small test size
    N, H, W = 2, 16, 16

    key = jax.random.PRNGKey(0)
    kx, kp = jax.random.split(key)
    x = jax.random.normal(kx, (N, H, W, nsf), dtype=jnp.float32)   # NHWC (== NCHW [2,32,16,16])
    params = init_params(kp, nsf)

    # Sanity check 1: tap-decomposed conv (bf16 MXU, bias fused) vs XLA conv.
    a = jnp.where(x >= 0, x, LRELU_SLOPE * x).astype(jnp.bfloat16).astype(jnp.float32)
    w_hwio = jnp.transpose(params["rcb1_w"], (2, 3, 1, 0)).astype(jnp.bfloat16).astype(jnp.float32)
    ref = lax.conv_general_dilated(
        a, w_hwio, window_strides=(2, 2), padding=((1, 1), (1, 1)),
        dimension_numbers=("NHWC", "HWIO", "NHWC"),
        precision=lax.Precision.HIGHEST) + params["rcb1_b"]
    got = conv2d_block(x, params["rcb1_w"], params["rcb1_b"], "leaky_relu",
                       out_act=None, out_dtype=jnp.float32)
    assert jnp.allclose(got, ref, atol=5e-2, rtol=5e-2), "conv kernel mismatch"

    # Sanity check 2: 4-phase tap-decomposed deconv (pre-BN) vs dilated-conv ref.
    xt = jax.random.normal(jax.random.PRNGKey(1), (N, 4, 4, nsf), jnp.float32)
    wt, bt = params["rdcb3_w"], params["rdcb3_b"]
    r_bf = jnp.maximum(xt, 0.0).astype(jnp.bfloat16).astype(jnp.float32)
    wt_hwio = jnp.transpose(wt[:, :, ::-1, ::-1], (2, 3, 0, 1)).astype(jnp.bfloat16).astype(jnp.float32)
    dref = lax.conv_general_dilated(
        r_bf, wt_hwio, window_strides=(1, 1), padding=((2, 2), (2, 2)),
        lhs_dilation=(2, 2), dimension_numbers=("NHWC", "HWIO", "NHWC"),
        precision=lax.Precision.HIGHEST) + bt
    y4, _, _, (n_, h_, w_, M_, Mp_, co_, cp_) = _deconv_phases([xt], [False], wt, bt)
    dgot = _interleave_phases(y4[:, :M_, :co_].astype(jnp.float32), n_, h_, w_, co_)
    assert jnp.allclose(dgot, dref, atol=5e-2, rtol=5e-2), "deconv kernel mismatch"

    out = jax.jit(share_layer)(x, params)
    out = jax.block_until_ready(out)
    assert out.shape == (N, H, W, 2 * nsf), out.shape
    assert bool(jnp.all(jnp.isfinite(out)))
    print("KERNEL_OK")
</pallas_src>

<mosaic_0001>
module attributes {stable_mosaic.version = 11 : i64} {
  func.func @_mm_kernel(%arg0: i32, %arg1: i32, %arg2: memref<128x32xbf16, #tpu.memory_space<vmem>>, %arg3: memref<128x32xbf16, #tpu.memory_space<vmem>>, %arg4: memref<128x32xbf16, #tpu.memory_space<vmem>>, %arg5: memref<128x32xbf16, #tpu.memory_space<vmem>>, %arg6: memref<128x32xbf16, #tpu.memory_space<vmem>>, %arg7: memref<128x32xbf16, #tpu.memory_space<vmem>>, %arg8: memref<128x32xbf16, #tpu.memory_space<vmem>>, %arg9: memref<128x32xbf16, #tpu.memory_space<vmem>>, %arg10: memref<128x32xbf16, #tpu.memory_space<vmem>>, %arg11: memref<128x32xbf16, #tpu.memory_space<vmem>>, %arg12: memref<128x32xbf16, #tpu.memory_space<vmem>>, %arg13: memref<128x32xbf16, #tpu.memory_space<vmem>>, %arg14: memref<128x32xbf16, #tpu.memory_space<vmem>>, %arg15: memref<128x32xbf16, #tpu.memory_space<vmem>>, %arg16: memref<128x32xbf16, #tpu.memory_space<vmem>>, %arg17: memref<128x32xbf16, #tpu.memory_space<vmem>>, %arg18: memref<32x128xbf16, #tpu.memory_space<vmem>>, %arg19: memref<32x128xbf16, #tpu.memory_space<vmem>>, %arg20: memref<32x128xbf16, #tpu.memory_space<vmem>>, %arg21: memref<32x128xbf16, #tpu.memory_space<vmem>>, %arg22: memref<32x128xbf16, #tpu.memory_space<vmem>>, %arg23: memref<32x128xbf16, #tpu.memory_space<vmem>>, %arg24: memref<32x128xbf16, #tpu.memory_space<vmem>>, %arg25: memref<32x128xbf16, #tpu.memory_space<vmem>>, %arg26: memref<32x128xbf16, #tpu.memory_space<vmem>>, %arg27: memref<32x128xbf16, #tpu.memory_space<vmem>>, %arg28: memref<32x128xbf16, #tpu.memory_space<vmem>>, %arg29: memref<32x128xbf16, #tpu.memory_space<vmem>>, %arg30: memref<32x128xbf16, #tpu.memory_space<vmem>>, %arg31: memref<32x128xbf16, #tpu.memory_space<vmem>>, %arg32: memref<32x128xbf16, #tpu.memory_space<vmem>>, %arg33: memref<32x128xbf16, #tpu.memory_space<vmem>>, %arg34: memref<1x128xf32, #tpu.memory_space<vmem>>, %arg35: memref<1x128x128xf32, #tpu.memory_space<vmem>>) attributes {dimension_semantics = [#tpu.dimension_semantics<parallel>, #tpu.dimension_semantics<parallel>], iteration_bounds = array<i64: 1, 1>, scalar_prefetch = 0 : i64, scratch_operands = 0 : i64, tpu.core_type = #tpu.core_type<tc>, window_params = [{transform_indices = @transform_0, window_bounds = array<i64: 128, 32>}, {transform_indices = @transform_1, window_bounds = array<i64: 128, 32>}, {transform_indices = @transform_2, window_bounds = array<i64: 128, 32>}, {transform_indices = @transform_3, window_bounds = array<i64: 128, 32>}, {transform_indices = @transform_4, window_bounds = array<i64: 128, 32>}, {transform_indices = @transform_5, window_bounds = array<i64: 128, 32>}, {transform_indices = @transform_6, window_bounds = array<i64: 128, 32>}, {transform_indices = @transform_7, window_bounds = array<i64: 128, 32>}, {transform_indices = @transform_8, window_bounds = array<i64: 128, 32>}, {transform_indices = @transform_9, window_bounds = array<i64: 128, 32>}, {transform_indices = @transform_10, window_bounds = array<i64: 128, 32>}, {transform_indices = @transform_11, window_bounds = array<i64: 128, 32>}, {transform_indices = @transform_12, window_bounds = array<i64: 128, 32>}, {transform_indices = @transform_13, window_bounds = array<i64: 128, 32>}, {transform_indices = @transform_14, window_bounds = array<i64: 128, 32>}, {transform_indices = @transform_15, window_bounds = array<i64: 128, 32>}, {transform_indices = @transform_16, window_bounds = array<i64: 32, 128>}, {transform_indices = @transform_17, window_bounds = array<i64: 32, 128>}, {transform_indices = @transform_18, window_bounds = array<i64: 32, 128>}, {transform_indices = @transform_19, window_bounds = array<i64: 32, 128>}, {transform_indices = @transform_20, window_bounds = array<i64: 32, 128>}, {transform_indices = @transform_21, window_bounds = array<i64: 32, 128>}, {transform_indices = @transform_22, window_bounds = array<i64: 32, 128>}, {transform_indices = @transform_23, window_bounds = array<i64: 32, 128>}, {transform_indices = @transform_24, window_bounds = array<i64: 32, 128>}, {transform_indices = @transform_25, window_bounds = array<i64: 32, 128>}, {transform_indices = @transform_26, window_bounds = array<i64: 32, 128>}, {transform_indices = @transform_27, window_bounds = array<i64: 32, 128>}, {transform_indices = @transform_28, window_bounds = array<i64: 32, 128>}, {transform_indices = @transform_29, window_bounds = array<i64: 32, 128>}, {transform_indices = @transform_30, window_bounds = array<i64: 32, 128>}, {transform_indices = @transform_31, window_bounds = array<i64: 32, 128>}, {transform_indices = @transform_32, window_bounds = array<i64: 1, 128>}, {transform_indices = @transform_33, window_bounds = array<i64: 1, 128, 128>}]} {
    %c0 = arith.constant 0 : index
    %c0_0 = arith.constant 0 : index
    %0 = vector.load %arg34[%c0, %c0_0] : memref<1x128xf32, #tpu.memory_space<vmem>>, vector<1x128xf32>
    %c0_1 = arith.constant 0 : index
    %c0_2 = arith.constant 0 : index
    %1 = vector.load %arg2[%c0_1, %c0_2] : memref<128x32xbf16, #tpu.memory_space<vmem>>, vector<128x32xbf16>
    %c0_3 = arith.constant 0 : index
    %c0_4 = arith.constant 0 : index
    %2 = vector.load %arg18[%c0_3, %c0_4] : memref<32x128xbf16, #tpu.memory_space<vmem>>, vector<32x128xbf16>
    %cst = arith.constant dense<0.000000e+00> : vector<128x128xf32>
    %3 = tpu.matmul %1, %2, %cst {dimension_numbers = #tpu.dot_dimension_numbers<[1], [0], [0], [1], [0, 0, 1, 1], [], []>} : vector<128x32xbf16>, vector<32x128xbf16>, vector<128x128xf32> -> vector<128x128xf32>
    %c0_5 = arith.constant 0 : index
    %c0_6 = arith.constant 0 : index
    %4 = vector.load %arg3[%c0_5, %c0_6] : memref<128x32xbf16, #tpu.memory_space<vmem>>, vector<128x32xbf16>
    %c0_7 = arith.constant 0 : index
    %c0_8 = arith.constant 0 : index
    %5 = vector.load %arg19[%c0_7, %c0_8] : memref<32x128xbf16, #tpu.memory_space<vmem>>, vector<32x128xbf16>
    %cst_9 = arith.constant dense<0.000000e+00> : vector<128x128xf32>
    %6 = tpu.matmul %4, %5, %cst_9 {dimension_numbers = #tpu.dot_dimension_numbers<[1], [0], [0], [1], [0, 0, 1, 1], [], []>} : vector<128x32xbf16>, vector<32x128xbf16>, vector<128x128xf32> -> vector<128x128xf32>
    %7 = arith.addf %3, %6 : vector<128x128xf32>
    %c0_10 = arith.constant 0 : index
    %c0_11 = arith.constant 0 : index
    %8 = vector.load %arg4[%c0_10, %c0_11] : memref<128x32xbf16, #tpu.memory_space<vmem>>, vector<128x32xbf16>
    %c0_12 = arith.constant 0 : index
    %c0_13 = arith.constant 0 : index
    %9 = vector.load %arg20[%c0_12, %c0_13] : memref<32x128xbf16, #tpu.memory_space<vmem>>, vector<32x128xbf16>
    %cst_14 = arith.constant dense<0.000000e+00> : vector<128x128xf32>
    %10 = tpu.matmul %8, %9, %cst_14 {dimension_numbers = #tpu.dot_dimension_numbers<[1], [0], [0], [1], [0, 0, 1, 1], [], []>} : vector<128x32xbf16>, vector<32x128xbf16>, vector<128x128xf32> -> vector<128x128xf32>
    %11 = arith.addf %7, %10 : vector<128x128xf32>
    %c0_15 = arith.constant 0 : index
    %c0_16 = arith.constant 0 : index
    %12 = vector.load %arg5[%c0_15, %c0_16] : memref<128x32xbf16, #tpu.memory_space<vmem>>, vector<128x32xbf16>
    %c0_17 = arith.constant 0 : index
    %c0_18 = arith.constant 0 : index
    %13 = vector.load %arg21[%c0_17, %c0_18] : memref<32x128xbf16, #tpu.memory_space<vmem>>, vector<32x128xbf16>
    %cst_19 = arith.constant dense<0.000000e+00> : vector<128x128xf32>
    %14 = tpu.matmul %12, %13, %cst_19 {dimension_numbers = #tpu.dot_dimension_numbers<[1], [0], [0], [1], [0, 0, 1, 1], [], []>} : vector<128x32xbf16>, vector<32x128xbf16>, vector<128x128xf32> -> vector<128x128xf32>
    %15 = arith.addf %11, %14 : vector<128x128xf32>
    %c0_20 = arith.constant 0 : index
    %c0_21 = arith.constant 0 : index
    %16 = vector.load %arg6[%c0_20, %c0_21] : memref<128x32xbf16, #tpu.memory_space<vmem>>, vector<128x32xbf16>
    %c0_22 = arith.constant 0 : index
    %c0_23 = arith.constant 0 : index
    %17 = vector.load %arg22[%c0_22, %c0_23] : memref<32x128xbf16, #tpu.memory_space<vmem>>, vector<32x128xbf16>
    %cst_24 = arith.constant dense<0.000000e+00> : vector<128x128xf32>
    %18 = tpu.matmul %16, %17, %cst_24 {dimension_numbers = #tpu.dot_dimension_numbers<[1], [0], [0], [1], [0, 0, 1, 1], [], []>} : vector<128x32xbf16>, vector<32x128xbf16>, vector<128x128xf32> -> vector<128x128xf32>
    %19 = arith.addf %15, %18 : vector<128x128xf32>
    %c0_25 = arith.constant 0 : index
    %c0_26 = arith.constant 0 : index
    %20 = vector.load %arg7[%c0_25, %c0_26] : memref<128x32xbf16, #tpu.memory_space<vmem>>, vector<128x32xbf16>
    %c0_27 = arith.constant 0 : index
    %c0_28 = arith.constant 0 : index
    %21 = vector.load %arg23[%c0_27, %c0_28] : memref<32x128xbf16, #tpu.memory_space<vmem>>, vector<32x128xbf16>
    %cst_29 = arith.constant dense<0.000000e+00> : vector<128x128xf32>
    %22 = tpu.matmul %20, %21, %cst_29 {dimension_numbers = #tpu.dot_dimension_numbers<[1], [0], [0], [1], [0, 0, 1, 1], [], []>} : vector<128x32xbf16>, vector<32x128xbf16>, vector<128x128xf32> -> vector<128x128xf32>
    %23 = arith.addf %19, %22 : vector<128x128xf32>
    %c0_30 = arith.constant 0 : index
    %c0_31 = arith.constant 0 : index
    %24 = vector.load %arg8[%c0_30, %c0_31] : memref<128x32xbf16, #tpu.memory_space<vmem>>, vector<128x32xbf16>
    %c0_32 = arith.constant 0 : index
    %c0_33 = arith.constant 0 : index
    %25 = vector.load %arg24[%c0_32, %c0_33] : memref<32x128xbf16, #tpu.memory_space<vmem>>, vector<32x128xbf16>
    %cst_34 = arith.constant dense<0.000000e+00> : vector<128x128xf32>
    %26 = tpu.matmul %24, %25, %cst_34 {dimension_numbers = #tpu.dot_dimension_numbers<[1], [0], [0], [1], [0, 0, 1, 1], [], []>} : vector<128x32xbf16>, vector<32x128xbf16>, vector<128x128xf32> -> vector<128x128xf32>
    %27 = arith.addf %23, %26 : vector<128x128xf32>
    %c0_35 = arith.constant 0 : index
    %c0_36 = arith.constant 0 : index
    %28 = vector.load %arg9[%c0_35, %c0_36] : memref<128x32xbf16, #tpu.memory_space<vmem>>, vector<128x32xbf16>
    %c0_37 = arith.constant 0 : index
    %c0_38 = arith.constant 0 : index
    %29 = vector.load %arg25[%c0_37, %c0_38] : memref<32x128xbf16, #tpu.memory_space<vmem>>, vector<32x128xbf16>
    %cst_39 = arith.constant dense<0.000000e+00> : vector<128x128xf32>
    %30 = tpu.matmul %28, %29, %cst_39 {dimension_numbers = #tpu.dot_dimension_numbers<[1], [0], [0], [1], [0, 0, 1, 1], [], []>} : vector<128x32xbf16>, vector<32x128xbf16>, vector<128x128xf32> -> vector<128x128xf32>
    %31 = arith.addf %27, %30 : vector<128x128xf32>
    %c0_40 = arith.constant 0 : index
    %c0_41 = arith.constant 0 : index
    %32 = vector.load %arg10[%c0_40, %c0_41] : memref<128x32xbf16, #tpu.memory_space<vmem>>, vector<128x32xbf16>
    %c0_42 = arith.constant 0 : index
    %c0_43 = arith.constant 0 : index
    %33 = vector.load %arg26[%c0_42, %c0_43] : memref<32x128xbf16, #tpu.memory_space<vmem>>, vector<32x128xbf16>
    %cst_44 = arith.constant dense<0.000000e+00> : vector<128x128xf32>
    %34 = tpu.matmul %32, %33, %cst_44 {dimension_numbers = #tpu.dot_dimension_numbers<[1], [0], [0], [1], [0, 0, 1, 1], [], []>} : vector<128x32xbf16>, vector<32x128xbf16>, vector<128x128xf32> -> vector<128x128xf32>
    %35 = arith.addf %31, %34 : vector<128x128xf32>
    %c0_45 = arith.constant 0 : index
    %c0_46 = arith.constant 0 : index
    %36 = vector.load %arg11[%c0_45, %c0_46] : memref<128x32xbf16, #tpu.memory_space<vmem>>, vector<128x32xbf16>
    %c0_47 = arith.constant 0 : index
    %c0_48 = arith.constant 0 : index
    %37 = vector.load %arg27[%c0_47, %c0_48] : memref<32x128xbf16, #tpu.memory_space<vmem>>, vector<32x128xbf16>
    %cst_49 = arith.constant dense<0.000000e+00> : vector<128x128xf32>
    %38 = tpu.matmul %36, %37, %cst_49 {dimension_numbers = #tpu.dot_dimension_numbers<[1], [0], [0], [1], [0, 0, 1, 1], [], []>} : vector<128x32xbf16>, vector<32x128xbf16>, vector<128x128xf32> -> vector<128x128xf32>
    %39 = arith.addf %35, %38 : vector<128x128xf32>
    %c0_50 = arith.constant 0 : index
    %c0_51 = arith.constant 0 : index
    %40 = vector.load %arg12[%c0_50, %c0_51] : memref<128x32xbf16, #tpu.memory_space<vmem>>, vector<128x32xbf16>
    %c0_52 = arith.constant 0 : index
    %c0_53 = arith.constant 0 : index
    %41 = vector.load %arg28[%c0_52, %c0_53] : memref<32x128xbf16, #tpu.memory_space<vmem>>, vector<32x128xbf16>
    %cst_54 = arith.constant dense<0.000000e+00> : vector<128x128xf32>
    %42 = tpu.matmul %40, %41, %cst_54 {dimension_numbers = #tpu.dot_dimension_numbers<[1], [0], [0], [1], [0, 0, 1, 1], [], []>} : vector<128x32xbf16>, vector<32x128xbf16>, vector<128x128xf32> -> vector<128x128xf32>
    %43 = arith.addf %39, %42 : vector<128x128xf32>
    %c0_55 = arith.constant 0 : index
    %c0_56 = arith.constant 0 : index
    %44 = vector.load %arg13[%c0_55, %c0_56] : memref<128x32xbf16, #tpu.memory_space<vmem>>, vector<128x32xbf16>
    %c0_57 = arith.constant 0 : index
    %c0_58 = arith.constant 0 : index
    %45 = vector.load %arg29[%c0_57, %c0_58] : memref<32x128xbf16, #tpu.memory_space<vmem>>, vector<32x128xbf16>
    %cst_59 = arith.constant dense<0.000000e+00> : vector<128x128xf32>
    %46 = tpu.matmul %44, %45, %cst_59 {dimension_numbers = #tpu.dot_dimension_numbers<[1], [0], [0], [1], [0, 0, 1, 1], [], []>} : vector<128x32xbf16>, vector<32x128xbf16>, vector<128x128xf32> -> vector<128x128xf32>
    %47 = arith.addf %43, %46 : vector<128x128xf32>
    %c0_60 = arith.constant 0 : index
    %c0_61 = arith.constant 0 : index
    %48 = vector.load %arg14[%c0_60, %c0_61] : memref<128x32xbf16, #tpu.memory_space<vmem>>, vector<128x32xbf16>
    %c0_62 = arith.constant 0 : index
    %c0_63 = arith.constant 0 : index
    %49 = vector.load %arg30[%c0_62, %c0_63] : memref<32x128xbf16, #tpu.memory_space<vmem>>, vector<32x128xbf16>
    %cst_64 = arith.constant dense<0.000000e+00> : vector<128x128xf32>
    %50 = tpu.matmul %48, %49, %cst_64 {dimension_numbers = #tpu.dot_dimension_numbers<[1], [0], [0], [1], [0, 0, 1, 1], [], []>} : vector<128x32xbf16>, vector<32x128xbf16>, vector<128x128xf32> -> vector<128x128xf32>
    %51 = arith.addf %47, %50 : vector<128x128xf32>
    %c0_65 = arith.constant 0 : index
    %c0_66 = arith.constant 0 : index
    %52 = vector.load %arg15[%c0_65, %c0_66] : memref<128x32xbf16, #tpu.memory_space<vmem>>, vector<128x32xbf16>
    %c0_67 = arith.constant 0 : index
    %c0_68 = arith.constant 0 : index
    %53 = vector.load %arg31[%c0_67, %c0_68] : memref<32x128xbf16, #tpu.memory_space<vmem>>, vector<32x128xbf16>
    %cst_69 = arith.constant dense<0.000000e+00> : vector<128x128xf32>
    %54 = tpu.matmul %52, %53, %cst_69 {dimension_numbers = #tpu.dot_dimension_numbers<[1], [0], [0], [1], [0, 0, 1, 1], [], []>} : vector<128x32xbf16>, vector<32x128xbf16>, vector<128x128xf32> -> vector<128x128xf32>
    %55 = arith.addf %51, %54 : vector<128x128xf32>
    %c0_70 = arith.constant 0 : index
    %c0_71 = arith.constant 0 : index
    %56 = vector.load %arg16[%c0_70, %c0_71] : memref<128x32xbf16, #tpu.memory_space<vmem>>, vector<128x32xbf16>
    %c0_72 = arith.constant 0 : index
    %c0_73 = arith.constant 0 : index
    %57 = vector.load %arg32[%c0_72, %c0_73] : memref<32x128xbf16, #tpu.memory_space<vmem>>, vector<32x128xbf16>
    %cst_74 = arith.constant dense<0.000000e+00> : vector<128x128xf32>
    %58 = tpu.matmul %56, %57, %cst_74 {dimension_numbers = #tpu.dot_dimension_numbers<[1], [0], [0], [1], [0, 0, 1, 1], [], []>} : vector<128x32xbf16>, vector<32x128xbf16>, vector<128x128xf32> -> vector<128x128xf32>
    %59 = arith.addf %55, %58 : vector<128x128xf32>
    %c0_75 = arith.constant 0 : index
    %c0_76 = arith.constant 0 : index
    %60 = vector.load %arg17[%c0_75, %c0_76] : memref<128x32xbf16, #tpu.memory_space<vmem>>, vector<128x32xbf16>
    %c0_77 = arith.constant 0 : index
    %c0_78 = arith.constant 0 : index
    %61 = vector.load %arg33[%c0_77, %c0_78] : memref<32x128xbf16, #tpu.memory_space<vmem>>, vector<32x128xbf16>
    %cst_79 = arith.constant dense<0.000000e+00> : vector<128x128xf32>
    %62 = tpu.matmul %60, %61, %cst_79 {dimension_numbers = #tpu.dot_dimension_numbers<[1], [0], [0], [1], [0, 0, 1, 1], [], []>} : vector<128x32xbf16>, vector<32x128xbf16>, vector<128x128xf32> -> vector<128x128xf32>
    %63 = arith.addf %59, %62 : vector<128x128xf32>
    %64 = vector.broadcast %0 : vector<1x128xf32> to vector<128x128xf32>
    %65 = arith.addf %63, %64 : vector<128x128xf32>
    %c0_80 = arith.constant 0 : index
    %c0_81 = arith.constant 0 : index
    %c0_82 = arith.constant 0 : index
    %66 = vector.load %arg35[%c0_80, %c0_81, %c0_82] : memref<1x128x128xf32, #tpu.memory_space<vmem>>, vector<1x128x128xf32>
    %67 = vector.shape_cast %66 : vector<1x128x128xf32> to vector<128x128xf32>
    %68 = vector.shape_cast %65 : vector<128x128xf32> to vector<1x128x128xf32>
    tpu.vector_store %arg35[%c0_80, %c0_81, %c0_82], %68 {strides = array<i32>} : memref<1x128x128xf32, #tpu.memory_space<vmem>>, vector<1x128x128xf32>,
    return
  }
  func.func @transform_0(%arg0: i32, %arg1: i32) -> (i32, i32) {
    %c0_i32 = arith.constant 0 : i32
    %c0_i32_0 = arith.constant 0 : i32
    return %arg1, %c0_i32 : i32, i32
  }
  func.func @transform_1(%arg0: i32, %arg1: i32) -> (i32, i32) {
    %c0_i32 = arith.constant 0 : i32
    %c0_i32_0 = arith.constant 0 : i32
    return %arg1, %c0_i32 : i32, i32
  }
  func.func @transform_2(%arg0: i32, %arg1: i32) -> (i32, i32) {
    %c0_i32 = arith.constant 0 : i32
    %c0_i32_0 = arith.constant 0 : i32
    return %arg1, %c0_i32 : i32, i32
  }
  func.func @transform_3(%arg0: i32, %arg1: i32) -> (i32, i32) {
    %c0_i32 = arith.constant 0 : i32
    %c0_i32_0 = arith.constant 0 : i32
    return %arg1, %c0_i32 : i32, i32
  }
  func.func @transform_4(%arg0: i32, %arg1: i32) -> (i32, i32) {
    %c0_i32 = arith.constant 0 : i32
    %c0_i32_0 = arith.constant 0 : i32
    return %arg1, %c0_i32 : i32, i32
  }
  func.func @transform_5(%arg0: i32, %arg1: i32) -> (i32, i32) {
    %c0_i32 = arith.constant 0 : i32
    %c0_i32_0 = arith.constant 0 : i32
    return %arg1, %c0_i32 : i32, i32
  }
  func.func @transform_6(%arg0: i32, %arg1: i32) -> (i32, i32) {
    %c0_i32 = arith.constant 0 : i32
    %c0_i32_0 = arith.constant 0 : i32
    return %arg1, %c0_i32 : i32, i32
  }
  func.func @transform_7(%arg0: i32, %arg1: i32) -> (i32, i32) {
    %c0_i32 = arith.constant 0 : i32
    %c0_i32_0 = arith.constant 0 : i32
    return %arg1, %c0_i32 : i32, i32
  }
  func.func @transform_8(%arg0: i32, %arg1: i32) -> (i32, i32) {
    %c0_i32 = arith.constant 0 : i32
    %c0_i32_0 = arith.constant 0 : i32
    return %arg1, %c0_i32 : i32, i32
  }
  func.func @transform_9(%arg0: i32, %arg1: i32) -> (i32, i32) {
    %c0_i32 = arith.constant 0 : i32
    %c0_i32_0 = arith.constant 0 : i32
    return %arg1, %c0_i32 : i32, i32
  }
  func.func @transform_10(%arg0: i32, %arg1: i32) -> (i32, i32) {
    %c0_i32 = arith.constant 0 : i32
    %c0_i32_0 = arith.constant 0 : i32
    return %arg1, %c0_i32 : i32, i32
  }
  func.func @transform_11(%arg0: i32, %arg1: i32) -> (i32, i32) {
    %c0_i32 = arith.constant 0 : i32
    %c0_i32_0 = arith.constant 0 : i32
    return %arg1, %c0_i32 : i32, i32
  }
  func.func @transform_12(%arg0: i32, %arg1: i32) -> (i32, i32) {
    %c0_i32 = arith.constant 0 : i32
    %c0_i32_0 = arith.constant 0 : i32
    return %arg1, %c0_i32 : i32, i32
  }
  func.func @transform_13(%arg0: i32, %arg1: i32) -> (i32, i32) {
    %c0_i32 = arith.constant 0 : i32
    %c0_i32_0 = arith.constant 0 : i32
    return %arg1, %c0_i32 : i32, i32
  }
  func.func @transform_14(%arg0: i32, %arg1: i32) -> (i32, i32) {
    %c0_i32 = arith.constant 0 : i32
    %c0_i32_0 = arith.constant 0 : i32
    return %arg1, %c0_i32 : i32, i32
  }
  func.func @transform_15(%arg0: i32, %arg1: i32) -> (i32, i32) {
    %c0_i32 = arith.constant 0 : i32
    %c0_i32_0 = arith.constant 0 : i32
    return %arg1, %c0_i32 : i32, i32
  }
  func.func @transform_16(%arg0: i32, %arg1: i32) -> (i32, i32) {
    %c0_i32 = arith.constant 0 : i32
    %c0_i32_0 = arith.constant 0 : i32
    return %c0_i32, %arg0 : i32, i32
  }
  func.func @transform_17(%arg0: i32, %arg1: i32) -> (i32, i32) {
    %c0_i32 = arith.constant 0 : i32
    %c0_i32_0 = arith.constant 0 : i32
    return %c0_i32, %arg0 : i32, i32
  }
  func.func @transform_18(%arg0: i32, %arg1: i32) -> (i32, i32) {
    %c0_i32 = arith.constant 0 : i32
    %c0_i32_0 = arith.constant 0 : i32
    return %c0_i32, %arg0 : i32, i32
  }
  func.func @transform_19(%arg0: i32, %arg1: i32) -> (i32, i32) {
    %c0_i32 = arith.constant 0 : i32
    %c0_i32_0 = arith.constant 0 : i32
    return %c0_i32, %arg0 : i32, i32
  }
  func.func @transform_20(%arg0: i32, %arg1: i32) -> (i32, i32) {
    %c0_i32 = arith.constant 0 : i32
    %c0_i32_0 = arith.constant 0 : i32
    return %c0_i32, %arg0 : i32, i32
  }
  func.func @transform_21(%arg0: i32, %arg1: i32) -> (i32, i32) {
    %c0_i32 = arith.constant 0 : i32
    %c0_i32_0 = arith.constant 0 : i32
    return %c0_i32, %arg0 : i32, i32
  }
  func.func @transform_22(%arg0: i32, %arg1: i32) -> (i32, i32) {
    %c0_i32 = arith.constant 0 : i32
    %c0_i32_0 = arith.constant 0 : i32
    return %c0_i32, %arg0 : i32, i32
  }
  func.func @transform_23(%arg0: i32, %arg1: i32) -> (i32, i32) {
    %c0_i32 = arith.constant 0 : i32
    %c0_i32_0 = arith.constant 0 : i32
    return %c0_i32, %arg0 : i32, i32
  }
  func.func @transform_24(%arg0: i32, %arg1: i32) -> (i32, i32) {
    %c0_i32 = arith.constant 0 : i32
    %c0_i32_0 = arith.constant 0 : i32
    return %c0_i32, %arg0 : i32, i32
  }
  func.func @transform_25(%arg0: i32, %arg1: i32) -> (i32, i32) {
    %c0_i32 = arith.constant 0 : i32
    %c0_i32_0 = arith.constant 0 : i32
    return %c0_i32, %arg0 : i32, i32
  }
  func.func @transform_26(%arg0: i32, %arg1: i32) -> (i32, i32) {
    %c0_i32 = arith.constant 0 : i32
    %c0_i32_0 = arith.constant 0 : i32
    return %c0_i32, %arg0 : i32, i32
  }
  func.func @transform_27(%arg0: i32, %arg1: i32) -> (i32, i32) {
    %c0_i32 = arith.constant 0 : i32
    %c0_i32_0 = arith.constant 0 : i32
    return %c0_i32, %arg0 : i32, i32
  }
  func.func @transform_28(%arg0: i32, %arg1: i32) -> (i32, i32) {
    %c0_i32 = arith.constant 0 : i32
    %c0_i32_0 = arith.constant 0 : i32
    return %c0_i32, %arg0 : i32, i32
  }
  func.func @transform_29(%arg0: i32, %arg1: i32) -> (i32, i32) {
    %c0_i32 = arith.constant 0 : i32
    %c0_i32_0 = arith.constant 0 : i32
    return %c0_i32, %arg0 : i32, i32
  }
  func.func @transform_30(%arg0: i32, %arg1: i32) -> (i32, i32) {
    %c0_i32 = arith.constant 0 : i32
    %c0_i32_0 = arith.constant 0 : i32
    return %c0_i32, %arg0 : i32, i32
  }
  func.func @transform_31(%arg0: i32, %arg1: i32) -> (i32, i32) {
    %c0_i32 = arith.constant 0 : i32
    %c0_i32_0 = arith.constant 0 : i32
    return %c0_i32, %arg0 : i32, i32
  }
  func.func @transform_32(%arg0: i32, %arg1: i32) -> (i32, i32) {
    %c0_i32 = arith.constant 0 : i32
    %c0_i32_0 = arith.constant 0 : i32
    return %c0_i32, %arg0 : i32, i32
  }
  func.func @transform_33(%arg0: i32, %arg1: i32) -> (i32, i32, i32) {
    %c0_i32 = arith.constant 0 : i32
    %c0_i32_0 = arith.constant 0 : i32
    return %c0_i32, %arg1, %arg0 : i32, i32, i32
  }
}

</mosaic_0001>

<llo_original>
// kernel: tpu_custom_call.1
$region0: #{tpu_custom_call.1}
  #allocation0 [shape = 'u32[]', space=smem, size = 0x4, offset = 0x4, fixed_abs, tag = 'smem constant byte address 0x4 - core index']
  #allocation1 [shape = 'u32[144,128]{1,0:T(1,128)}', space=vmem, size = 0x12000, scoped, tag = 'internal scratch']
  %s0 = inlined_call_operand.smem [shape: u32[34], index: -1, kind: input, shape index: {}]
  %s1 = sld [smem:[%s0]]
  %s2 = scalar_lea.smem %s0, 1
  %s3 = sld [smem:[%s2]]
  %s4 = scalar_lea.smem %s0, 2
  %s5 = sld [smem:[%s4]]
  %s6 = scalar_lea.smem %s0, 3
  %s7 = sld [smem:[%s6]]
  %s8 = scalar_lea.smem %s0, 4
  %s9 = sld [smem:[%s8]]
  %s10 = scalar_lea.smem %s0, 5
  %s11 = sld [smem:[%s10]]
  %s12 = scalar_lea.smem %s0, 6
  %s13 = sld [smem:[%s12]]
  %s14 = scalar_lea.smem %s0, 7
  %s15 = sld [smem:[%s14]]
  %s16 = scalar_lea.smem %s0, 8
  %s17 = sld [smem:[%s16]]
  %s18 = scalar_lea.smem %s0, 9
  %s19 = sld [smem:[%s18]]
  %s20 = scalar_lea.smem %s0, 10
  %s21 = sld [smem:[%s20]]
  %s22 = scalar_lea.smem %s0, 11
  %s23 = sld [smem:[%s22]]
  %s24 = scalar_lea.smem %s0, 12
  %s25 = sld [smem:[%s24]]
  %s26 = scalar_lea.smem %s0, 13
  %s27 = sld [smem:[%s26]]
  %s28 = scalar_lea.smem %s0, 14
  %s29 = sld [smem:[%s28]]
  %s30 = scalar_lea.smem %s0, 15
  %s31 = sld [smem:[%s30]]
  %s32 = scalar_lea.smem %s0, 16
  %s33 = sld [smem:[%s32]]
  %s34 = scalar_lea.smem %s0, 17
  %s35 = sld [smem:[%s34]]
  %s36 = scalar_lea.smem %s0, 18
  %s37 = sld [smem:[%s36]]
  %s38 = scalar_lea.smem %s0, 19
  %s39 = sld [smem:[%s38]]
  %s40 = scalar_lea.smem %s0, 20
  %s41 = sld [smem:[%s40]]
  %s42 = scalar_lea.smem %s0, 21
  %s43 = sld [smem:[%s42]]
  %s44 = scalar_lea.smem %s0, 22
  %s45 = sld [smem:[%s44]]
  %s46 = scalar_lea.smem %s0, 23
  %s47 = sld [smem:[%s46]]
  %s48 = scalar_lea.smem %s0, 24
  %s49 = sld [smem:[%s48]]
  %s50 = scalar_lea.smem %s0, 25
  %s51 = sld [smem:[%s50]]
  %s52 = scalar_lea.smem %s0, 26
  %s53 = sld [smem:[%s52]]
  %s54 = scalar_lea.smem %s0, 27
  %s55 = sld [smem:[%s54]]
  %s56 = scalar_lea.smem %s0, 28
  %s57 = sld [smem:[%s56]]
  %s58 = scalar_lea.smem %s0, 29
  %s59 = sld [smem:[%s58]]
  %s60 = scalar_lea.smem %s0, 30
  %s61 = sld [smem:[%s60]]
  %s62 = scalar_lea.smem %s0, 31
  %s63 = sld [smem:[%s62]]
  %s64 = scalar_lea.smem %s0, 32
  %s65 = sld [smem:[%s64]]
  %s66 = scalar_lea.smem %s0, 33
  %s67 = sld [smem:[%s66]]
  %s68 = sld [smem:[#allocation0]]
  $region142: #{tpu_custom_call.1} parent=0
    _
  %s70 = ssub.s32 1, %s68
  %s71 = scalar_select 0, %s70, %s68
  $region1: #{tpu_custom_call.1} parent=0
    #allocation2 [shape = 'u8[65536]{0}', space=vmem, size = 0x10000, scoped, tag = 'output window, operand 0, single buffered']
    #allocation3 [shape = 's32[1]{0}', space=sflag, size = 0x4, scoped, tag = 'scoped memory for tpu_custom_call.1']
    %72 = vsyncpa [#allocation3], 0
    // Predicated region
    $region2: #{tpu_custom_call.1} parent=1 // pred_check
      _
    $region3: #{tpu_custom_call.1} parent=1 // pred_check_branch
      %74 = sbr.rel (0) target = $region5
    $region4: #{tpu_custom_call.1} parent=1 // pred_region
      _
    $region5: #{tpu_custom_call.1} parent=1 // pred_fallthru
      _
    // Predicated region
    $region6: #{tpu_custom_call.1} parent=1 // pred_check
      _
    $region7: #{tpu_custom_call.1} parent=1 // pred_check_branch
      %76 = sbr.rel (0) target = $region9
    $region8: #{tpu_custom_call.1} parent=1 // pred_region
      _
    $region9: #{tpu_custom_call.1} parent=1 // pred_fallthru
      _
    // Predicated region
    $region10: #{tpu_custom_call.1} parent=1 // pred_check
      _
    $region11: #{tpu_custom_call.1} parent=1 // pred_check_branch
      %78 = sbr.rel (0) target = $region13
    $region12: #{tpu_custom_call.1} parent=1 // pred_region
      _
    $region13: #{tpu_custom_call.1} parent=1 // pred_fallthru
      _
    // Predicated region
    $region14: #{tpu_custom_call.1} parent=1 // pred_check
      _
    $region15: #{tpu_custom_call.1} parent=1 // pred_check_branch
      %80 = sbr.rel (0) target = $region17
    $region16: #{tpu_custom_call.1} parent=1 // pred_region
      _
    $region17: #{tpu_custom_call.1} parent=1 // pred_fallthru
      _
    // Predicated region
    $region18: #{tpu_custom_call.1} parent=1 // pred_check
      _
    $region19: #{tpu_custom_call.1} parent=1 // pred_check_branch
      %82 = sbr.rel (0) target = $region21
    $region20: #{tpu_custom_call.1} parent=1 // pred_region
      _
    $region21: #{tpu_custom_call.1} parent=1 // pred_fallthru
      _
    // Predicated region
    $region22: #{tpu_custom_call.1} parent=1 // pred_check
      _
    $region23: #{tpu_custom_call.1} parent=1 // pred_check_branch
      %84 = sbr.rel (0) target = $region25
    $region24: #{tpu_custom_call.1} parent=1 // pred_region
      _
    $region25: #{tpu_custom_call.1} parent=1 // pred_fallthru
      _
    // Predicated region
    $region26: #{tpu_custom_call.1} parent=1 // pred_check
      _
    $region27: #{tpu_custom_call.1} parent=1 // pred_check_branch
      %86 = sbr.rel (0) target = $region29
    $region28: #{tpu_custom_call.1} parent=1 // pred_region
      _
    $region29: #{tpu_custom_call.1} parent=1 // pred_fallthru
      _
    // Predicated region
    $region30: #{tpu_custom_call.1} parent=1 // pred_check
      _
    $region31: #{tpu_custom_call.1} parent=1 // pred_check_branch
      %88 = sbr.rel (0) target = $region33
    $region32: #{tpu_custom_call.1} parent=1 // pred_region
      _
    $region33: #{tpu_custom_call.1} parent=1 // pred_fallthru
      _
    // Predicated region
    $region34: #{tpu_custom_call.1} parent=1 // pred_check
      _
    $region35: #{tpu_custom_call.1} parent=1 // pred_check_branch
      %90 = sbr.rel (0) target = $region37
    $region36: #{tpu_custom_call.1} parent=1 // pred_region
      _
    $region37: #{tpu_custom_call.1} parent=1 // pred_fallthru
      _
    // Predicated region
    $region38: #{tpu_custom_call.1} parent=1 // pred_check
      _
    $region39: #{tpu_custom_call.1} parent=1 // pred_check_branch
      %92 = sbr.rel (0) target = $region41
    $region40: #{tpu_custom_call.1} parent=1 // pred_region
      _
    $region41: #{tpu_custom_call.1} parent=1 // pred_fallthru
      _
    // Predicated region
    $region42: #{tpu_custom_call.1} parent=1 // pred_check
      _
    $region43: #{tpu_custom_call.1} parent=1 // pred_check_branch
      %94 = sbr.rel (0) target = $region45
    $region44: #{tpu_custom_call.1} parent=1 // pred_region
      _
    $region45: #{tpu_custom_call.1} parent=1 // pred_fallthru
      _
    // Predicated region
    $region46: #{tpu_custom_call.1} parent=1 // pred_check
      _
    $region47: #{tpu_custom_call.1} parent=1 // pred_check_branch
      %96 = sbr.rel (0) target = $region49
    $region48: #{tpu_custom_call.1} parent=1 // pred_region
      _
    $region49: #{tpu_custom_call.1} parent=1 // pred_fallthru
      _
    // Predicated region
    $region50: #{tpu_custom_call.1} parent=1 // pred_check
      _
    $region51: #{tpu_custom_call.1} parent=1 // pred_check_branch
      %98 = sbr.rel (0) target = $region53
    $region52: #{tpu_custom_call.1} parent=1 // pred_region
      _
    $region53: #{tpu_custom_call.1} parent=1 // pred_fallthru
      _
    // Predicated region
    $region54: #{tpu_custom_call.1} parent=1 // pred_check
      _
    $region55: #{tpu_custom_call.1} parent=1 // pred_check_branch
      %100 = sbr.rel (0) target = $region57
    $region56: #{tpu_custom_call.1} parent=1 // pred_region
      _
    $region57: #{tpu_custom_call.1} parent=1 // pred_fallthru
      _
    // Predicated region
    $region58: #{tpu_custom_call.1} parent=1 // pred_check
      _
    $region59: #{tpu_custom_call.1} parent=1 // pred_check_branch
      %102 = sbr.rel (0) target = $region61
    $region60: #{tpu_custom_call.1} parent=1 // pred_region
      _
    $region61: #{tpu_custom_call.1} parent=1 // pred_fallthru
      _
    // Predicated region
    $region62: #{tpu_custom_call.1} parent=1 // pred_check
      _
    $region63: #{tpu_custom_call.1} parent=1 // pred_check_branch
      %104 = sbr.rel (0) target = $region65
    $region64: #{tpu_custom_call.1} parent=1 // pred_region
      _
    $region65: #{tpu_custom_call.1} parent=1 // pred_fallthru
      _
    // Predicated region
    $region66: #{tpu_custom_call.1} parent=1 // pred_check
      _
    $region67: #{tpu_custom_call.1} parent=1 // pred_check_branch
      %106 = sbr.rel (0) target = $region69
    $region68: #{tpu_custom_call.1} parent=1 // pred_region
      _
    $region69: #{tpu_custom_call.1} parent=1 // pred_fallthru
      _
    // Predicated region
    $region70: #{tpu_custom_call.1} parent=1 // pred_check
      _
    $region71: #{tpu_custom_call.1} parent=1 // pred_check_branch
      %108 = sbr.rel (0) target = $region73
    $region72: #{tpu_custom_call.1} parent=1 // pred_region
      _
    $region73: #{tpu_custom_call.1} parent=1 // pred_fallthru
      _
    // Predicated region
    $region74: #{tpu_custom_call.1} parent=1 // pred_check
      _
    $region75: #{tpu_custom_call.1} parent=1 // pred_check_branch
      %110 = sbr.rel (0) target = $region77
    $region76: #{tpu_custom_call.1} parent=1 // pred_region
      _
    $region77: #{tpu_custom_call.1} parent=1 // pred_fallthru
      _
    // Predicated region
    $region78: #{tpu_custom_call.1} parent=1 // pred_check
      _
    $region79: #{tpu_custom_call.1} parent=1 // pred_check_branch
      %112 = sbr.rel (0) target = $region81
    $region80: #{tpu_custom_call.1} parent=1 // pred_region
      _
    $region81: #{tpu_custom_call.1} parent=1 // pred_fallthru
      _
    // Predicated region
    $region82: #{tpu_custom_call.1} parent=1 // pred_check
      _
    $region83: #{tpu_custom_call.1} parent=1 // pred_check_branch
      %114 = sbr.rel (0) target = $region85
    $region84: #{tpu_custom_call.1} parent=1 // pred_region
      _
    $region85: #{tpu_custom_call.1} parent=1 // pred_fallthru
      _
    // Predicated region
    $region86: #{tpu_custom_call.1} parent=1 // pred_check
      _
    $region87: #{tpu_custom_call.1} parent=1 // pred_check_branch
      %116 = sbr.rel (0) target = $region89
    $region88: #{tpu_custom_call.1} parent=1 // pred_region
      _
    $region89: #{tpu_custom_call.1} parent=1 // pred_fallthru
      _
    // Predicated region
    $region90: #{tpu_custom_call.1} parent=1 // pred_check
      _
    $region91: #{tpu_custom_call.1} parent=1 // pred_check_branch
      %118 = sbr.rel (0) target = $region93
    $region92: #{tpu_custom_call.1} parent=1 // pred_region
      _
    $region93: #{tpu_custom_call.1} parent=1 // pred_fallthru
      _
    // Predicated region
    $region94: #{tpu_custom_call.1} parent=1 // pred_check
      _
    $region95: #{tpu_custom_call.1} parent=1 // pred_check_branch
      %120 = sbr.rel (0) target = $region97
    $region96: #{tpu_custom_call.1} parent=1 // pred_region
      _
    $region97: #{tpu_custom_call.1} parent=1 // pred_fallthru
      _
    // Predicated region
    $region98: #{tpu_custom_call.1} parent=1 // pred_check
      _
    $region99: #{tpu_custom_call.1} parent=1 // pred_check_branch
      %122 = sbr.rel (0) target = $region101
    $region100: #{tpu_custom_call.1} parent=1 // pred_region
      _
    $region101: #{tpu_custom_call.1} parent=1 // pred_fallthru
      _
    // Predicated region
    $region102: #{tpu_custom_call.1} parent=1 // pred_check
      _
    $region103: #{tpu_custom_call.1} parent=1 // pred_check_branch
      %124 = sbr.rel (0) target = $region105
    $region104: #{tpu_custom_call.1} parent=1 // pred_region
      _
    $region105: #{tpu_custom_call.1} parent=1 // pred_fallthru
      _
    // Predicated region
    $region106: #{tpu_custom_call.1} parent=1 // pred_check
      _
    $region107: #{tpu_custom_call.1} parent=1 // pred_check_branch
      %126 = sbr.rel (0) target = $region109
    $region108: #{tpu_custom_call.1} parent=1 // pred_region
      _
    $region109: #{tpu_custom_call.1} parent=1 // pred_fallthru
      _
    // Predicated region
    $region110: #{tpu_custom_call.1} parent=1 // pred_check
      _
    $region111: #{tpu_custom_call.1} parent=1 // pred_check_branch
      %128 = sbr.rel (0) target = $region113
    $region112: #{tpu_custom_call.1} parent=1 // pred_region
      _
    $region113: #{tpu_custom_call.1} parent=1 // pred_fallthru
      _
    // Predicated region
    $region114: #{tpu_custom_call.1} parent=1 // pred_check
      _
    $region115: #{tpu_custom_call.1} parent=1 // pred_check_branch
      %130 = sbr.rel (0) target = $region117
    $region116: #{tpu_custom_call.1} parent=1 // pred_region
      _
    $region117: #{tpu_custom_call.1} parent=1 // pred_fallthru
      _
    // Predicated region
    $region118: #{tpu_custom_call.1} parent=1 // pred_check
      _
    $region119: #{tpu_custom_call.1} parent=1 // pred_check_branch
      %132 = sbr.rel (0) target = $region121
    $region120: #{tpu_custom_call.1} parent=1 // pred_region
      _
    $region121: #{tpu_custom_call.1} parent=1 // pred_fallthru
      _
    // Predicated region
    $region122: #{tpu_custom_call.1} parent=1 // pred_check
      _
    $region123: #{tpu_custom_call.1} parent=1 // pred_check_branch
      %134 = sbr.rel (0) target = $region125
    $region124: #{tpu_custom_call.1} parent=1 // pred_region
      _
    $region125: #{tpu_custom_call.1} parent=1 // pred_fallthru
      _
    // Predicated region
    $region126: #{tpu_custom_call.1} parent=1 // pred_check
      _
    $region127: #{tpu_custom_call.1} parent=1 // pred_check_branch
      %136 = sbr.rel (0) target = $region129
    $region128: #{tpu_custom_call.1} parent=1 // pred_region
      _
    $region129: #{tpu_custom_call.1} parent=1 // pred_fallthru
      _
    // Predicated region
    $region130: #{tpu_custom_call.1} parent=1 // pred_check
      _
    $region131: #{tpu_custom_call.1} parent=1 // pred_check_branch
      %138 = sbr.rel (0) target = $region133
    $region132: #{tpu_custom_call.1} parent=1 // pred_region
      _
    $region133: #{tpu_custom_call.1} parent=1 // pred_fallthru
      _
    %v140 = vld [vmem:[%s65] sm:$0x1]
    %v141 = vld [vmem:[%s1] sm:$0xf]
    %v142 = vld [vmem:[%s1 + $0x4] sm:$0xf]
    %v143 = vld [vmem:[%s1 + $0x8] sm:$0xf]
    %v144 = vld [vmem:[%s1 + $0xc] sm:$0xf]
    %v145 = vld [vmem:[%s1 + $0x10] sm:$0xf]
    %v146 = vld [vmem:[%s1 + $0x14] sm:$0xf]
    %v147 = vld [vmem:[%s1 + $0x18] sm:$0xf]
    %v148 = vld [vmem:[%s1 + $0x1c] sm:$0xf]
    %v149 = vld [vmem:[%s1 + $0x20] sm:$0xf]
    %v150 = vld [vmem:[%s1 + $0x24] sm:$0xf]
    %v151 = vld [vmem:[%s1 + $0x28] sm:$0xf]
    %v152 = vld [vmem:[%s1 + $0x2c] sm:$0xf]
    %v153 = vld [vmem:[%s1 + $0x30] sm:$0xf]
    %v154 = vld [vmem:[%s1 + $0x34] sm:$0xf]
    %v155 = vld [vmem:[%s1 + $0x38] sm:$0xf]
    %v156 = vld [vmem:[%s1 + $0x3c] sm:$0xf]
    %v157 = vld [vmem:[%s33] sm:$0xf]
    %v158 = vld [vmem:[%s33 + $0x4] sm:$0xf]
    %v159 = vld [vmem:[%s33 + $0x8] sm:$0xf]
    %v160 = vld [vmem:[%s33 + $0xc] sm:$0xf]
    %v161 = vld [vmem:[%s3] sm:$0xf]
    %v162 = vld [vmem:[%s3 + $0x4] sm:$0xf]
    %v163 = vld [vmem:[%s3 + $0x8] sm:$0xf]
    %v164 = vld [vmem:[%s3 + $0xc] sm:$0xf]
    %v165 = vld [vmem:[%s3 + $0x10] sm:$0xf]
    %v166 = vld [vmem:[%s3 + $0x14] sm:$0xf]
    %v167 = vld [vmem:[%s3 + $0x18] sm:$0xf]
    %v168 = vld [vmem:[%s3 + $0x1c] sm:$0xf]
    %v169 = vld [vmem:[%s3 + $0x20] sm:$0xf]
    %v170 = vld [vmem:[%s3 + $0x24] sm:$0xf]
    %v171 = vld [vmem:[%s3 + $0x28] sm:$0xf]
    %v172 = vld [vmem:[%s3 + $0x2c] sm:$0xf]
    %v173 = vld [vmem:[%s3 + $0x30] sm:$0xf]
    %v174 = vld [vmem:[%s3 + $0x34] sm:$0xf]
    %v175 = vld [vmem:[%s3 + $0x38] sm:$0xf]
    %v176 = vld [vmem:[%s3 + $0x3c] sm:$0xf]
    %v177 = vld [vmem:[%s35] sm:$0xf]
    %v178 = vld [vmem:[%s35 + $0x4] sm:$0xf]
    %v179 = vld [vmem:[%s35 + $0x8] sm:$0xf]
    %v180 = vld [vmem:[%s35 + $0xc] sm:$0xf]
    %v197 = vunpack.c.l.b16 %v161
    %v198 = vunpack.c.l.b16 %v162
    %v199 = vunpack.c.l.b16 %v163
    %v200 = vunpack.c.l.b16 %v164
    %v201 = vunpack.c.l.b16 %v165
    %v202 = vunpack.c.l.b16 %v166
    %v203 = vunpack.c.l.b16 %v167
    %v204 = vunpack.c.l.b16 %v168
    %v205 = vunpack.c.l.b16 %v169
    %v206 = vunpack.c.l.b16 %v170
    %v207 = vunpack.c.l.b16 %v171
    %v208 = vunpack.c.l.b16 %v172
    %v209 = vunpack.c.l.b16 %v173
    %v210 = vunpack.c.l.b16 %v174
    %v211 = vunpack.c.l.b16 %v175
    %v212 = vunpack.c.l.b16 %v176
    %v213 = vpack.c.b16 %v198, %v197
    %v214 = vpack.c.b16 %v200, %v199
    %v215 = vpack.c.b16 %v202, %v201
    %v216 = vpack.c.b16 %v204, %v203
    %v217 = vpack.c.b16 %v206, %v205
    %v218 = vpack.c.b16 %v208, %v207
    %v219 = vpack.c.b16 %v210, %v209
    %v220 = vpack.c.b16 %v212, %v211
    %v225 = vunpack.c.l.b16 %v177
    %v226 = vunpack.c.l.b16 %v178
    %v227 = vunpack.c.l.b16 %v179
    %v228 = vunpack.c.l.b16 %v180
    %v229 = vpack.c.b16 %v226, %v225
    %v230 = vpack.c.b16 %v228, %v227
    %vm233 = vcmask 261120
    %v235 = vsel %vm233, %v213, 0
    %v238 = vsel %vm233, %v214, 0
    %v241 = vsel %vm233, %v215, 0
    %v244 = vsel %vm233, %v216, 0
    %v247 = vsel %vm233, %v217, 0
    %v250 = vsel %vm233, %v218, 0
    %v253 = vsel %vm233, %v219, 0
    %v256 = vsel %vm233, %v220, 0
    %258 = vmatprep.subr.bf16.mxu0 0
    %259 = vmatpush1.bf16.msra.mxu0 %v229
    %260 = vmatprep.subr.bf16.mxu0 0
    %261 = vmatpush1.bf16.msra.mxu0 %v230
    %262 = vmatprep.subr.bf16.mxu0 0
    %263 = vmatpush1.bf16.msra.mxu0 0
    %264 = vmatprep.subr.bf16.mxu0 0
    %265 = vmatpush1.bf16.msra.mxu0 0
    %266 = vmatprep.subr.bf16.mxu0 0
    %267 = vmatpush1.bf16.msra.mxu0 0
    %268 = vmatprep.subr.bf16.mxu0 0
    %269 = vmatpush1.bf16.msra.mxu0 0
    %270 = vmatprep.subr.bf16.mxu0 0
    %271 = vmatpush1.bf16.msra.mxu0 0
    %272 = vmatprep.subr.bf16.mxu0 0
    %273 = vmatpush1.bf16.msra.mxu0 0
    %274 = vmatprep.subr.bf16.mxu0 0
    %275 = vmatpush1.bf16.msra.mxu0 0
    %276 = vmatprep.subr.bf16.mxu0 0
    %277 = vmatpush1.bf16.msra.mxu0 0
    %278 = vmatprep.subr.bf16.mxu0 0
    %279 = vmatpush1.bf16.msra.mxu0 0
    %280 = vmatprep.subr.bf16.mxu0 0
    %281 = vmatpush1.bf16.msra.mxu0 0
    %282 = vmatprep.subr.bf16.mxu0 0
    %283 = vmatpush1.bf16.msra.mxu0 0
    %284 = vmatprep.subr.bf16.mxu0 0
    %285 = vmatpush1.bf16.msra.mxu0 0
    %286 = vmatprep.subr.bf16.mxu0 0
    %287 = vmatpush1.bf16.msra.mxu0 0
    %288 = vmatprep.subr.bf16.mxu0 0
    %289 = vmatpush1.bf16.msra.mxu0 0
    %290 = vmatprep.mubr.bf16.mxu0 0
    %291 = vmatmul.mubr.bf16.gmra.mrb[0].mxu0 %v235
    %v292 = vpop.f32.mrb[0].mxu0
    %v293 = vadd.f32 0.0, %v292
    %v294 = vpop.f32.mrb[0].mxu0
    %v295 = vpop.f32.mrb[0].mxu0
    %v296 = vadd.f32 0.0, %v295
    %v297 = vpop.f32.mrb[0].mxu0
    %298 = vmatprep.mubr.bf16.mxu0 0
    %299 = vmatmul.mubr.bf16.gmra.mrb[0].mxu0 %v238
    %v300 = vpop.f32.mrb[0].mxu0
    %v301 = vadd.f32 0.0, %v300
    %v302 = vpop.f32.mrb[0].mxu0
    %v303 = vpop.f32.mrb[0].mxu0
    %v304 = vadd.f32 0.0, %v303
    %v305 = vpop.f32.mrb[0].mxu0
    %306 = vmatprep.mubr.bf16.mxu0 0
    %307 = vmatmul.mubr.bf16.gmra.mrb[0].mxu0 %v241
    %v308 = vpop.f32.mrb[0].mxu0
    %v309 = vadd.f32 0.0, %v308
    %v310 = vpop.f32.mrb[0].mxu0
    %v311 = vpop.f32.mrb[0].mxu0
    %v312 = vadd.f32 0.0, %v311
    %v313 = vpop.f32.mrb[0].mxu0
    %314 = vmatprep.mubr.bf16.mxu0 0
    %315 = vmatmul.mubr.bf16.gmra.mrb[0].mxu0 %v244
    %v316 = vpop.f32.mrb[0].mxu0
    %v317 = vadd.f32 0.0, %v316
    %v318 = vpop.f32.mrb[0].mxu0
    %v319 = vpop.f32.mrb[0].mxu0
    %v320 = vadd.f32 0.0, %v319
    %v321 = vpop.f32.mrb[0].mxu0
    %322 = vmatprep.mubr.bf16.mxu0 0
    %323 = vmatmul.mubr.bf16.gmra.mrb[0].mxu0 %v247
    %v324 = vpop.f32.mrb[0].mxu0
    %v325 = vadd.f32 0.0, %v324
    %v326 = vpop.f32.mrb[0].mxu0
    %v327 = vpop.f32.mrb[0].mxu0
    %v328 = vadd.f32 0.0, %v327
    %v329 = vpop.f32.mrb[0].mxu0
    %330 = vmatprep.mubr.bf16.mxu0 0
    %331 = vmatmul.mubr.bf16.gmra.mrb[0].mxu0 %v250
    %v332 = vpop.f32.mrb[0].mxu0
    %v333 = vadd.f32 0.0, %v332
    %v334 = vpop.f32.mrb[0].mxu0
    %v335 = vpop.f32.mrb[0].mxu0
    %v336 = vadd.f32 0.0, %v335
    %v337 = vpop.f32.mrb[0].mxu0
    %338 = vmatprep.mubr.bf16.mxu0 0
    %339 = vmatmul.mubr.bf16.gmra.mrb[0].mxu0 %v253
    %v340 = vpop.f32.mrb[0].mxu0
    %v341 = vadd.f32 0.0, %v340
    %v342 = vpop.f32.mrb[0].mxu0
    %v343 = vpop.f32.mrb[0].mxu0
    %v344 = vadd.f32 0.0, %v343
    %v345 = vpop.f32.mrb[0].mxu0
    %346 = vmatprep.mubr.bf16.mxu0 0
    %347 = vmatmul.mubr.bf16.gmra.mrb[0].mxu0 %v256
    %v348 = vpop.f32.mrb[0].mxu0
    %v349 = vadd.f32 0.0, %v348
    %v350 = vpop.f32.mrb[0].mxu0
    %v351 = vpop.f32.mrb[0].mxu0
    %v352 = vadd.f32 0.0, %v351
    %v353 = vpop.f32.mrb[0].mxu0
    %354 = vdwg.mxu0
    %v371 = vunpack.c.l.b16 %v141
    %v372 = vunpack.c.l.b16 %v142
    %v373 = vunpack.c.l.b16 %v143
    %v374 = vunpack.c.l.b16 %v144
    %v375 = vunpack.c.l.b16 %v145
    %v376 = vunpack.c.l.b16 %v146
    %v377 = vunpack.c.l.b16 %v147
    %v378 = vunpack.c.l.b16 %v148
    %v379 = vunpack.c.l.b16 %v149
    %v380 = vunpack.c.l.b16 %v150
    %v381 = vunpack.c.l.b16 %v151
    %v382 = vunpack.c.l.b16 %v152
    %v383 = vunpack.c.l.b16 %v153
    %v384 = vunpack.c.l.b16 %v154
    %v385 = vunpack.c.l.b16 %v155
    %v386 = vunpack.c.l.b16 %v156
    %v387 = vpack.c.b16 %v372, %v371
    %v388 = vpack.c.b16 %v374, %v373
    %v389 = vpack.c.b16 %v376, %v375
    %v390 = vpack.c.b16 %v378, %v377
    %v391 = vpack.c.b16 %v380, %v379
    %v392 = vpack.c.b16 %v382, %v381
    %v393 = vpack.c.b16 %v384, %v383
    %v394 = vpack.c.b16 %v386, %v385
    %v399 = vunpack.c.l.b16 %v157
    %v400 = vunpack.c.l.b16 %v158
    %v401 = vunpack.c.l.b16 %v159
    %v402 = vunpack.c.l.b16 %v160
    %v403 = vpack.c.b16 %v400, %v399
    %v404 = vpack.c.b16 %v402, %v401
    %v408 = vsel %vm233, %v387, 0
    %v411 = vsel %vm233, %v388, 0
    %v414 = vsel %vm233, %v389, 0
    %v417 = vsel %vm233, %v390, 0
    %v420 = vsel %vm233, %v391, 0
    %v423 = vsel %vm233, %v392, 0
    %v426 = vsel %vm233, %v393, 0
    %v429 = vsel %vm233, %v394, 0
    %431 = vmatprep.subr.bf16.mxu0 0
    %432 = vmatpush1.bf16.msra.mxu0 %v403
    %433 = vmatprep.subr.bf16.mxu0 0
    %434 = vmatpush1.bf16.msra.mxu0 %v404
    %435 = vmatprep.subr.bf16.mxu0 0
    %436 = vmatpush1.bf16.msra.mxu0 0
    %437 = vmatprep.subr.bf16.mxu0 0
    %438 = vmatpush1.bf16.msra.mxu0 0
    %439 = vmatprep.subr.bf16.mxu0 0
    %440 = vmatpush1.bf16.msra.mxu0 0
    %441 = vmatprep.subr.bf16.mxu0 0
    %442 = vmatpush1.bf16.msra.mxu0 0
    %443 = vmatprep.subr.bf16.mxu0 0
    %444 = vmatpush1.bf16.msra.mxu0 0
    %445 = vmatprep.subr.bf16.mxu0 0
    %446 = vmatpush1.bf16.msra.mxu0 0
    %447 = vmatprep.subr.bf16.mxu0 0
    %448 = vmatpush1.bf16.msra.mxu0 0
    %449 = vmatprep.subr.bf16.mxu0 0
    %450 = vmatpush1.bf16.msra.mxu0 0
    %451 = vmatprep.subr.bf16.mxu0 0
    %452 = vmatpush1.bf16.msra.mxu0 0
    %453 = vmatprep.subr.bf16.mxu0 0
    %454 = vmatpush1.bf16.msra.mxu0 0
    %455 = vmatprep.subr.bf16.mxu0 0
    %456 = vmatpush1.bf16.msra.mxu0 0
    %457 = vmatprep.subr.bf16.mxu0 0
    %458 = vmatpush1.bf16.msra.mxu0 0
    %459 = vmatprep.subr.bf16.mxu0 0
    %460 = vmatpush1.bf16.msra.mxu0 0
    %461 = vmatprep.subr.bf16.mxu0 0
    %462 = vmatpush1.bf16.msra.mxu0 0
    %463 = vmatprep.mubr.bf16.mxu0 0
    %464 = vmatmul.mubr.bf16.gmra.mrb[0].mxu0 %v408
    %v465 = vpop.f32.mrb[0].mxu0
    %v466 = vadd.f32 %v293, %v465
    %v467 = vpop.f32.mrb[0].mxu0
    %v468 = vpop.f32.mrb[0].mxu0
    %v469 = vadd.f32 %v296, %v468
    %v470 = vpop.f32.mrb[0].mxu0
    %471 = vmatprep.mubr.bf16.mxu0 0
    %472 = vmatmul.mubr.bf16.gmra.mrb[0].mxu0 %v411
    %v473 = vpop.f32.mrb[0].mxu0
    %v474 = vadd.f32 %v301, %v473
    %v475 = vpop.f32.mrb[0].mxu0
    %v476 = vpop.f32.mrb[0].mxu0
    %v477 = vadd.f32 %v304, %v476
    %v478 = vpop.f32.mrb[0].mxu0
    %479 = vmatprep.mubr.bf16.mxu0 0
    %480 = vmatmul.mubr.bf16.gmra.mrb[0].mxu0 %v414
    %v481 = vpop.f32.mrb[0].mxu0
    %v482 = vadd.f32 %v309, %v481
    %v483 = vpop.f32.mrb[0].mxu0
    %v484 = vpop.f32.mrb[0].mxu0
    %v485 = vadd.f32 %v312, %v484
    %v486 = vpop.f32.mrb[0].mxu0
    %487 = vmatprep.mubr.bf16.mxu0 0
    %488 = vmatmul.mubr.bf16.gmra.mrb[0].mxu0 %v417
    %v489 = vpop.f32.mrb[0].mxu0
    %v490 = vadd.f32 %v317, %v489
    %v491 = vpop.f32.mrb[0].mxu0
    %v492 = vpop.f32.mrb[0].mxu0
    %v493 = vadd.f32 %v320, %v492
    %v494 = vpop.f32.mrb[0].mxu0
    %495 = vmatprep.mubr.bf16.mxu0 0
    %496 = vmatmul.mubr.bf16.gmra.mrb[0].mxu0 %v420
    %v497 = vpop.f32.mrb[0].mxu0
    %v498 = vadd.f32 %v325, %v497
    %v499 = vpop.f32.mrb[0].mxu0
    %v500 = vpop.f32.mrb[0].mxu0
    %v501 = vadd.f32 %v328, %v500
    %v502 = vpop.f32.mrb[0].mxu0
    %503 = vmatprep.mubr.bf16.mxu0 0
    %504 = vmatmul.mubr.bf16.gmra.mrb[0].mxu0 %v423
    %v505 = vpop.f32.mrb[0].mxu0
    %v506 = vadd.f32 %v333, %v505
    %v507 = vpop.f32.mrb[0].mxu0
    %v508 = vpop.f32.mrb[0].mxu0
    %v509 = vadd.f32 %v336, %v508
    %v510 = vpop.f32.mrb[0].mxu0
    %511 = vmatprep.mubr.bf16.mxu0 0
    %512 = vmatmul.mubr.bf16.gmra.mrb[0].mxu0 %v426
    %v513 = vpop.f32.mrb[0].mxu0
    %v514 = vadd.f32 %v341, %v513
    %v515 = vpop.f32.mrb[0].mxu0
    %v516 = vpop.f32.mrb[0].mxu0
    %v517 = vadd.f32 %v344, %v516
    %v518 = vpop.f32.mrb[0].mxu0
    %519 = vmatprep.mubr.bf16.mxu0 0
    %520 = vmatmul.mubr.bf16.gmra.mrb[0].mxu0 %v429
    %v521 = vpop.f32.mrb[0].mxu0
    %v522 = vadd.f32 %v349, %v521
    %v523 = vpop.f32.mrb[0].mxu0
    %v524 = vpop.f32.mrb[0].mxu0
    %v525 = vadd.f32 %v352, %v524
    %v526 = vpop.f32.mrb[0].mxu0
    %527 = vdwg.mxu0
    %v528 = vld [vmem:[%s5] sm:$0xf]
    %v529 = vld [vmem:[%s5 + $0x4] sm:$0xf]
    %v530 = vld [vmem:[%s5 + $0x8] sm:$0xf]
    %v531 = vld [vmem:[%s5 + $0xc] sm:$0xf]
    %v532 = vld [vmem:[%s5 + $0x10] sm:$0xf]
    %v533 = vld [vmem:[%s5 + $0x14] sm:$0xf]
    %v534 = vld [vmem:[%s5 + $0x18] sm:$0xf]
    %v535 = vld [vmem:[%s5 + $0x1c] sm:$0xf]
    %v536 = vld [vmem:[%s5 + $0x20] sm:$0xf]
    %v537 = vld [vmem:[%s5 + $0x24] sm:$0xf]
    %v538 = vld [vmem:[%s5 + $0x28] sm:$0xf]
    %v539 = vld [vmem:[%s5 + $0x2c] sm:$0xf]
    %v540 = vld [vmem:[%s5 + $0x30] sm:$0xf]
    %v541 = vld [vmem:[%s5 + $0x34] sm:$0xf]
    %v542 = vld [vmem:[%s5 + $0x38] sm:$0xf]
    %v543 = vld [vmem:[%s5 + $0x3c] sm:$0xf]
    %v544 = vld [vmem:[%s37] sm:$0xf]
    %v545 = vld [vmem:[%s37 + $0x4] sm:$0xf]
    %v546 = vld [vmem:[%s37 + $0x8] sm:$0xf]
    %v547 = vld [vmem:[%s37 + $0xc] sm:$0xf]
    %v564 = vunpack.c.l.b16 %v528
    %v565 = vunpack.c.l.b16 %v529
    %v566 = vunpack.c.l.b16 %v530
    %v567 = vunpack.c.l.b16 %v531
    %v568 = vunpack.c.l.b16 %v532
    %v569 = vunpack.c.l.b16 %v533
    %v570 = vunpack.c.l.b16 %v534
    %v571 = vunpack.c.l.b16 %v535
    %v572 = vunpack.c.l.b16 %v536
    %v573 = vunpack.c.l.b16 %v537
    %v574 = vunpack.c.l.b16 %v538
    %v575 = vunpack.c.l.b16 %v539
    %v576 = vunpack.c.l.b16 %v540
    %v577 = vunpack.c.l.b16 %v541
    %v578 = vunpack.c.l.b16 %v542
    %v579 = vunpack.c.l.b16 %v543
    %v580 = vpack.c.b16 %v565, %v564
    %v581 = vpack.c.b16 %v567, %v566
    %v582 = vpack.c.b16 %v569, %v568
    %v583 = vpack.c.b16 %v571, %v570
    %v584 = vpack.c.b16 %v573, %v572
    %v585 = vpack.c.b16 %v575, %v574
    %v586 = vpack.c.b16 %v577, %v576
    %v587 = vpack.c.b16 %v579, %v578
    %v592 = vunpack.c.l.b16 %v544
    %v593 = vunpack.c.l.b16 %v545
    %v594 = vunpack.c.l.b16 %v546
    %v595 = vunpack.c.l.b16 %v547
    %v596 = vpack.c.b16 %v593, %v592
    %v597 = vpack.c.b16 %v595, %v594
    %v601 = vsel %vm233, %v580, 0
    %v604 = vsel %vm233, %v581, 0
    %v607 = vsel %vm233, %v582, 0
    %v610 = vsel %vm233, %v583, 0
    %v613 = vsel %vm233, %v584, 0
    %v616 = vsel %vm233, %v585, 0
    %v619 = vsel %vm233, %v586, 0
    %v622 = vsel %vm233, %v587, 0
    %624 = vmatprep.subr.bf16.mxu0 0
    %625 = vmatpush1.bf16.msra.mxu0 %v596
    %626 = vmatprep.subr.bf16.mxu0 0
    %627 = vmatpush1.bf16.msra.mxu0 %v597
    %628 = vmatprep.subr.bf16.mxu0 0
    %629 = vmatpush1.bf16.msra.mxu0 0
    %630 = vmatprep.subr.bf16.mxu0 0
    %631 = vmatpush1.bf16.msra.mxu0 0
    %632 = vmatprep.subr.bf16.mxu0 0
    %633 = vmatpush1.bf16.msra.mxu0 0
    %634 = vmatprep.subr.bf16.mxu0 0
    %635 = vmatpush1.bf16.msra.mxu0 0
    %636 = vmatprep.subr.bf16.mxu0 0
    %637 = vmatpush1.bf16.msra.mxu0 0
    %638 = vmatprep.subr.bf16.mxu0 0
    %639 = vmatpush1.bf16.msra.mxu0 0
    %640 = vmatprep.subr.bf16.mxu0 0
    %641 = vmatpush1.bf16.msra.mxu0 0
    %642 = vmatprep.subr.bf16.mxu0 0
    %643 = vmatpush1.bf16.msra.mxu0 0
    %644 = vmatprep.subr.bf16.mxu0 0
    %645 = vmatpush1.bf16.msra.mxu0 0
    %646 = vmatprep.subr.bf16.mxu0 0
    %647 = vmatpush1.bf16.msra.mxu0 0
    %648 = vmatprep.subr.bf16.mxu0 0
    %649 = vmatpush1.bf16.msra.mxu0 0
    %650 = vmatprep.subr.bf16.mxu0 0
    %651 = vmatpush1.bf16.msra.mxu0 0
    %652 = vmatprep.subr.bf16.mxu0 0
    %653 = vmatpush1.bf16.msra.mxu0 0
    %654 = vmatprep.subr.bf16.mxu0 0
    %655 = vmatpush1.bf16.msra.mxu0 0
    %656 = vmatprep.mubr.bf16.mxu0 0
    %657 = vmatmul.mubr.bf16.gmra.mrb[0].mxu0 %v601
    %v658 = vpop.f32.mrb[0].mxu0
    %v659 = vadd.f32 0.0, %v658
    %v660 = vpop.f32.mrb[0].mxu0
    %v661 = vpop.f32.mrb[0].mxu0
    %v662 = vadd.f32 0.0, %v661
    %v663 = vpop.f32.mrb[0].mxu0
    %664 = vmatprep.mubr.bf16.mxu0 0
    %665 = vmatmul.mubr.bf16.gmra.mrb[0].mxu0 %v604
    %v666 = vpop.f32.mrb[0].mxu0
    %v667 = vadd.f32 0.0, %v666
    %v668 = vpop.f32.mrb[0].mxu0
    %v669 = vpop.f32.mrb[0].mxu0
    %v670 = vadd.f32 0.0, %v669
    %v671 = vpop.f32.mrb[0].mxu0
    %672 = vmatprep.mubr.bf16.mxu0 0
    %673 = vmatmul.mubr.bf16.gmra.mrb[0].mxu0 %v607
    %v674 = vpop.f32.mrb[0].mxu0
    %v675 = vadd.f32 0.0, %v674
    %v676 = vpop.f32.mrb[0].mxu0
    %v677 = vpop.f32.mrb[0].mxu0
    %v678 = vadd.f32 0.0, %v677
    %v679 = vpop.f32.mrb[0].mxu0
    %680 = vmatprep.mubr.bf16.mxu0 0
    %681 = vmatmul.mubr.bf16.gmra.mrb[0].mxu0 %v610
    %v682 = vpop.f32.mrb[0].mxu0
    %v683 = vadd.f32 0.0, %v682
    %v684 = vpop.f32.mrb[0].mxu0
    %v685 = vpop.f32.mrb[0].mxu0
    %v686 = vadd.f32 0.0, %v685
    %v687 = vpop.f32.mrb[0].mxu0
    %688 = vmatprep.mubr.bf16.mxu0 0
    %689 = vmatmul.mubr.bf16.gmra.mrb[0].mxu0 %v613
    %v690 = vpop.f32.mrb[0].mxu0
    %v691 = vadd.f32 0.0, %v690
    %v692 = vpop.f32.mrb[0].mxu0
    %v693 = vpop.f32.mrb[0].mxu0
    %v694 = vadd.f32 0.0, %v693
    %v695 = vpop.f32.mrb[0].mxu0
    %696 = vmatprep.mubr.bf16.mxu0 0
    %697 = vmatmul.mubr.bf16.gmra.mrb[0].mxu0 %v616
    %v698 = vpop.f32.mrb[0].mxu0
    %v699 = vadd.f32 0.0, %v698
    %v700 = vpop.f32.mrb[0].mxu0
    %v701 = vpop.f32.mrb[0].mxu0
    %v702 = vadd.f32 0.0, %v701
    %v703 = vpop.f32.mrb[0].mxu0
    %704 = vmatprep.mubr.bf16.mxu0 0
    %705 = vmatmul.mubr.bf16.gmra.mrb[0].mxu0 %v619
    %v706 = vpop.f32.mrb[0].mxu0
    %v707 = vadd.f32 0.0, %v706
    %v708 = vpop.f32.mrb[0].mxu0
    %v709 = vpop.f32.mrb[0].mxu0
    %v710 = vadd.f32 0.0, %v709
    %v711 = vpop.f32.mrb[0].mxu0
    %712 = vmatprep.mubr.bf16.mxu0 0
    %713 = vmatmul.mubr.bf16.gmra.mrb[0].mxu0 %v622
    %v714 = vpop.f32.mrb[0].mxu0
    %v715 = vadd.f32 0.0, %v714
    %v716 = vpop.f32.mrb[0].mxu0
    %v717 = vpop.f32.mrb[0].mxu0
    %v718 = vadd.f32 0.0, %v717
    %v719 = vpop.f32.mrb[0].mxu0
    %720 = vdwg.mxu0
    %v721 = vadd.f32 %v466, %v659
    %v722 = vadd.f32 %v469, %v662
    %v723 = vadd.f32 %v474, %v667
    %v724 = vadd.f32 %v477, %v670
    %v725 = vadd.f32 %v482, %v675
    %v726 = vadd.f32 %v485, %v678
    %v727 = vadd.f32 %v490, %v683
    %v728 = vadd.f32 %v493, %v686
    %v729 = vadd.f32 %v498, %v691
    %v730 = vadd.f32 %v501, %v694
    %v731 = vadd.f32 %v506, %v699
    %v732 = vadd.f32 %v509, %v702
    %v733 = vadd.f32 %v514, %v707
    %v734 = vadd.f32 %v517, %v710
    %v735 = vadd.f32 %v522, %v715
    %v736 = vadd.f32 %v525, %v718
    %v737 = vld [vmem:[%s7] sm:$0xf]
    %v738 = vld [vmem:[%s7 + $0x4] sm:$0xf]
    %v739 = vld [vmem:[%s7 + $0x8] sm:$0xf]
    %v740 = vld [vmem:[%s7 + $0xc] sm:$0xf]
    %v741 = vld [vmem:[%s7 + $0x10] sm:$0xf]
    %v742 = vld [vmem:[%s7 + $0x14] sm:$0xf]
    %v743 = vld [vmem:[%s7 + $0x18] sm:$0xf]
    %v744 = vld [vmem:[%s7 + $0x1c] sm:$0xf]
    %v745 = vld [vmem:[%s7 + $0x20] sm:$0xf]
    %v746 = vld [vmem:[%s7 + $0x24] sm:$0xf]
    %v747 = vld [vmem:[%s7 + $0x28] sm:$0xf]
    %v748 = vld [vmem:[%s7 + $0x2c] sm:$0xf]
    %v749 = vld [vmem:[%s7 + $0x30] sm:$0xf]
    %v750 = vld [vmem:[%s7 + $0x34] sm:$0xf]
    %v751 = vld [vmem:[%s7 + $0x38] sm:$0xf]
    %v752 = vld [vmem:[%s7 + $0x3c] sm:$0xf]
    %v753 = vld [vmem:[%s39] sm:$0xf]
    %v754 = vld [vmem:[%s39 + $0x4] sm:$0xf]
    %v755 = vld [vmem:[%s39 + $0x8] sm:$0xf]
    %v756 = vld [vmem:[%s39 + $0xc] sm:$0xf]
    %v773 = vunpack.c.l.b16 %v737
    %v774 = vunpack.c.l.b16 %v738
    %v775 = vunpack.c.l.b16 %v739
    %v776 = vunpack.c.l.b16 %v740
    %v777 = vunpack.c.l.b16 %v741
    %v778 = vunpack.c.l.b16 %v742
    %v779 = vunpack.c.l.b16 %v743
    %v780 = vunpack.c.l.b16 %v744
    %v781 = vunpack.c.l.b16 %v745
    %v782 = vunpack.c.l.b16 %v746
    %v783 = vunpack.c.l.b16 %v747
    %v784 = vunpack.c.l.b16 %v748
    %v785 = vunpack.c.l.b16 %v749
    %v786 = vunpack.c.l.b16 %v750
    %v787 = vunpack.c.l.b16 %v751
    %v788 = vunpack.c.l.b16 %v752
    %v789 = vpack.c.b16 %v774, %v773
    %v790 = vpack.c.b16 %v776, %v775
    %v791 = vpack.c.b16 %v778, %v777
    %v792 = vpack.c.b16 %v780, %v779
    %v793 = vpack.c.b16 %v782, %v781
    %v794 = vpack.c.b16 %v784, %v783
    %v795 = vpack.c.b16 %v786, %v785
    %v796 = vpack.c.b16 %v788, %v787
    %v801 = vunpack.c.l.b16 %v753
    %v802 = vunpack.c.l.b16 %v754
    %v803 = vunpack.c.l.b16 %v755
    %v804 = vunpack.c.l.b16 %v756
    %v805 = vpack.c.b16 %v802, %v801
    %v806 = vpack.c.b16 %v804, %v803
    %v810 = vsel %vm233, %v789, 0
    %v813 = vsel %vm233, %v790, 0
    %v816 = vsel %vm233, %v791, 0
    %v819 = vsel %vm233, %v792, 0
    %v822 = vsel %vm233, %v793, 0
    %v825 = vsel %vm233, %v794, 0
    %v828 = vsel %vm233, %v795, 0
    %v831 = vsel %vm233, %v796, 0
    %833 = vmatprep.subr.bf16.mxu0 0
    %834 = vmatpush1.bf16.msra.mxu0 %v805
    %835 = vmatprep.subr.bf16.mxu0 0
    %836 = vmatpush1.bf16.msra.mxu0 %v806
    %837 = vmatprep.subr.bf16.mxu0 0
    %838 = vmatpush1.bf16.msra.mxu0 0
    %839 = vmatprep.subr.bf16.mxu0 0
    %840 = vmatpush1.bf16.msra.mxu0 0
    %841 = vmatprep.subr.bf16.mxu0 0
    %842 = vmatpush1.bf16.msra.mxu0 0
    %843 = vmatprep.subr.bf16.mxu0 0
    %844 = vmatpush1.bf16.msra.mxu0 0
    %845 = vmatprep.subr.bf16.mxu0 0
    %846 = vmatpush1.bf16.msra.mxu0 0
    %847 = vmatprep.subr.bf16.mxu0 0
    %848 = vmatpush1.bf16.msra.mxu0 0
    %849 = vmatprep.subr.bf16.mxu0 0
    %850 = vmatpush1.bf16.msra.mxu0 0
    %851 = vmatprep.subr.bf16.mxu0 0
    %852 = vmatpush1.bf16.msra.mxu0 0
    %853 = vmatprep.subr.bf16.mxu0 0
    %854 = vmatpush1.bf16.msra.mxu0 0
    %855 = vmatprep.subr.bf16.mxu0 0
    %856 = vmatpush1.bf16.msra.mxu0 0
    %857 = vmatprep.subr.bf16.mxu0 0
    %858 = vmatpush1.bf16.msra.mxu0 0
    %859 = vmatprep.subr.bf16.mxu0 0
    %860 = vmatpush1.bf16.msra.mxu0 0
    %861 = vmatprep.subr.bf16.mxu0 0
    %862 = vmatpush1.bf16.msra.mxu0 0
    %863 = vmatprep.subr.bf16.mxu0 0
    %864 = vmatpush1.bf16.msra.mxu0 0
    %865 = vmatprep.mubr.bf16.mxu0 0
    %866 = vmatmul.mubr.bf16.gmra.mrb[0].mxu0 %v810
    %v867 = vpop.f32.mrb[0].mxu0
    %v868 = vadd.f32 0.0, %v867
    %v869 = vpop.f32.mrb[0].mxu0
    %v870 = vpop.f32.mrb[0].mxu0
    %v871 = vadd.f32 0.0, %v870
    %v872 = vpop.f32.mrb[0].mxu0
    %873 = vmatprep.mubr.bf16.mxu0 0
    %874 = vmatmul.mubr.bf16.gmra.mrb[0].mxu0 %v813
    %v875 = vpop.f32.mrb[0].mxu0
    %v876 = vadd.f32 0.0, %v875
    %v877 = vpop.f32.mrb[0].mxu0
    %v878 = vpop.f32.mrb[0].mxu0
    %v879 = vadd.f32 0.0, %v878
    %v880 = vpop.f32.mrb[0].mxu0
    %881 = vmatprep.mubr.bf16.mxu0 0
    %882 = vmatmul.mubr.bf16.gmra.mrb[0].mxu0 %v816
    %v883 = vpop.f32.mrb[0].mxu0
    %v884 = vadd.f32 0.0, %v883
    %v885 = vpop.f32.mrb[0].mxu0
    %v886 = vpop.f32.mrb[0].mxu0
    %v887 = vadd.f32 0.0, %v886
    %v888 = vpop.f32.mrb[0].mxu0
    %889 = vmatprep.mubr.bf16.mxu0 0
    %890 = vmatmul.mubr.bf16.gmra.mrb[0].mxu0 %v819
    %v891 = vpop.f32.mrb[0].mxu0
    %v892 = vadd.f32 0.0, %v891
    %v893 = vpop.f32.mrb[0].mxu0
    %v894 = vpop.f32.mrb[0].mxu0
    %v895 = vadd.f32 0.0, %v894
    %v896 = vpop.f32.mrb[0].mxu0
    %897 = vmatprep.mubr.bf16.mxu0 0
    %898 = vmatmul.mubr.bf16.gmra.mrb[0].mxu0 %v822
    %v899 = vpop.f32.mrb[0].mxu0
    %v900 = vadd.f32 0.0, %v899
    %v901 = vpop.f32.mrb[0].mxu0
    %v902 = vpop.f32.mrb[0].mxu0
    %v903 = vadd.f32 0.0, %v902
    %v904 = vpop.f32.mrb[0].mxu0
    %905 = vmatprep.mubr.bf16.mxu0 0
    %906 = vmatmul.mubr.bf16.gmra.mrb[0].mxu0 %v825
    %v907 = vpop.f32.mrb[0].mxu0
    %v908 = vadd.f32 0.0, %v907
    %v909 = vpop.f32.mrb[0].mxu0
    %v910 = vpop.f32.mrb[0].mxu0
    %v911 = vadd.f32 0.0, %v910
    %v912 = vpop.f32.mrb[0].mxu0
    %913 = vmatprep.mubr.bf16.mxu0 0
    %914 = vmatmul.mubr.bf16.gmra.mrb[0].mxu0 %v828
    %v915 = vpop.f32.mrb[0].mxu0
    %v916 = vadd.f32 0.0, %v915
    %v917 = vpop.f32.mrb[0].mxu0
    %v918 = vpop.f32.mrb[0].mxu0
    %v919 = vadd.f32 0.0, %v918
    %v920 = vpop.f32.mrb[0].mxu0
    %921 = vmatprep.mubr.bf16.mxu0 0
    %922 = vmatmul.mubr.bf16.gmra.mrb[0].mxu0 %v831
    %v923 = vpop.f32.mrb[0].mxu0
    %v924 = vadd.f32 0.0, %v923
    %v925 = vpop.f32.mrb[0].mxu0
    %v926 = vpop.f32.mrb[0].mxu0
    %v927 = vadd.f32 0.0, %v926
    %v928 = vpop.f32.mrb[0].mxu0
    %929 = vdwg.mxu0
    %v930 = vadd.f32 %v721, %v868
    %v931 = vadd.f32 %v722, %v871
    %v932 = vadd.f32 %v723, %v876
    %v933 = vadd.f32 %v724, %v879
    %v934 = vadd.f32 %v725, %v884
    %v935 = vadd.f32 %v726, %v887
    %v936 = vadd.f32 %v727, %v892
    %v937 = vadd.f32 %v728, %v895
    %v938 = vadd.f32 %v729, %v900
    %v939 = vadd.f32 %v730, %v903
    %v940 = vadd.f32 %v731, %v908
    %v941 = vadd.f32 %v732, %v911
    %v942 = vadd.f32 %v733, %v916
    %v943 = vadd.f32 %v734, %v919
    %v944 = vadd.f32 %v735, %v924
    %v945 = vadd.f32 %v736, %v927
    %v946 = vld [vmem:[%s9] sm:$0xf]
    %v947 = vld [vmem:[%s9 + $0x4] sm:$0xf]
    %v948 = vld [vmem:[%s9 + $0x8] sm:$0xf]
    %v949 = vld [vmem:[%s9 + $0xc] sm:$0xf]
    %v950 = vld [vmem:[%s9 + $0x10] sm:$0xf]
    %v951 = vld [vmem:[%s9 + $0x14] sm:$0xf]
    %v952 = vld [vmem:[%s9 + $0x18] sm:$0xf]
    %v953 = vld [vmem:[%s9 + $0x1c] sm:$0xf]
    %v954 = vld [vmem:[%s9 + $0x20] sm:$0xf]
    %v955 = vld [vmem:[%s9 + $0x24] sm:$0xf]
    %v956 = vld [vmem:[%s9 + $0x28] sm:$0xf]
    %v957 = vld [vmem:[%s9 + $0x2c] sm:$0xf]
    %v958 = vld [vmem:[%s9 + $0x30] sm:$0xf]
    %v959 = vld [vmem:[%s9 + $0x34] sm:$0xf]
    %v960 = vld [vmem:[%s9 + $0x38] sm:$0xf]
    %v961 = vld [vmem:[%s9 + $0x3c] sm:$0xf]
    %v962 = vld [vmem:[%s41] sm:$0xf]
    %v963 = vld [vmem:[%s41 + $0x4] sm:$0xf]
    %v964 = vld [vmem:[%s41 + $0x8] sm:$0xf]
    %v965 = vld [vmem:[%s41 + $0xc] sm:$0xf]
    %v982 = vunpack.c.l.b16 %v946
    %v983 = vunpack.c.l.b16 %v947
    %v984 = vunpack.c.l.b16 %v948
    %v985 = vunpack.c.l.b16 %v949
    %v986 = vunpack.c.l.b16 %v950
    %v987 = vunpack.c.l.b16 %v951
    %v988 = vunpack.c.l.b16 %v952
    %v989 = vunpack.c.l.b16 %v953
    %v990 = vunpack.c.l.b16 %v954
    %v991 = vunpack.c.l.b16 %v955
    %v992 = vunpack.c.l.b16 %v956
    %v993 = vunpack.c.l.b16 %v957
    %v994 = vunpack.c.l.b16 %v958
    %v995 = vunpack.c.l.b16 %v959
    %v996 = vunpack.c.l.b16 %v960
    %v997 = vunpack.c.l.b16 %v961
    %v998 = vpack.c.b16 %v983, %v982
    %v999 = vpack.c.b16 %v985, %v984
    %v1000 = vpack.c.b16 %v987, %v986
    %v1001 = vpack.c.b16 %v989, %v988
    %v1002 = vpack.c.b16 %v991, %v990
    %v1003 = vpack.c.b16 %v993, %v992
    %v1004 = vpack.c.b16 %v995, %v994
    %v1005 = vpack.c.b16 %v997, %v996
    %v1010 = vunpack.c.l.b16 %v962
    %v1011 = vunpack.c.l.b16 %v963
    %v1012 = vunpack.c.l.b16 %v964
    %v1013 = vunpack.c.l.b16 %v965
    %v1014 = vpack.c.b16 %v1011, %v1010
    %v1015 = vpack.c.b16 %v1013, %v1012
    %v1019 = vsel %vm233, %v998, 0
    %v1022 = vsel %vm233, %v999, 0
    %v1025 = vsel %vm233, %v1000, 0
    %v1028 = vsel %vm233, %v1001, 0
    %v1031 = vsel %vm233, %v1002, 0
    %v1034 = vsel %vm233, %v1003, 0
    %v1037 = vsel %vm233, %v1004, 0
    %v1040 = vsel %vm233, %v1005, 0
    %1042 = vmatprep.subr.bf16.mxu0 0
    %1043 = vmatpush1.bf16.msra.mxu0 %v1014
    %1044 = vmatprep.subr.bf16.mxu0 0
    %1045 = vmatpush1.bf16.msra.mxu0 %v1015
    %1046 = vmatprep.subr.bf16.mxu0 0
    %1047 = vmatpush1.bf16.msra.mxu0 0
    %1048 = vmatprep.subr.bf16.mxu0 0
    %1049 = vmatpush1.bf16.msra.mxu0 0
    %1050 = vmatprep.subr.bf16.mxu0 0
    %1051 = vmatpush1.bf16.msra.mxu0 0
    %1052 = vmatprep.subr.bf16.mxu0 0
    %1053 = vmatpush1.bf16.msra.mxu0 0
    %1054 = vmatprep.subr.bf16.mxu0 0
    %1055 = vmatpush1.bf16.msra.mxu0 0
    %1056 = vmatprep.subr.bf16.mxu0 0
    %1057 = vmatpush1.bf16.msra.mxu0 0
    %1058 = vmatprep.subr.bf16.mxu0 0
    %1059 = vmatpush1.bf16.msra.mxu0 0
    %1060 = vmatprep.subr.bf16.mxu0 0
    %1061 = vmatpush1.bf16.msra.mxu0 0
    %1062 = vmatprep.subr.bf16.mxu0 0
    %1063 = vmatpush1.bf16.msra.mxu0 0
    %1064 = vmatprep.subr.bf16.mxu0 0
    %1065 = vmatpush1.bf16.msra.mxu0 0
    %1066 = vmatprep.subr.bf16.mxu0 0
    %1067 = vmatpush1.bf16.msra.mxu0 0
    %1068 = vmatprep.subr.bf16.mxu0 0
    %1069 = vmatpush1.bf16.msra.mxu0 0
    %1070 = vmatprep.subr.bf16.mxu0 0
    %1071 = vmatpush1.bf16.msra.mxu0 0
    %1072 = vmatprep.subr.bf16.mxu0 0
    %1073 = vmatpush1.bf16.msra.mxu0 0
    %1074 = vmatprep.mubr.bf16.mxu0 0
    %1075 = vmatmul.mubr.bf16.gmra.mrb[0].mxu0 %v1019
    %v1076 = vpop.f32.mrb[0].mxu0
    %v1077 = vadd.f32 0.0, %v1076
    %v1078 = vpop.f32.mrb[0].mxu0
    %v1079 = vpop.f32.mrb[0].mxu0
    %v1080 = vadd.f32 0.0, %v1079
    %v1081 = vpop.f32.mrb[0].mxu0
    %1082 = vmatprep.mubr.bf16.mxu0 0
    %1083 = vmatmul.mubr.bf16.gmra.mrb[0].mxu0 %v1022
    %v1084 = vpop.f32.mrb[0].mxu0
    %v1085 = vadd.f32 0.0, %v1084
    %v1086 = vpop.f32.mrb[0].mxu0
    %v1087 = vpop.f32.mrb[0].mxu0
    %v1088 = vadd.f32 0.0, %v1087
    %v1089 = vpop.f32.mrb[0].mxu0
    %1090 = vmatprep.mubr.bf16.mxu0 0
    %1091 = vmatmul.mubr.bf16.gmra.mrb[0].mxu0 %v1025
    %v1092 = vpop.f32.mrb[0].mxu0
    %v1093 = vadd.f32 0.0, %v1092
    %v1094 = vpop.f32.mrb[0].mxu0
    %v1095 = vpop.f32.mrb[0].mxu0
    %v1096 = vadd.f32 0.0, %v1095
    %v1097 = vpop.f32.mrb[0].mxu0
    %1098 = vmatprep.mubr.bf16.mxu0 0
    %1099 = vmatmul.mubr.bf16.gmra.mrb[0].mxu0 %v1028
    %v1100 = vpop.f32.mrb[0].mxu0
    %v1101 = vadd.f32 0.0, %v1100
    %v1102 = vpop.f32.mrb[0].mxu0
    %v1103 = vpop.f32.mrb[0].mxu0
    %v1104 = vadd.f32 0.0, %v1103
    %v1105 = vpop.f32.mrb[0].mxu0
    %1106 = vmatprep.mubr.bf16.mxu0 0
    %1107 = vmatmul.mubr.bf16.gmra.mrb[0].mxu0 %v1031
    %v1108 = vpop.f32.mrb[0].mxu0
    %v1109 = vadd.f32 0.0, %v1108
    %v1110 = vpop.f32.mrb[0].mxu0
    %v1111 = vpop.f32.mrb[0].mxu0
    %v1112 = vadd.f32 0.0, %v1111
    %v1113 = vpop.f32.mrb[0].mxu0
    %1114 = vmatprep.mubr.bf16.mxu0 0
    %1115 = vmatmul.mubr.bf16.gmra.mrb[0].mxu0 %v1034
    %v1116 = vpop.f32.mrb[0].mxu0
    %v1117 = vadd.f32 0.0, %v1116
    %v1118 = vpop.f32.mrb[0].mxu0
    %v1119 = vpop.f32.mrb[0].mxu0
    %v1120 = vadd.f32 0.0, %v1119
    %v1121 = vpop.f32.mrb[0].mxu0
    %1122 = vmatprep.mubr.bf16.mxu0 0
    %1123 = vmatmul.mubr.bf16.gmra.mrb[0].mxu0 %v1037
    %v1124 = vpop.f32.mrb[0].mxu0
    %v1125 = vadd.f32 0.0, %v1124
    %v1126 = vpop.f32.mrb[0].mxu0
    %v1127 = vpop.f32.mrb[0].mxu0
    %v1128 = vadd.f32 0.0, %v1127
    %v1129 = vpop.f32.mrb[0].mxu0
    %1130 = vmatprep.mubr.bf16.mxu0 0
    %1131 = vmatmul.mubr.bf16.gmra.mrb[0].mxu0 %v1040
    %v1132 = vpop.f32.mrb[0].mxu0
    %v1133 = vadd.f32 0.0, %v1132
    %v1134 = vpop.f32.mrb[0].mxu0
    %v1135 = vpop.f32.mrb[0].mxu0
    %v1136 = vadd.f32 0.0, %v1135
    %v1137 = vpop.f32.mrb[0].mxu0
    %1138 = vdwg.mxu0
    %v1139 = vadd.f32 %v930, %v1077
    %v1140 = vadd.f32 %v931, %v1080
    %v1141 = vadd.f32 %v932, %v1085
    %v1142 = vadd.f32 %v933, %v1088
    %v1143 = vadd.f32 %v934, %v1093
    %v1144 = vadd.f32 %v935, %v1096
    %v1145 = vadd.f32 %v936, %v1101
    %v1146 = vadd.f32 %v937, %v1104
    %v1147 = vadd.f32 %v938, %v1109
    %v1148 = vadd.f32 %v939, %v1112
    %v1149 = vadd.f32 %v940, %v1117
    %v1150 = vadd.f32 %v941, %v1120
    %v1151 = vadd.f32 %v942, %v1125
    %v1152 = vadd.f32 %v943, %v1128
    %v1153 = vadd.f32 %v944, %v1133
    %v1154 = vadd.f32 %v945, %v1136
    %v1155 = vld [vmem:[%s11] sm:$0xf]
    %v1156 = vld [vmem:[%s11 + $0x4] sm:$0xf]
    %v1157 = vld [vmem:[%s11 + $0x8] sm:$0xf]
    %v1158 = vld [vmem:[%s11 + $0xc] sm:$0xf]
    %v1159 = vld [vmem:[%s11 + $0x10] sm:$0xf]
    %v1160 = vld [vmem:[%s11 + $0x14] sm:$0xf]
    %v1161 = vld [vmem:[%s11 + $0x18] sm:$0xf]
    %v1162 = vld [vmem:[%s11 + $0x1c] sm:$0xf]
    %v1163 = vld [vmem:[%s11 + $0x20] sm:$0xf]
    %v1164 = vld [vmem:[%s11 + $0x24] sm:$0xf]
    %v1165 = vld [vmem:[%s11 + $0x28] sm:$0xf]
    %v1166 = vld [vmem:[%s11 + $0x2c] sm:$0xf]
    %v1167 = vld [vmem:[%s11 + $0x30] sm:$0xf]
    %v1168 = vld [vmem:[%s11 + $0x34] sm:$0xf]
    %v1169 = vld [vmem:[%s11 + $0x38] sm:$0xf]
    %v1170 = vld [vmem:[%s11 + $0x3c] sm:$0xf]
    %v1171 = vld [vmem:[%s43] sm:$0xf]
    %v1172 = vld [vmem:[%s43 + $0x4] sm:$0xf]
    %v1173 = vld [vmem:[%s43 + $0x8] sm:$0xf]
    %v1174 = vld [vmem:[%s43 + $0xc] sm:$0xf]
    %v1191 = vunpack.c.l.b16 %v1155
    %v1192 = vunpack.c.l.b16 %v1156
    %v1193 = vunpack.c.l.b16 %v1157
    %v1194 = vunpack.c.l.b16 %v1158
    %v1195 = vunpack.c.l.b16 %v1159
    %v1196 = vunpack.c.l.b16 %v1160
    %v1197 = vunpack.c.l.b16 %v1161
    %v1198 = vunpack.c.l.b16 %v1162
    %v1199 = vunpack.c.l.b16 %v1163
    %v1200 = vunpack.c.l.b16 %v1164
    %v1201 = vunpack.c.l.b16 %v1165
    %v1202 = vunpack.c.l.b16 %v1166
    %v1203 = vunpack.c.l.b16 %v1167
    %v1204 = vunpack.c.l.b16 %v1168
    %v1205 = vunpack.c.l.b16 %v1169
    %v1206 = vunpack.c.l.b16 %v1170
    %v1207 = vpack.c.b16 %v1192, %v1191
    %v1208 = vpack.c.b16 %v1194, %v1193
    %v1209 = vpack.c.b16 %v1196, %v1195
    %v1210 = vpack.c.b16 %v1198, %v1197
    %v1211 = vpack.c.b16 %v1200, %v1199
    %v1212 = vpack.c.b16 %v1202, %v1201
    %v1213 = vpack.c.b16 %v1204, %v1203
    %v1214 = vpack.c.b16 %v1206, %v1205
    %v1219 = vunpack.c.l.b16 %v1171
    %v1220 = vunpack.c.l.b16 %v1172
    %v1221 = vunpack.c.l.b16 %v1173
    %v1222 = vunpack.c.l.b16 %v1174
    %v1223 = vpack.c.b16 %v1220, %v1219
    %v1224 = vpack.c.b16 %v1222, %v1221
    %v1228 = vsel %vm233, %v1207, 0
    %v1231 = vsel %vm233, %v1208, 0
    %v1234 = vsel %vm233, %v1209, 0
    %v1237 = vsel %vm233, %v1210, 0
    %v1240 = vsel %vm233, %v1211, 0
    %v1243 = vsel %vm233, %v1212, 0
    %v1246 = vsel %vm233, %v1213, 0
    %v1249 = vsel %vm233, %v1214, 0
    %1251 = vmatprep.subr.bf16.mxu0 0
    %1252 = vmatpush1.bf16.msra.mxu0 %v1223
    %1253 = vmatprep.subr.bf16.mxu0 0
    %1254 = vmatpush1.bf16.msra.mxu0 %v1224
    %1255 = vmatprep.subr.bf16.mxu0 0
    %1256 = vmatpush1.bf16.msra.mxu0 0
    %1257 = vmatprep.subr.bf16.mxu0 0
    %1258 = vmatpush1.bf16.msra.mxu0 0
    %1259 = vmatprep.subr.bf16.mxu0 0
    %1260 = vmatpush1.bf16.msra.mxu0 0
    %1261 = vmatprep.subr.bf16.mxu0 0
    %1262 = vmatpush1.bf16.msra.mxu0 0
    %1263 = vmatprep.subr.bf16.mxu0 0
    %1264 = vmatpush1.bf16.msra.mxu0 0
    %1265 = vmatprep.subr.bf16.mxu0 0
    %1266 = vmatpush1.bf16.msra.mxu0 0
    %1267 = vmatprep.subr.bf16.mxu0 0
    %1268 = vmatpush1.bf16.msra.mxu0 0
    %1269 = vmatprep.subr.bf16.mxu0 0
    %1270 = vmatpush1.bf16.msra.mxu0 0
    %1271 = vmatprep.subr.bf16.mxu0 0
    %1272 = vmatpush1.bf16.msra.mxu0 0
    %1273 = vmatprep.subr.bf16.mxu0 0
    %1274 = vmatpush1.bf16.msra.mxu0 0
    %1275 = vmatprep.subr.bf16.mxu0 0
    %1276 = vmatpush1.bf16.msra.mxu0 0
    %1277 = vmatprep.subr.bf16.mxu0 0
    %1278 = vmatpush1.bf16.msra.mxu0 0
    %1279 = vmatprep.subr.bf16.mxu0 0
    %1280 = vmatpush1.bf16.msra.mxu0 0
    %1281 = vmatprep.subr.bf16.mxu0 0
    %1282 = vmatpush1.bf16.msra.mxu0 0
    %1283 = vmatprep.mubr.bf16.mxu0 0
    %1284 = vmatmul.mubr.bf16.gmra.mrb[0].mxu0 %v1228
    %v1285 = vpop.f32.mrb[0].mxu0
    %v1286 = vadd.f32 0.0, %v1285
    %v1287 = vpop.f32.mrb[0].mxu0
    %v1288 = vpop.f32.mrb[0].mxu0
    %v1289 = vadd.f32 0.0, %v1288
    %v1290 = vpop.f32.mrb[0].mxu0
    %1291 = vmatprep.mubr.bf16.mxu0 0
    %1292 = vmatmul.mubr.bf16.gmra.mrb[0].mxu0 %v1231
    %v1293 = vpop.f32.mrb[0].mxu0
    %v1294 = vadd.f32 0.0, %v1293
    %v1295 = vpop.f32.mrb[0].mxu0
    %v1296 = vpop.f32.mrb[0].mxu0
    %v1297 = vadd.f32 0.0, %v1296
    %v1298 = vpop.f32.mrb[0].mxu0
    %1299 = vmatprep.mubr.bf16.mxu0 0
    %1300 = vmatmul.mubr.bf16.gmra.mrb[0].mxu0 %v1234
    %v1301 = vpop.f32.mrb[0].mxu0
    %v1302 = vadd.f32 0.0, %v1301
    %v1303 = vpop.f32.mrb[0].mxu0
    %v1304 = vpop.f32.mrb[0].mxu0
    %v1305 = vadd.f32 0.0, %v1304
    %v1306 = vpop.f32.mrb[0].mxu0
    %1307 = vmatprep.mubr.bf16.mxu0 0
    %1308 = vmatmul.mubr.bf16.gmra.mrb[0].mxu0 %v1237
    %v1309 = vpop.f32.mrb[0].mxu0
    %v1310 = vadd.f32 0.0, %v1309
    %v1311 = vpop.f32.mrb[0].mxu0
    %v1312 = vpop.f32.mrb[0].mxu0
    %v1313 = vadd.f32 0.0, %v1312
    %v1314 = vpop.f32.mrb[0].mxu0
    %1315 = vmatprep.mubr.bf16.mxu0 0
    %1316 = vmatmul.mubr.bf16.gmra.mrb[0].mxu0 %v1240
    %v1317 = vpop.f32.mrb[0].mxu0
    %v1318 = vadd.f32 0.0, %v1317
    %v1319 = vpop.f32.mrb[0].mxu0
    %v1320 = vpop.f32.mrb[0].mxu0
    %v1321 = vadd.f32 0.0, %v1320
    %v1322 = vpop.f32.mrb[0].mxu0
    %1323 = vmatprep.mubr.bf16.mxu0 0
    %1324 = vmatmul.mubr.bf16.gmra.mrb[0].mxu0 %v1243
    %v1325 = vpop.f32.mrb[0].mxu0
    %v1326 = vadd.f32 0.0, %v1325
    %v1327 = vpop.f32.mrb[0].mxu0
    %v1328 = vpop.f32.mrb[0].mxu0
    %v1329 = vadd.f32 0.0, %v1328
    %v1330 = vpop.f32.mrb[0].mxu0
    %1331 = vmatprep.mubr.bf16.mxu0 0
    %1332 = vmatmul.mubr.bf16.gmra.mrb[0].mxu0 %v1246
    %v1333 = vpop.f32.mrb[0].mxu0
    %v1334 = vadd.f32 0.0, %v1333
    %v1335 = vpop.f32.mrb[0].mxu0
    %v1336 = vpop.f32.mrb[0].mxu0
    %v1337 = vadd.f32 0.0, %v1336
    %v1338 = vpop.f32.mrb[0].mxu0
    %1339 = vmatprep.mubr.bf16.mxu0 0
    %1340 = vmatmul.mubr.bf16.gmra.mrb[0].mxu0 %v1249
    %v1341 = vpop.f32.mrb[0].mxu0
    %v1342 = vadd.f32 0.0, %v1341
    %v1343 = vpop.f32.mrb[0].mxu0
    %v1344 = vpop.f32.mrb[0].mxu0
    %v1345 = vadd.f32 0.0, %v1344
    %v1346 = vpop.f32.mrb[0].mxu0
    %1347 = vdwg.mxu0
    %v1348 = vadd.f32 %v1139, %v1286
    %v1349 = vadd.f32 %v1140, %v1289
    %v1350 = vadd.f32 %v1141, %v1294
    %v1351 = vadd.f32 %v1142, %v1297
    %v1352 = vadd.f32 %v1143, %v1302
    %v1353 = vadd.f32 %v1144, %v1305
    %v1354 = vadd.f32 %v1145, %v1310
    %v1355 = vadd.f32 %v1146, %v1313
    %v1356 = vadd.f32 %v1147, %v1318
    %v1357 = vadd.f32 %v1148, %v1321
    %v1358 = vadd.f32 %v1149, %v1326
    %v1359 = vadd.f32 %v1150, %v1329
    %v1360 = vadd.f32 %v1151, %v1334
    %v1361 = vadd.f32 %v1152, %v1337
    %v1362 = vadd.f32 %v1153, %v1342
    %v1363 = vadd.f32 %v1154, %v1345
    %v1364 = vld [vmem:[%s13] sm:$0xf]
    %v1365 = vld [vmem:[%s13 + $0x4] sm:$0xf]
    %v1366 = vld [vmem:[%s13 + $0x8] sm:$0xf]
    %v1367 = vld [vmem:[%s13 + $0xc] sm:$0xf]
    %v1368 = vld [vmem:[%s13 + $0x10] sm:$0xf]
    %v1369 = vld [vmem:[%s13 + $0x14] sm:$0xf]
    %v1370 = vld [vmem:[%s13 + $0x18] sm:$0xf]
    %v1371 = vld [vmem:[%s13 + $0x1c] sm:$0xf]
    %v1372 = vld [vmem:[%s13 + $0x20] sm:$0xf]
    %v1373 = vld [vmem:[%s13 + $0x24] sm:$0xf]
    %v1374 = vld [vmem:[%s13 + $0x28] sm:$0xf]
    %v1375 = vld [vmem:[%s13 + $0x2c] sm:$0xf]
    %v1376 = vld [vmem:[%s13 + $0x30] sm:$0xf]
    %v1377 = vld [vmem:[%s13 + $0x34] sm:$0xf]
    %v1378 = vld [vmem:[%s13 + $0x38] sm:$0xf]
    %v1379 = vld [vmem:[%s13 + $0x3c] sm:$0xf]
    %v1380 = vld [vmem:[%s45] sm:$0xf]
    %v1381 = vld [vmem:[%s45 + $0x4] sm:$0xf]
    %v1382 = vld [vmem:[%s45 + $0x8] sm:$0xf]
    %v1383 = vld [vmem:[%s45 + $0xc] sm:$0xf]
    %v1400 = vunpack.c.l.b16 %v1364
    %v1401 = vunpack.c.l.b16 %v1365
    %v1402 = vunpack.c.l.b16 %v1366
    %v1403 = vunpack.c.l.b16 %v1367
    %v1404 = vunpack.c.l.b16 %v1368
    %v1405 = vunpack.c.l.b16 %v1369
    %v1406 = vunpack.c.l.b16 %v1370
    %v1407 = vunpack.c.l.b16 %v1371
    %v1408 = vunpack.c.l.b16 %v1372
    %v1409 = vunpack.c.l.b16 %v1373
    %v1410 = vunpack.c.l.b16 %v1374
    %v1411 = vunpack.c.l.b16 %v1375
    %v1412 = vunpack.c.l.b16 %v1376
    %v1413 = vunpack.c.l.b16 %v1377
    %v1414 = vunpack.c.l.b16 %v1378
    %v1415 = vunpack.c.l.b16 %v1379
    %v1416 = vpack.c.b16 %v1401, %v1400
    %v1417 = vpack.c.b16 %v1403, %v1402
    %v1418 = vpack.c.b16 %v1405, %v1404
    %v1419 = vpack.c.b16 %v1407, %v1406
    %v1420 = vpack.c.b16 %v1409, %v1408
    %v1421 = vpack.c.b16 %v1411, %v1410
    %v1422 = vpack.c.b16 %v1413, %v1412
    %v1423 = vpack.c.b16 %v1415, %v1414
    %v1428 = vunpack.c.l.b16 %v1380
    %v1429 = vunpack.c.l.b16 %v1381
    %v1430 = vunpack.c.l.b16 %v1382
    %v1431 = vunpack.c.l.b16 %v1383
    %v1432 = vpack.c.b16 %v1429, %v1428
    %v1433 = vpack.c.b16 %v1431, %v1430
    %v1437 = vsel %vm233, %v1416, 0
    %v1440 = vsel %vm233, %v1417, 0
    %v1443 = vsel %vm233, %v1418, 0
    %v1446 = vsel %vm233, %v1419, 0
    %v1449 = vsel %vm233, %v1420, 0
    %v1452 = vsel %vm233, %v1421, 0
    %v1455 = vsel %vm233, %v1422, 0
    %v1458 = vsel %vm233, %v1423, 0
    %1460 = vmatprep.subr.bf16.mxu0 0
    %1461 = vmatpush1.bf16.msra.mxu0 %v1432
    %1462 = vmatprep.subr.bf16.mxu0 0
    %1463 = vmatpush1.bf16.msra.mxu0 %v1433
    %1464 = vmatprep.subr.bf16.mxu0 0
    %1465 = vmatpush1.bf16.msra.mxu0 0
    %1466 = vmatprep.subr.bf16.mxu0 0
    %1467 = vmatpush1.bf16.msra.mxu0 0
    %1468 = vmatprep.subr.bf16.mxu0 0
    %1469 = vmatpush1.bf16.msra.mxu0 0
    %1470 = vmatprep.subr.bf16.mxu0 0
    %1471 = vmatpush1.bf16.msra.mxu0 0
    %1472 = vmatprep.subr.bf16.mxu0 0
    %1473 = vmatpush1.bf16.msra.mxu0 0
    %1474 = vmatprep.subr.bf16.mxu0 0
    %1475 = vmatpush1.bf16.msra.mxu0 0
    %1476 = vmatprep.subr.bf16.mxu0 0
    %1477 = vmatpush1.bf16.msra.mxu0 0
    %1478 = vmatprep.subr.bf16.mxu0 0
    %1479 = vmatpush1.bf16.msra.mxu0 0
    %1480 = vmatprep.subr.bf16.mxu0 0
    %1481 = vmatpush1.bf16.msra.mxu0 0
    %1482 = vmatprep.subr.bf16.mxu0 0
    %1483 = vmatpush1.bf16.msra.mxu0 0
    %1484 = vmatprep.subr.bf16.mxu0 0
    %1485 = vmatpush1.bf16.msra.mxu0 0
    %1486 = vmatprep.subr.bf16.mxu0 0
    %1487 = vmatpush1.bf16.msra.mxu0 0
    %1488 = vmatprep.subr.bf16.mxu0 0
    %1489 = vmatpush1.bf16.msra.mxu0 0
    %1490 = vmatprep.subr.bf16.mxu0 0
    %1491 = vmatpush1.bf16.msra.mxu0 0
    %1492 = vmatprep.mubr.bf16.mxu0 0
    %1493 = vmatmul.mubr.bf16.gmra.mrb[0].mxu0 %v1437
    %v1494 = vpop.f32.mrb[0].mxu0
    %v1495 = vadd.f32 0.0, %v1494
    %v1496 = vpop.f32.mrb[0].mxu0
    %v1497 = vpop.f32.mrb[0].mxu0
    %v1498 = vadd.f32 0.0, %v1497
    %v1499 = vpop.f32.mrb[0].mxu0
    %1500 = vmatprep.mubr.bf16.mxu0 0
    %1501 = vmatmul.mubr.bf16.gmra.mrb[0].mxu0 %v1440
    %v1502 = vpop.f32.mrb[0].mxu0
    %v1503 = vadd.f32 0.0, %v1502
    %v1504 = vpop.f32.mrb[0].mxu0
    %v1505 = vpop.f32.mrb[0].mxu0
    %v1506 = vadd.f32 0.0, %v1505
    %v1507 = vpop.f32.mrb[0].mxu0
    %1508 = vmatprep.mubr.bf16.mxu0 0
    %1509 = vmatmul.mubr.bf16.gmra.mrb[0].mxu0 %v1443
    %v1510 = vpop.f32.mrb[0].mxu0
    %v1511 = vadd.f32 0.0, %v1510
    %v1512 = vpop.f32.mrb[0].mxu0
    %v1513 = vpop.f32.mrb[0].mxu0
    %v1514 = vadd.f32 0.0, %v1513
    %v1515 = vpop.f32.mrb[0].mxu0
    %1516 = vmatprep.mubr.bf16.mxu0 0
    %1517 = vmatmul.mubr.bf16.gmra.mrb[0].mxu0 %v1446
    %v1518 = vpop.f32.mrb[0].mxu0
    %v1519 = vadd.f32 0.0, %v1518
    %v1520 = vpop.f32.mrb[0].mxu0
    %v1521 = vpop.f32.mrb[0].mxu0
    %v1522 = vadd.f32 0.0, %v1521
    %v1523 = vpop.f32.mrb[0].mxu0
    %1524 = vmatprep.mubr.bf16.mxu0 0
    %1525 = vmatmul.mubr.bf16.gmra.mrb[0].mxu0 %v1449
    %v1526 = vpop.f32.mrb[0].mxu0
    %v1527 = vadd.f32 0.0, %v1526
    %v1528 = vpop.f32.mrb[0].mxu0
    %v1529 = vpop.f32.mrb[0].mxu0
    %v1530 = vadd.f32 0.0, %v1529
    %v1531 = vpop.f32.mrb[0].mxu0
    %1532 = vmatprep.mubr.bf16.mxu0 0
    %1533 = vmatmul.mubr.bf16.gmra.mrb[0].mxu0 %v1452
    %v1534 = vpop.f32.mrb[0].mxu0
    %v1535 = vadd.f32 0.0, %v1534
    %v1536 = vpop.f32.mrb[0].mxu0
    %v1537 = vpop.f32.mrb[0].mxu0
    %v1538 = vadd.f32 0.0, %v1537
    %v1539 = vpop.f32.mrb[0].mxu0
    %1540 = vmatprep.mubr.bf16.mxu0 0
    %1541 = vmatmul.mubr.bf16.gmra.mrb[0].mxu0 %v1455
    %v1542 = vpop.f32.mrb[0].mxu0
    %v1543 = vadd.f32 0.0, %v1542
    %v1544 = vpop.f32.mrb[0].mxu0
    %v1545 = vpop.f32.mrb[0].mxu0
    %v1546 = vadd.f32 0.0, %v1545
    %v1547 = vpop.f32.mrb[0].mxu0
    %1548 = vmatprep.mubr.bf16.mxu0 0
    %1549 = vmatmul.mubr.bf16.gmra.mrb[0].mxu0 %v1458
    %v1550 = vpop.f32.mrb[0].mxu0
    %v1551 = vadd.f32 0.0, %v1550
    %v1552 = vpop.f32.mrb[0].mxu0
    %v1553 = vpop.f32.mrb[0].mxu0
    %v1554 = vadd.f32 0.0, %v1553
    %v1555 = vpop.f32.mrb[0].mxu0
    %1556 = vdwg.mxu0
    %v1557 = vadd.f32 %v1348, %v1495
    %v1558 = vadd.f32 %v1349, %v1498
    %v1559 = vadd.f32 %v1350, %v1503
    %v1560 = vadd.f32 %v1351, %v1506
    %v1561 = vadd.f32 %v1352, %v1511
    %v1562 = vadd.f32 %v1353, %v1514
    %v1563 = vadd.f32 %v1354, %v1519
    %v1564 = vadd.f32 %v1355, %v1522
    %v1565 = vadd.f32 %v1356, %v1527
    %v1566 = vadd.f32 %v1357, %v1530
    %v1567 = vadd.f32 %v1358, %v1535
    %v1568 = vadd.f32 %v1359, %v1538
    %v1569 = vadd.f32 %v1360, %v1543
    %v1570 = vadd.f32 %v1361, %v1546
    %v1571 = vadd.f32 %v1362, %v1551
    %v1572 = vadd.f32 %v1363, %v1554
    %v1573 = vld [vmem:[%s15] sm:$0xf]
    %v1574 = vld [vmem:[%s15 + $0x4] sm:$0xf]
    %v1575 = vld [vmem:[%s15 + $0x8] sm:$0xf]
    %v1576 = vld [vmem:[%s15 + $0xc] sm:$0xf]
    %v1577 = vld [vmem:[%s15 + $0x10] sm:$0xf]
    %v1578 = vld [vmem:[%s15 + $0x14] sm:$0xf]
    %v1579 = vld [vmem:[%s15 + $0x18] sm:$0xf]
    %v1580 = vld [vmem:[%s15 + $0x1c] sm:$0xf]
    %v1581 = vld [vmem:[%s15 + $0x20] sm:$0xf]
    %v1582 = vld [vmem:[%s15 + $0x24] sm:$0xf]
    %v1583 = vld [vmem:[%s15 + $0x28] sm:$0xf]
    %v1584 = vld [vmem:[%s15 + $0x2c] sm:$0xf]
    %v1585 = vld [vmem:[%s15 + $0x30] sm:$0xf]
    %v1586 = vld [vmem:[%s15 + $0x34] sm:$0xf]
    %v1587 = vld [vmem:[%s15 + $0x38] sm:$0xf]
    %v1588 = vld [vmem:[%s15 + $0x3c] sm:$0xf]
    %v1589 = vld [vmem:[%s47] sm:$0xf]
    %v1590 = vld [vmem:[%s47 + $0x4] sm:$0xf]
    %v1591 = vld [vmem:[%s47 + $0x8] sm:$0xf]
    %v1592 = vld [vmem:[%s47 + $0xc] sm:$0xf]
    %v1609 = vunpack.c.l.b16 %v1573
    %v1610 = vunpack.c.l.b16 %v1574
    %v1611 = vunpack.c.l.b16 %v1575
    %v1612 = vunpack.c.l.b16 %v1576
    %v1613 = vunpack.c.l.b16 %v1577
    %v1614 = vunpack.c.l.b16 %v1578
    %v1615 = vunpack.c.l.b16 %v1579
    %v1616 = vunpack.c.l.b16 %v1580
    %v1617 = vunpack.c.l.b16 %v1581
    %v1618 = vunpack.c.l.b16 %v1582
    %v1619 = vunpack.c.l.b16 %v1583
    %v1620 = vunpack.c.l.b16 %v1584
    %v1621 = vunpack.c.l.b16 %v1585
    %v1622 = vunpack.c.l.b16 %v1586
    %v1623 = vunpack.c.l.b16 %v1587
    %v1624 = vunpack.c.l.b16 %v1588
    %v1625 = vpack.c.b16 %v1610, %v1609
    %v1626 = vpack.c.b16 %v1612, %v1611
    %v1627 = vpack.c.b16 %v1614, %v1613
    %v1628 = vpack.c.b16 %v1616, %v1615
    %v1629 = vpack.c.b16 %v1618, %v1617
    %v1630 = vpack.c.b16 %v1620, %v1619
    %v1631 = vpack.c.b16 %v1622, %v1621
    %v1632 = vpack.c.b16 %v1624, %v1623
    %v1637 = vunpack.c.l.b16 %v1589
    %v1638 = vunpack.c.l.b16 %v1590
    %v1639 = vunpack.c.l.b16 %v1591
    %v1640 = vunpack.c.l.b16 %v1592
    %v1641 = vpack.c.b16 %v1638, %v1637
    %v1642 = vpack.c.b16 %v1640, %v1639
    %v1646 = vsel %vm233, %v1625, 0
    %v1649 = vsel %vm233, %v1626, 0
    %v1652 = vsel %vm233, %v1627, 0
    %v1655 = vsel %vm233, %v1628, 0
    %v1658 = vsel %vm233, %v1629, 0
    %v1661 = vsel %vm233, %v1630, 0
    %v1664 = vsel %vm233, %v1631, 0
    %v1667 = vsel %vm233, %v1632, 0
    %1669 = vmatprep.subr.bf16.mxu0 0
    %1670 = vmatpush1.bf16.msra.mxu0 %v1641
    %1671 = vmatprep.subr.bf16.mxu0 0
    %1672 = vmatpush1.bf16.msra.mxu0 %v1642
    %1673 = vmatprep.subr.bf16.mxu0 0
    %1674 = vmatpush1.bf16.msra.mxu0 0
    %1675 = vmatprep.subr.bf16.mxu0 0
    %1676 = vmatpush1.bf16.msra.mxu0 0
    %1677 = vmatprep.subr.bf16.mxu0 0
    %1678 = vmatpush1.bf16.msra.mxu0 0
    %1679 = vmatprep.subr.bf16.mxu0 0
    %1680 = vmatpush1.bf16.msra.mxu0 0
    %1681 = vmatprep.subr.bf16.mxu0 0
    %1682 = vmatpush1.bf16.msra.mxu0 0
    %1683 = vmatprep.subr.bf16.mxu0 0
    %1684 = vmatpush1.bf16.msra.mxu0 0
    %1685 = vmatprep.subr.bf16.mxu0 0
    %1686 = vmatpush1.bf16.msra.mxu0 0
    %1687 = vmatprep.subr.bf16.mxu0 0
    %1688 = vmatpush1.bf16.msra.mxu0 0
    %1689 = vmatprep.subr.bf16.mxu0 0
    %1690 = vmatpush1.bf16.msra.mxu0 0
    %1691 = vmatprep.subr.bf16.mxu0 0
    %1692 = vmatpush1.bf16.msra.mxu0 0
    %1693 = vmatprep.subr.bf16.mxu0 0
    %1694 = vmatpush1.bf16.msra.mxu0 0
    %1695 = vmatprep.subr.bf16.mxu0 0
    %1696 = vmatpush1.bf16.msra.mxu0 0
    %1697 = vmatprep.subr.bf16.mxu0 0
    %1698 = vmatpush1.bf16.msra.mxu0 0
    %1699 = vmatprep.subr.bf16.mxu0 0
    %1700 = vmatpush1.bf16.msra.mxu0 0
    %1701 = vmatprep.mubr.bf16.mxu0 0
    %1702 = vmatmul.mubr.bf16.gmra.mrb[0].mxu0 %v1646
    %v1703 = vpop.f32.mrb[0].mxu0
    %v1704 = vadd.f32 0.0, %v1703
    %v1705 = vpop.f32.mrb[0].mxu0
    %v1706 = vpop.f32.mrb[0].mxu0
    %v1707 = vadd.f32 0.0, %v1706
    %v1708 = vpop.f32.mrb[0].mxu0
    %1709 = vmatprep.mubr.bf16.mxu0 0
    %1710 = vmatmul.mubr.bf16.gmra.mrb[0].mxu0 %v1649
    %v1711 = vpop.f32.mrb[0].mxu0
    %v1712 = vadd.f32 0.0, %v1711
    %v1713 = vpop.f32.mrb[0].mxu0
    %v1714 = vpop.f32.mrb[0].mxu0
    %v1715 = vadd.f32 0.0, %v1714
    %v1716 = vpop.f32.mrb[0].mxu0
    %1717 = vmatprep.mubr.bf16.mxu0 0
    %1718 = vmatmul.mubr.bf16.gmra.mrb[0].mxu0 %v1652
    %v1719 = vpop.f32.mrb[0].mxu0
    %v1720 = vadd.f32 0.0, %v1719
    %v1721 = vpop.f32.mrb[0].mxu0
    %v1722 = vpop.f32.mrb[0].mxu0
    %v1723 = vadd.f32 0.0, %v1722
    %v1724 = vpop.f32.mrb[0].mxu0
    %1725 = vmatprep.mubr.bf16.mxu0 0
    %1726 = vmatmul.mubr.bf16.gmra.mrb[0].mxu0 %v1655
    %v1727 = vpop.f32.mrb[0].mxu0
    %v1728 = vadd.f32 0.0, %v1727
    %v1729 = vpop.f32.mrb[0].mxu0
    %v1730 = vpop.f32.mrb[0].mxu0
    %v1731 = vadd.f32 0.0, %v1730
    %v1732 = vpop.f32.mrb[0].mxu0
    %1733 = vmatprep.mubr.bf16.mxu0 0
    %1734 = vmatmul.mubr.bf16.gmra.mrb[0].mxu0 %v1658
    %v1735 = vpop.f32.mrb[0].mxu0
    %v1736 = vadd.f32 0.0, %v1735
    %v1737 = vpop.f32.mrb[0].mxu0
    %v1738 = vpop.f32.mrb[0].mxu0
    %v1739 = vadd.f32 0.0, %v1738
    %v1740 = vpop.f32.mrb[0].mxu0
    %1741 = vmatprep.mubr.bf16.mxu0 0
    %1742 = vmatmul.mubr.bf16.gmra.mrb[0].mxu0 %v1661
    %v1743 = vpop.f32.mrb[0].mxu0
    %v1744 = vadd.f32 0.0, %v1743
    %v1745 = vpop.f32.mrb[0].mxu0
    %v1746 = vpop.f32.mrb[0].mxu0
    %v1747 = vadd.f32 0.0, %v1746
    %v1748 = vpop.f32.mrb[0].mxu0
    %1749 = vmatprep.mubr.bf16.mxu0 0
    %1750 = vmatmul.mubr.bf16.gmra.mrb[0].mxu0 %v1664
    %v1751 = vpop.f32.mrb[0].mxu0
    %v1752 = vadd.f32 0.0, %v1751
    %v1753 = vpop.f32.mrb[0].mxu0
    %v1754 = vpop.f32.mrb[0].mxu0
    %v1755 = vadd.f32 0.0, %v1754
    %v1756 = vpop.f32.mrb[0].mxu0
    %1757 = vmatprep.mubr.bf16.mxu0 0
    %1758 = vmatmul.mubr.bf16.gmra.mrb[0].mxu0 %v1667
    %v1759 = vpop.f32.mrb[0].mxu0
    %v1760 = vadd.f32 0.0, %v1759
    %v1761 = vpop.f32.mrb[0].mxu0
    %v1762 = vpop.f32.mrb[0].mxu0
    %v1763 = vadd.f32 0.0, %v1762
    %v1764 = vpop.f32.mrb[0].mxu0
    %1765 = vdwg.mxu0
    %v1766 = vadd.f32 %v1557, %v1704
    %v1767 = vadd.f32 %v1558, %v1707
    %v1768 = vadd.f32 %v1559, %v1712
    %v1769 = vadd.f32 %v1560, %v1715
    %v1770 = vadd.f32 %v1561, %v1720
    %v1771 = vadd.f32 %v1562, %v1723
    %v1772 = vadd.f32 %v1563, %v1728
    %v1773 = vadd.f32 %v1564, %v1731
    %v1774 = vadd.f32 %v1565, %v1736
    %v1775 = vadd.f32 %v1566, %v1739
    %v1776 = vadd.f32 %v1567, %v1744
    %v1777 = vadd.f32 %v1568, %v1747
    %v1778 = vadd.f32 %v1569, %v1752
    %v1779 = vadd.f32 %v1570, %v1755
    %v1780 = vadd.f32 %v1571, %v1760
    %v1781 = vadd.f32 %v1572, %v1763
    %v1782 = vld [vmem:[%s17] sm:$0xf]
    %v1783 = vld [vmem:[%s17 + $0x4] sm:$0xf]
    %v1784 = vld [vmem:[%s17 + $0x8] sm:$0xf]
    %v1785 = vld [vmem:[%s17 + $0xc] sm:$0xf]
    %v1786 = vld [vmem:[%s17 + $0x10] sm:$0xf]
    %v1787 = vld [vmem:[%s17 + $0x14] sm:$0xf]
    %v1788 = vld [vmem:[%s17 + $0x18] sm:$0xf]
    %v1789 = vld [vmem:[%s17 + $0x1c] sm:$0xf]
    %v1790 = vld [vmem:[%s17 + $0x20] sm:$0xf]
    %v1791 = vld [vmem:[%s17 + $0x24] sm:$0xf]
    %v1792 = vld [vmem:[%s17 + $0x28] sm:$0xf]
    %v1793 = vld [vmem:[%s17 + $0x2c] sm:$0xf]
    %v1794 = vld [vmem:[%s17 + $0x30] sm:$0xf]
    %v1795 = vld [vmem:[%s17 + $0x34] sm:$0xf]
    %v1796 = vld [vmem:[%s17 + $0x38] sm:$0xf]
    %v1797 = vld [vmem:[%s17 + $0x3c] sm:$0xf]
    %v1798 = vld [vmem:[%s49] sm:$0xf]
    %v1799 = vld [vmem:[%s49 + $0x4] sm:$0xf]
    %v1800 = vld [vmem:[%s49 + $0x8] sm:$0xf]
    %v1801 = vld [vmem:[%s49 + $0xc] sm:$0xf]
    %v1818 = vunpack.c.l.b16 %v1782
    %v1819 = vunpack.c.l.b16 %v1783
    %v1820 = vunpack.c.l.b16 %v1784
    %v1821 = vunpack.c.l.b16 %v1785
    %v1822 = vunpack.c.l.b16 %v1786
    %v1823 = vunpack.c.l.b16 %v1787
    %v1824 = vunpack.c.l.b16 %v1788
    %v1825 = vunpack.c.l.b16 %v1789
    %v1826 = vunpack.c.l.b16 %v1790
    %v1827 = vunpack.c.l.b16 %v1791
    %v1828 = vunpack.c.l.b16 %v1792
    %v1829 = vunpack.c.l.b16 %v1793
    %v1830 = vunpack.c.l.b16 %v1794
    %v1831 = vunpack.c.l.b16 %v1795
    %v1832 = vunpack.c.l.b16 %v1796
    %v1833 = vunpack.c.l.b16 %v1797
    %v1834 = vpack.c.b16 %v1819, %v1818
    %v1835 = vpack.c.b16 %v1821, %v1820
    %v1836 = vpack.c.b16 %v1823, %v1822
    %v1837 = vpack.c.b16 %v1825, %v1824
    %v1838 = vpack.c.b16 %v1827, %v1826
    %v1839 = vpack.c.b16 %v1829, %v1828
    %v1840 = vpack.c.b16 %v1831, %v1830
    %v1841 = vpack.c.b16 %v1833, %v1832
    %v1846 = vunpack.c.l.b16 %v1798
    %v1847 = vunpack.c.l.b16 %v1799
    %v1848 = vunpack.c.l.b16 %v1800
    %v1849 = vunpack.c.l.b16 %v1801
    %v1850 = vpack.c.b16 %v1847, %v1846
    %v1851 = vpack.c.b16 %v1849, %v1848
    %v1855 = vsel %vm233, %v1834, 0
    %v1858 = vsel %vm233, %v1835, 0
    %v1861 = vsel %vm233, %v1836, 0
    %v1864 = vsel %vm233, %v1837, 0
    %v1867 = vsel %vm233, %v1838, 0
    %v1870 = vsel %vm233, %v1839, 0
    %v1873 = vsel %vm233, %v1840, 0
    %v1876 = vsel %vm233, %v1841, 0
    %1878 = vmatprep.subr.bf16.mxu0 0
    %1879 = vmatpush1.bf16.msra.mxu0 %v1850
    %1880 = vmatprep.subr.bf16.mxu0 0
    %1881 = vmatpush1.bf16.msra.mxu0 %v1851
    %1882 = vmatprep.subr.bf16.mxu0 0
    %1883 = vmatpush1.bf16.msra.mxu0 0
    %1884 = vmatprep.subr.bf16.mxu0 0
    %1885 = vmatpush1.bf16.msra.mxu0 0
    %1886 = vmatprep.subr.bf16.mxu0 0
    %1887 = vmatpush1.bf16.msra.mxu0 0
    %1888 = vmatprep.subr.bf16.mxu0 0
    %1889 = vmatpush1.bf16.msra.mxu0 0
    %1890 = vmatprep.subr.bf16.mxu0 0
    %1891 = vmatpush1.bf16.msra.mxu0 0
    %1892 = vmatprep.subr.bf16.mxu0 0
    %1893 = vmatpush1.bf16.msra.mxu0 0
    %1894 = vmatprep.subr.bf16.mxu0 0
    %1895 = vmatpush1.bf16.msra.mxu0 0
    %1896 = vmatprep.subr.bf16.mxu0 0
    %1897 = vmatpush1.bf16.msra.mxu0 0
    %1898 = vmatprep.subr.bf16.mxu0 0
    %1899 = vmatpush1.bf16.msra.mxu0 0
    %1900 = vmatprep.subr.bf16.mxu0 0
    %1901 = vmatpush1.bf16.msra.mxu0 0
    %1902 = vmatprep.subr.bf16.mxu0 0
    %1903 = vmatpush1.bf16.msra.mxu0 0
    %1904 = vmatprep.subr.bf16.mxu0 0
    %1905 = vmatpush1.bf16.msra.mxu0 0
    %1906 = vmatprep.subr.bf16.mxu0 0
    %1907 = vmatpush1.bf16.msra.mxu0 0
    %1908 = vmatprep.subr.bf16.mxu0 0
    %1909 = vmatpush1.bf16.msra.mxu0 0
    %1910 = vmatprep.mubr.bf16.mxu0 0
    %1911 = vmatmul.mubr.bf16.gmra.mrb[0].mxu0 %v1855
    %v1912 = vpop.f32.mrb[0].mxu0
    %v1913 = vadd.f32 0.0, %v1912
    %v1914 = vpop.f32.mrb[0].mxu0
    %v1915 = vpop.f32.mrb[0].mxu0
    %v1916 = vadd.f32 0.0, %v1915
    %v1917 = vpop.f32.mrb[0].mxu0
    %1918 = vmatprep.mubr.bf16.mxu0 0
    %1919 = vmatmul.mubr.bf16.gmra.mrb[0].mxu0 %v1858
    %v1920 = vpop.f32.mrb[0].mxu0
    %v1921 = vadd.f32 0.0, %v1920
    %v1922 = vpop.f32.mrb[0].mxu0
    %v1923 = vpop.f32.mrb[0].mxu0
    %v1924 = vadd.f32 0.0, %v1923
    %v1925 = vpop.f32.mrb[0].mxu0
    %1926 = vmatprep.mubr.bf16.mxu0 0
    %1927 = vmatmul.mubr.bf16.gmra.mrb[0].mxu0 %v1861
    %v1928 = vpop.f32.mrb[0].mxu0
    %v1929 = vadd.f32 0.0, %v1928
    %v1930 = vpop.f32.mrb[0].mxu0
    %v1931 = vpop.f32.mrb[0].mxu0
    %v1932 = vadd.f32 0.0, %v1931
    %v1933 = vpop.f32.mrb[0].mxu0
    %1934 = vmatprep.mubr.bf16.mxu0 0
    %1935 = vmatmul.mubr.bf16.gmra.mrb[0].mxu0 %v1864
    %v1936 = vpop.f32.mrb[0].mxu0
    %v1937 = vadd.f32 0.0, %v1936
    %v1938 = vpop.f32.mrb[0].mxu0
    %v1939 = vpop.f32.mrb[0].mxu0
    %v1940 = vadd.f32 0.0, %v1939
    %v1941 = vpop.f32.mrb[0].mxu0
    %1942 = vmatprep.mubr.bf16.mxu0 0
    %1943 = vmatmul.mubr.bf16.gmra.mrb[0].mxu0 %v1867
    %v1944 = vpop.f32.mrb[0].mxu0
    %v1945 = vadd.f32 0.0, %v1944
    %v1946 = vpop.f32.mrb[0].mxu0
    %v1947 = vpop.f32.mrb[0].mxu0
    %v1948 = vadd.f32 0.0, %v1947
    %v1949 = vpop.f32.mrb[0].mxu0
    %1950 = vmatprep.mubr.bf16.mxu0 0
    %1951 = vmatmul.mubr.bf16.gmra.mrb[0].mxu0 %v1870
    %v1952 = vpop.f32.mrb[0].mxu0
    %v1953 = vadd.f32 0.0, %v1952
    %v1954 = vpop.f32.mrb[0].mxu0
    %v1955 = vpop.f32.mrb[0].mxu0
    %v1956 = vadd.f32 0.0, %v1955
    %v1957 = vpop.f32.mrb[0].mxu0
    %1958 = vmatprep.mubr.bf16.mxu0 0
    %1959 = vmatmul.mubr.bf16.gmra.mrb[0].mxu0 %v1873
    %v1960 = vpop.f32.mrb[0].mxu0
    %v1961 = vadd.f32 0.0, %v1960
    %v1962 = vpop.f32.mrb[0].mxu0
    %v1963 = vpop.f32.mrb[0].mxu0
    %v1964 = vadd.f32 0.0, %v1963
    %v1965 = vpop.f32.mrb[0].mxu0
    %1966 = vmatprep.mubr.bf16.mxu0 0
    %1967 = vmatmul.mubr.bf16.gmra.mrb[0].mxu0 %v1876
    %v1968 = vpop.f32.mrb[0].mxu0
    %v1969 = vadd.f32 0.0, %v1968
    %v1970 = vpop.f32.mrb[0].mxu0
    %v1971 = vpop.f32.mrb[0].mxu0
    %v1972 = vadd.f32 0.0, %v1971
    %v1973 = vpop.f32.mrb[0].mxu0
    %1974 = vdwg.mxu0
    %v1975 = vadd.f32 %v1766, %v1913
    %v1976 = vadd.f32 %v1767, %v1916
    %v1977 = vadd.f32 %v1768, %v1921
    %v1978 = vadd.f32 %v1769, %v1924
    %v1979 = vadd.f32 %v1770, %v1929
    %v1980 = vadd.f32 %v1771, %v1932
    %v1981 = vadd.f32 %v1772, %v1937
    %v1982 = vadd.f32 %v1773, %v1940
    %v1983 = vadd.f32 %v1774, %v1945
    %v1984 = vadd.f32 %v1775, %v1948
    %v1985 = vadd.f32 %v1776, %v1953
    %v1986 = vadd.f32 %v1777, %v1956
    %v1987 = vadd.f32 %v1778, %v1961
    %v1988 = vadd.f32 %v1779, %v1964
    %v1989 = vadd.f32 %v1780, %v1969
    %v1990 = vadd.f32 %v1781, %v1972
    %v1991 = vld [vmem:[%s19] sm:$0xf]
    %v1992 = vld [vmem:[%s19 + $0x4] sm:$0xf]
    %v1993 = vld [vmem:[%s19 + $0x8] sm:$0xf]
    %v1994 = vld [vmem:[%s19 + $0xc] sm:$0xf]
    %v1995 = vld [vmem:[%s19 + $0x10] sm:$0xf]
    %v1996 = vld [vmem:[%s19 + $0x14] sm:$0xf]
    %v1997 = vld [vmem:[%s19 + $0x18] sm:$0xf]
    %v1998 = vld [vmem:[%s19 + $0x1c] sm:$0xf]
    %v1999 = vld [vmem:[%s19 + $0x20] sm:$0xf]
    %v2000 = vld [vmem:[%s19 + $0x24] sm:$0xf]
    %v2001 = vld [vmem:[%s19 + $0x28] sm:$0xf]
    %v2002 = vld [vmem:[%s19 + $0x2c] sm:$0xf]
    %v2003 = vld [vmem:[%s19 + $0x30] sm:$0xf]
    %v2004 = vld [vmem:[%s19 + $0x34] sm:$0xf]
    %v2005 = vld [vmem:[%s19 + $0x38] sm:$0xf]
    %v2006 = vld [vmem:[%s19 + $0x3c] sm:$0xf]
    %v2007 = vld [vmem:[%s51] sm:$0xf]
    %v2008 = vld [vmem:[%s51 + $0x4] sm:$0xf]
    %v2009 = vld [vmem:[%s51 + $0x8] sm:$0xf]
    %v2010 = vld [vmem:[%s51 + $0xc] sm:$0xf]
    %v2027 = vunpack.c.l.b16 %v1991
    %v2028 = vunpack.c.l.b16 %v1992
    %v2029 = vunpack.c.l.b16 %v1993
    %v2030 = vunpack.c.l.b16 %v1994
    %v2031 = vunpack.c.l.b16 %v1995
    %v2032 = vunpack.c.l.b16 %v1996
    %v2033 = vunpack.c.l.b16 %v1997
    %v2034 = vunpack.c.l.b16 %v1998
    %v2035 = vunpack.c.l.b16 %v1999
    %v2036 = vunpack.c.l.b16 %v2000
    %v2037 = vunpack.c.l.b16 %v2001
    %v2038 = vunpack.c.l.b16 %v2002
    %v2039 = vunpack.c.l.b16 %v2003
    %v2040 = vunpack.c.l.b16 %v2004
    %v2041 = vunpack.c.l.b16 %v2005
    %v2042 = vunpack.c.l.b16 %v2006
    %v2043 = vpack.c.b16 %v2028, %v2027
    %v2044 = vpack.c.b16 %v2030, %v2029
    %v2045 = vpack.c.b16 %v2032, %v2031
    %v2046 = vpack.c.b16 %v2034, %v2033
    %v2047 = vpack.c.b16 %v2036, %v2035
    %v2048 = vpack.c.b16 %v2038, %v2037
    %v2049 = vpack.c.b16 %v2040, %v2039
    %v2050 = vpack.c.b16 %v2042, %v2041
    %v2055 = vunpack.c.l.b16 %v2007
    %v2056 = vunpack.c.l.b16 %v2008
    %v2057 = vunpack.c.l.b16 %v2009
    %v2058 = vunpack.c.l.b16 %v2010
    %v2059 = vpack.c.b16 %v2056, %v2055
    %v2060 = vpack.c.b16 %v2058, %v2057
    %v2064 = vsel %vm233, %v2043, 0
    %v2067 = vsel %vm233, %v2044, 0
    %v2070 = vsel %vm233, %v2045, 0
    %v2073 = vsel %vm233, %v2046, 0
    %v2076 = vsel %vm233, %v2047, 0
    %v2079 = vsel %vm233, %v2048, 0
    %v2082 = vsel %vm233, %v2049, 0
    %v2085 = vsel %vm233, %v2050, 0
    %2087 = vmatprep.subr.bf16.mxu0 0
    %2088 = vmatpush1.bf16.msra.mxu0 %v2059
    %2089 = vmatprep.subr.bf16.mxu0 0
    %2090 = vmatpush1.bf16.msra.mxu0 %v2060
    %2091 = vmatprep.subr.bf16.mxu0 0
    %2092 = vmatpush1.bf16.msra.mxu0 0
    %2093 = vmatprep.subr.bf16.mxu0 0
    %2094 = vmatpush1.bf16.msra.mxu0 0
    %2095 = vmatprep.subr.bf16.mxu0 0
    %2096 = vmatpush1.bf16.msra.mxu0 0
    %2097 = vmatprep.subr.bf16.mxu0 0
    %2098 = vmatpush1.bf16.msra.mxu0 0
    %2099 = vmatprep.subr.bf16.mxu0 0
    %2100 = vmatpush1.bf16.msra.mxu0 0
    %2101 = vmatprep.subr.bf16.mxu0 0
    %2102 = vmatpush1.bf16.msra.mxu0 0
    %2103 = vmatprep.subr.bf16.mxu0 0
    %2104 = vmatpush1.bf16.msra.mxu0 0
    %2105 = vmatprep.subr.bf16.mxu0 0
    %2106 = vmatpush1.bf16.msra.mxu0 0
    %2107 = vmatprep.subr.bf16.mxu0 0
    %2108 = vmatpush1.bf16.msra.mxu0 0
    %2109 = vmatprep.subr.bf16.mxu0 0
    %2110 = vmatpush1.bf16.msra.mxu0 0
    %2111 = vmatprep.subr.bf16.mxu0 0
    %2112 = vmatpush1.bf16.msra.mxu0 0
    %2113 = vmatprep.subr.bf16.mxu0 0
    %2114 = vmatpush1.bf16.msra.mxu0 0
    %2115 = vmatprep.subr.bf16.mxu0 0
    %2116 = vmatpush1.bf16.msra.mxu0 0
    %2117 = vmatprep.subr.bf16.mxu0 0
    %2118 = vmatpush1.bf16.msra.mxu0 0
    %2119 = vmatprep.mubr.bf16.mxu0 0
    %2120 = vmatmul.mubr.bf16.gmra.mrb[0].mxu0 %v2064
    %v2121 = vpop.f32.mrb[0].mxu0
    %v2122 = vadd.f32 0.0, %v2121
    %v2123 = vpop.f32.mrb[0].mxu0
    %v2124 = vpop.f32.mrb[0].mxu0
    %v2125 = vadd.f32 0.0, %v2124
    %v2126 = vpop.f32.mrb[0].mxu0
    %2127 = vmatprep.mubr.bf16.mxu0 0
    %2128 = vmatmul.mubr.bf16.gmra.mrb[0].mxu0 %v2067
    %v2129 = vpop.f32.mrb[0].mxu0
    %v2130 = vadd.f32 0.0, %v2129
    %v2131 = vpop.f32.mrb[0].mxu0
    %v2132 = vpop.f32.mrb[0].mxu0
    %v2133 = vadd.f32 0.0, %v2132
    %v2134 = vpop.f32.mrb[0].mxu0
    %2135 = vmatprep.mubr.bf16.mxu0 0
    %2136 = vmatmul.mubr.bf16.gmra.mrb[0].mxu0 %v2070
    %v2137 = vpop.f32.mrb[0].mxu0
    %v2138 = vadd.f32 0.0, %v2137
    %v2139 = vpop.f32.mrb[0].mxu0
    %v2140 = vpop.f32.mrb[0].mxu0
    %v2141 = vadd.f32 0.0, %v2140
    %v2142 = vpop.f32.mrb[0].mxu0
    %2143 = vmatprep.mubr.bf16.mxu0 0
    %2144 = vmatmul.mubr.bf16.gmra.mrb[0].mxu0 %v2073
    %v2145 = vpop.f32.mrb[0].mxu0
    %v2146 = vadd.f32 0.0, %v2145
    %v2147 = vpop.f32.mrb[0].mxu0
    %v2148 = vpop.f32.mrb[0].mxu0
    %v2149 = vadd.f32 0.0, %v2148
    %v2150 = vpop.f32.mrb[0].mxu0
    %2151 = vmatprep.mubr.bf16.mxu0 0
    %2152 = vmatmul.mubr.bf16.gmra.mrb[0].mxu0 %v2076
    %v2153 = vpop.f32.mrb[0].mxu0
    %v2154 = vadd.f32 0.0, %v2153
    %v2155 = vpop.f32.mrb[0].mxu0
    %v2156 = vpop.f32.mrb[0].mxu0
    %v2157 = vadd.f32 0.0, %v2156
    %v2158 = vpop.f32.mrb[0].mxu0
    %2159 = vmatprep.mubr.bf16.mxu0 0
    %2160 = vmatmul.mubr.bf16.gmra.mrb[0].mxu0 %v2079
    %v2161 = vpop.f32.mrb[0].mxu0
    %v2162 = vadd.f32 0.0, %v2161
    %v2163 = vpop.f32.mrb[0].mxu0
    %v2164 = vpop.f32.mrb[0].mxu0
    %v2165 = vadd.f32 0.0, %v2164
    %v2166 = vpop.f32.mrb[0].mxu0
    %2167 = vmatprep.mubr.bf16.mxu0 0
    %2168 = vmatmul.mubr.bf16.gmra.mrb[0].mxu0 %v2082
    %v2169 = vpop.f32.mrb[0].mxu0
    %v2170 = vadd.f32 0.0, %v2169
    %v2171 = vpop.f32.mrb[0].mxu0
    %v2172 = vpop.f32.mrb[0].mxu0
    %v2173 = vadd.f32 0.0, %v2172
    %v2174 = vpop.f32.mrb[0].mxu0
    %2175 = vmatprep.mubr.bf16.mxu0 0
    %2176 = vmatmul.mubr.bf16.gmra.mrb[0].mxu0 %v2085
    %v2177 = vpop.f32.mrb[0].mxu0
    %v2178 = vadd.f32 0.0, %v2177
    %v2179 = vpop.f32.mrb[0].mxu0
    %v2180 = vpop.f32.mrb[0].mxu0
    %v2181 = vadd.f32 0.0, %v2180
    %v2182 = vpop.f32.mrb[0].mxu0
    %2183 = vdwg.mxu0
    %v2184 = vadd.f32 %v1975, %v2122
    %v2185 = vadd.f32 %v1976, %v2125
    %v2186 = vadd.f32 %v1977, %v2130
    %v2187 = vadd.f32 %v1978, %v2133
    %v2188 = vadd.f32 %v1979, %v2138
    %v2189 = vadd.f32 %v1980, %v2141
    %v2190 = vadd.f32 %v1981, %v2146
    %v2191 = vadd.f32 %v1982, %v2149
    %v2192 = vadd.f32 %v1983, %v2154
    %v2193 = vadd.f32 %v1984, %v2157
    %v2194 = vadd.f32 %v1985, %v2162
    %v2195 = vadd.f32 %v1986, %v2165
    %v2196 = vadd.f32 %v1987, %v2170
    %v2197 = vadd.f32 %v1988, %v2173
    %v2198 = vadd.f32 %v1989, %v2178
    %v2199 = vadd.f32 %v1990, %v2181
    %v2200 = vld [vmem:[%s21] sm:$0xf]
    %v2201 = vld [vmem:[%s21 + $0x4] sm:$0xf]
    %v2202 = vld [vmem:[%s21 + $0x8] sm:$0xf]
    %v2203 = vld [vmem:[%s21 + $0xc] sm:$0xf]
    %v2204 = vld [vmem:[%s21 + $0x10] sm:$0xf]
    %v2205 = vld [vmem:[%s21 + $0x14] sm:$0xf]
    %v2206 = vld [vmem:[%s21 + $0x18] sm:$0xf]
    %v2207 = vld [vmem:[%s21 + $0x1c] sm:$0xf]
    %v2208 = vld [vmem:[%s21 + $0x20] sm:$0xf]
    %v2209 = vld [vmem:[%s21 + $0x24] sm:$0xf]
    %v2210 = vld [vmem:[%s21 + $0x28] sm:$0xf]
    %v2211 = vld [vmem:[%s21 + $0x2c] sm:$0xf]
    %v2212 = vld [vmem:[%s21 + $0x30] sm:$0xf]
    %v2213 = vld [vmem:[%s21 + $0x34] sm:$0xf]
    %v2214 = vld [vmem:[%s21 + $0x38] sm:$0xf]
    %v2215 = vld [vmem:[%s21 + $0x3c] sm:$0xf]
    %v2216 = vld [vmem:[%s53] sm:$0xf]
    %v2217 = vld [vmem:[%s53 + $0x4] sm:$0xf]
    %v2218 = vld [vmem:[%s53 + $0x8] sm:$0xf]
    %v2219 = vld [vmem:[%s53 + $0xc] sm:$0xf]
    %v2236 = vunpack.c.l.b16 %v2200
    %v2237 = vunpack.c.l.b16 %v2201
    %v2238 = vunpack.c.l.b16 %v2202
    %v2239 = vunpack.c.l.b16 %v2203
    %v2240 = vunpack.c.l.b16 %v2204
    %v2241 = vunpack.c.l.b16 %v2205
    %v2242 = vunpack.c.l.b16 %v2206
    %v2243 = vunpack.c.l.b16 %v2207
    %v2244 = vunpack.c.l.b16 %v2208
    %v2245 = vunpack.c.l.b16 %v2209
    %v2246 = vunpack.c.l.b16 %v2210
    %v2247 = vunpack.c.l.b16 %v2211
    %v2248 = vunpack.c.l.b16 %v2212
    %v2249 = vunpack.c.l.b16 %v2213
    %v2250 = vunpack.c.l.b16 %v2214
    %v2251 = vunpack.c.l.b16 %v2215
    %v2252 = vpack.c.b16 %v2237, %v2236
    %v2253 = vpack.c.b16 %v2239, %v2238
    %v2254 = vpack.c.b16 %v2241, %v2240
    %v2255 = vpack.c.b16 %v2243, %v2242
    %v2256 = vpack.c.b16 %v2245, %v2244
    %v2257 = vpack.c.b16 %v2247, %v2246
    %v2258 = vpack.c.b16 %v2249, %v2248
    %v2259 = vpack.c.b16 %v2251, %v2250
    %v2264 = vunpack.c.l.b16 %v2216
    %v2265 = vunpack.c.l.b16 %v2217
    %v2266 = vunpack.c.l.b16 %v2218
    %v2267 = vunpack.c.l.b16 %v2219
    %v2268 = vpack.c.b16 %v2265, %v2264
    %v2269 = vpack.c.b16 %v2267, %v2266
    %v2273 = vsel %vm233, %v2252, 0
    %v2276 = vsel %vm233, %v2253, 0
    %v2279 = vsel %vm233, %v2254, 0
    %v2282 = vsel %vm233, %v2255, 0
    %v2285 = vsel %vm233, %v2256, 0
    %v2288 = vsel %vm233, %v2257, 0
    %v2291 = vsel %vm233, %v2258, 0
    %v2294 = vsel %vm233, %v2259, 0
    %2296 = vmatprep.subr.bf16.mxu0 0
    %2297 = vmatpush1.bf16.msra.mxu0 %v2268
    %2298 = vmatprep.subr.bf16.mxu0 0
    %2299 = vmatpush1.bf16.msra.mxu0 %v2269
    %2300 = vmatprep.subr.bf16.mxu0 0
    %2301 = vmatpush1.bf16.msra.mxu0 0
    %2302 = vmatprep.subr.bf16.mxu0 0
    %2303 = vmatpush1.bf16.msra.mxu0 0
    %2304 = vmatprep.subr.bf16.mxu0 0
    %2305 = vmatpush1.bf16.msra.mxu0 0
    %2306 = vmatprep.subr.bf16.mxu0 0
    %2307 = vmatpush1.bf16.msra.mxu0 0
    %2308 = vmatprep.subr.bf16.mxu0 0
    %2309 = vmatpush1.bf16.msra.mxu0 0
    %2310 = vmatprep.subr.bf16.mxu0 0
    %2311 = vmatpush1.bf16.msra.mxu0 0
    %2312 = vmatprep.subr.bf16.mxu0 0
    %2313 = vmatpush1.bf16.msra.mxu0 0
    %2314 = vmatprep.subr.bf16.mxu0 0
    %2315 = vmatpush1.bf16.msra.mxu0 0
    %2316 = vmatprep.subr.bf16.mxu0 0
    %2317 = vmatpush1.bf16.msra.mxu0 0
    %2318 = vmatprep.subr.bf16.mxu0 0
    %2319 = vmatpush1.bf16.msra.mxu0 0
    %2320 = vmatprep.subr.bf16.mxu0 0
    %2321 = vmatpush1.bf16.msra.mxu0 0
    %2322 = vmatprep.subr.bf16.mxu0 0
    %2323 = vmatpush1.bf16.msra.mxu0 0
    %2324 = vmatprep.subr.bf16.mxu0 0
    %2325 = vmatpush1.bf16.msra.mxu0 0
    %2326 = vmatprep.subr.bf16.mxu0 0
    %2327 = vmatpush1.bf16.msra.mxu0 0
    %2328 = vmatprep.mubr.bf16.mxu0 0
    %2329 = vmatmul.mubr.bf16.gmra.mrb[0].mxu0 %v2273
    %v2330 = vpop.f32.mrb[0].mxu0
    %v2331 = vadd.f32 0.0, %v2330
    %v2332 = vpop.f32.mrb[0].mxu0
    %v2333 = vpop.f32.mrb[0].mxu0
    %v2334 = vadd.f32 0.0, %v2333
    %v2335 = vpop.f32.mrb[0].mxu0
    %2336 = vmatprep.mubr.bf16.mxu0 0
    %2337 = vmatmul.mubr.bf16.gmra.mrb[0].mxu0 %v2276
    %v2338 = vpop.f32.mrb[0].mxu0
    %v2339 = vadd.f32 0.0, %v2338
    %v2340 = vpop.f32.mrb[0].mxu0
    %v2341 = vpop.f32.mrb[0].mxu0
    %v2342 = vadd.f32 0.0, %v2341
    %v2343 = vpop.f32.mrb[0].mxu0
    %2344 = vmatprep.mubr.bf16.mxu0 0
    %2345 = vmatmul.mubr.bf16.gmra.mrb[0].mxu0 %v2279
    %v2346 = vpop.f32.mrb[0].mxu0
    %v2347 = vadd.f32 0.0, %v2346
    %v2348 = vpop.f32.mrb[0].mxu0
    %v2349 = vpop.f32.mrb[0].mxu0
    %v2350 = vadd.f32 0.0, %v2349
    %v2351 = vpop.f32.mrb[0].mxu0
    %2352 = vmatprep.mubr.bf16.mxu0 0
    %2353 = vmatmul.mubr.bf16.gmra.mrb[0].mxu0 %v2282
    %v2354 = vpop.f32.mrb[0].mxu0
    %v2355 = vadd.f32 0.0, %v2354
    %v2356 = vpop.f32.mrb[0].mxu0
    %v2357 = vpop.f32.mrb[0].mxu0
    %v2358 = vadd.f32 0.0, %v2357
    %v2359 = vpop.f32.mrb[0].mxu0
    %2360 = vmatprep.mubr.bf16.mxu0 0
    %2361 = vmatmul.mubr.bf16.gmra.mrb[0].mxu0 %v2285
    %v2362 = vpop.f32.mrb[0].mxu0
    %v2363 = vadd.f32 0.0, %v2362
    %v2364 = vpop.f32.mrb[0].mxu0
    %v2365 = vpop.f32.mrb[0].mxu0
    %v2366 = vadd.f32 0.0, %v2365
    %v2367 = vpop.f32.mrb[0].mxu0
    %2368 = vmatprep.mubr.bf16.mxu0 0
    %2369 = vmatmul.mubr.bf16.gmra.mrb[0].mxu0 %v2288
    %v2370 = vpop.f32.mrb[0].mxu0
    %v2371 = vadd.f32 0.0, %v2370
    %v2372 = vpop.f32.mrb[0].mxu0
    %v2373 = vpop.f32.mrb[0].mxu0
    %v2374 = vadd.f32 0.0, %v2373
    %v2375 = vpop.f32.mrb[0].mxu0
    %2376 = vmatprep.mubr.bf16.mxu0 0
    %2377 = vmatmul.mubr.bf16.gmra.mrb[0].mxu0 %v2291
    %v2378 = vpop.f32.mrb[0].mxu0
    %v2379 = vadd.f32 0.0, %v2378
    %v2380 = vpop.f32.mrb[0].mxu0
    %v2381 = vpop.f32.mrb[0].mxu0
    %v2382 = vadd.f32 0.0, %v2381
    %v2383 = vpop.f32.mrb[0].mxu0
    %2384 = vmatprep.mubr.bf16.mxu0 0
    %2385 = vmatmul.mubr.bf16.gmra.mrb[0].mxu0 %v2294
    %v2386 = vpop.f32.mrb[0].mxu0
    %v2387 = vadd.f32 0.0, %v2386
    %v2388 = vpop.f32.mrb[0].mxu0
    %v2389 = vpop.f32.mrb[0].mxu0
    %v2390 = vadd.f32 0.0, %v2389
    %v2391 = vpop.f32.mrb[0].mxu0
    %2392 = vdwg.mxu0
    %v2393 = vadd.f32 %v2184, %v2331
    %v2394 = vadd.f32 %v2185, %v2334
    %v2395 = vadd.f32 %v2186, %v2339
    %v2396 = vadd.f32 %v2187, %v2342
    %v2397 = vadd.f32 %v2188, %v2347
    %v2398 = vadd.f32 %v2189, %v2350
    %v2399 = vadd.f32 %v2190, %v2355
    %v2400 = vadd.f32 %v2191, %v2358
    %v2401 = vadd.f32 %v2192, %v2363
    %v2402 = vadd.f32 %v2193, %v2366
    %v2403 = vadd.f32 %v2194, %v2371
    %v2404 = vadd.f32 %v2195, %v2374
    %v2405 = vadd.f32 %v2196, %v2379
    %v2406 = vadd.f32 %v2197, %v2382
    %v2407 = vadd.f32 %v2198, %v2387
    %v2408 = vadd.f32 %v2199, %v2390
    %v2409 = vld [vmem:[%s23] sm:$0xf]
    %v2410 = vld [vmem:[%s23 + $0x4] sm:$0xf]
    %v2411 = vld [vmem:[%s23 + $0x8] sm:$0xf]
    %v2412 = vld [vmem:[%s23 + $0xc] sm:$0xf]
    %v2413 = vld [vmem:[%s23 + $0x10] sm:$0xf]
    %v2414 = vld [vmem:[%s23 + $0x14] sm:$0xf]
    %v2415 = vld [vmem:[%s23 + $0x18] sm:$0xf]
    %v2416 = vld [vmem:[%s23 + $0x1c] sm:$0xf]
    %v2417 = vld [vmem:[%s23 + $0x20] sm:$0xf]
    %v2418 = vld [vmem:[%s23 + $0x24] sm:$0xf]
    %v2419 = vld [vmem:[%s23 + $0x28] sm:$0xf]
    %v2420 = vld [vmem:[%s23 + $0x2c] sm:$0xf]
    %v2421 = vld [vmem:[%s23 + $0x30] sm:$0xf]
    %v2422 = vld [vmem:[%s23 + $0x34] sm:$0xf]
    %v2423 = vld [vmem:[%s23 + $0x38] sm:$0xf]
    %v2424 = vld [vmem:[%s23 + $0x3c] sm:$0xf]
    %v2425 = vld [vmem:[%s55] sm:$0xf]
    %v2426 = vld [vmem:[%s55 + $0x4] sm:$0xf]
    %v2427 = vld [vmem:[%s55 + $0x8] sm:$0xf]
    %v2428 = vld [vmem:[%s55 + $0xc] sm:$0xf]
    %v2445 = vunpack.c.l.b16 %v2409
    %v2446 = vunpack.c.l.b16 %v2410
    %v2447 = vunpack.c.l.b16 %v2411
    %v2448 = vunpack.c.l.b16 %v2412
    %v2449 = vunpack.c.l.b16 %v2413
    %v2450 = vunpack.c.l.b16 %v2414
    %v2451 = vunpack.c.l.b16 %v2415
    %v2452 = vunpack.c.l.b16 %v2416
    %v2453 = vunpack.c.l.b16 %v2417
    %v2454 = vunpack.c.l.b16 %v2418
    %v2455 = vunpack.c.l.b16 %v2419
    %v2456 = vunpack.c.l.b16 %v2420
    %v2457 = vunpack.c.l.b16 %v2421
    %v2458 = vunpack.c.l.b16 %v2422
    %v2459 = vunpack.c.l.b16 %v2423
    %v2460 = vunpack.c.l.b16 %v2424
    %v2461 = vpack.c.b16 %v2446, %v2445
    %v2462 = vpack.c.b16 %v2448, %v2447
    %v2463 = vpack.c.b16 %v2450, %v2449
    %v2464 = vpack.c.b16 %v2452, %v2451
    %v2465 = vpack.c.b16 %v2454, %v2453
    %v2466 = vpack.c.b16 %v2456, %v2455
    %v2467 = vpack.c.b16 %v2458, %v2457
    %v2468 = vpack.c.b16 %v2460, %v2459
    %v2473 = vunpack.c.l.b16 %v2425
    %v2474 = vunpack.c.l.b16 %v2426
    %v2475 = vunpack.c.l.b16 %v2427
    %v2476 = vunpack.c.l.b16 %v2428
    %v2477 = vpack.c.b16 %v2474, %v2473
    %v2478 = vpack.c.b16 %v2476, %v2475
    %v2482 = vsel %vm233, %v2461, 0
    %v2485 = vsel %vm233, %v2462, 0
    %v2488 = vsel %vm233, %v2463, 0
    %v2491 = vsel %vm233, %v2464, 0
    %v2494 = vsel %vm233, %v2465, 0
    %v2497 = vsel %vm233, %v2466, 0
    %v2500 = vsel %vm233, %v2467, 0
    %v2503 = vsel %vm233, %v2468, 0
    %2505 = vmatprep.subr.bf16.mxu0 0
    %2506 = vmatpush1.bf16.msra.mxu0 %v2477
    %2507 = vmatprep.subr.bf16.mxu0 0
    %2508 = vmatpush1.bf16.msra.mxu0 %v2478
    %2509 = vmatprep.subr.bf16.mxu0 0
    %2510 = vmatpush1.bf16.msra.mxu0 0
    %2511 = vmatprep.subr.bf16.mxu0 0
    %2512 = vmatpush1.bf16.msra.mxu0 0
    %2513 = vmatprep.subr.bf16.mxu0 0
    %2514 = vmatpush1.bf16.msra.mxu0 0
    %2515 = vmatprep.subr.bf16.mxu0 0
    %2516 = vmatpush1.bf16.msra.mxu0 0
    %2517 = vmatprep.subr.bf16.mxu0 0
    %2518 = vmatpush1.bf16.msra.mxu0 0
    %2519 = vmatprep.subr.bf16.mxu0 0
    %2520 = vmatpush1.bf16.msra.mxu0 0
    %2521 = vmatprep.subr.bf16.mxu0 0
    %2522 = vmatpush1.bf16.msra.mxu0 0
    %2523 = vmatprep.subr.bf16.mxu0 0
    %2524 = vmatpush1.bf16.msra.mxu0 0
    %2525 = vmatprep.subr.bf16.mxu0 0
    %2526 = vmatpush1.bf16.msra.mxu0 0
    %2527 = vmatprep.subr.bf16.mxu0 0
    %2528 = vmatpush1.bf16.msra.mxu0 0
    %2529 = vmatprep.subr.bf16.mxu0 0
    %2530 = vmatpush1.bf16.msra.mxu0 0
    %2531 = vmatprep.subr.bf16.mxu0 0
    %2532 = vmatpush1.bf16.msra.mxu0 0
    %2533 = vmatprep.subr.bf16.mxu0 0
    %2534 = vmatpush1.bf16.msra.mxu0 0
    %2535 = vmatprep.subr.bf16.mxu0 0
    %2536 = vmatpush1.bf16.msra.mxu0 0
    %2537 = vmatprep.mubr.bf16.mxu0 0
    %2538 = vmatmul.mubr.bf16.gmra.mrb[0].mxu0 %v2482
    %v2539 = vpop.f32.mrb[0].mxu0
    %v2540 = vadd.f32 0.0, %v2539
    %v2541 = vpop.f32.mrb[0].mxu0
    %v2542 = vpop.f32.mrb[0].mxu0
    %v2543 = vadd.f32 0.0, %v2542
    %v2544 = vpop.f32.mrb[0].mxu0
    %2545 = vmatprep.mubr.bf16.mxu0 0
    %2546 = vmatmul.mubr.bf16.gmra.mrb[0].mxu0 %v2485
    %v2547 = vpop.f32.mrb[0].mxu0
    %v2548 = vadd.f32 0.0, %v2547
    %v2549 = vpop.f32.mrb[0].mxu0
    %v2550 = vpop.f32.mrb[0].mxu0
    %v2551 = vadd.f32 0.0, %v2550
    %v2552 = vpop.f32.mrb[0].mxu0
    %2553 = vmatprep.mubr.bf16.mxu0 0
    %2554 = vmatmul.mubr.bf16.gmra.mrb[0].mxu0 %v2488
    %v2555 = vpop.f32.mrb[0].mxu0
    %v2556 = vadd.f32 0.0, %v2555
    %v2557 = vpop.f32.mrb[0].mxu0
    %v2558 = vpop.f32.mrb[0].mxu0
    %v2559 = vadd.f32 0.0, %v2558
    %v2560 = vpop.f32.mrb[0].mxu0
    %2561 = vmatprep.mubr.bf16.mxu0 0
    %2562 = vmatmul.mubr.bf16.gmra.mrb[0].mxu0 %v2491
    %v2563 = vpop.f32.mrb[0].mxu0
    %v2564 = vadd.f32 0.0, %v2563
    %v2565 = vpop.f32.mrb[0].mxu0
    %v2566 = vpop.f32.mrb[0].mxu0
    %v2567 = vadd.f32 0.0, %v2566
    %v2568 = vpop.f32.mrb[0].mxu0
    %2569 = vmatprep.mubr.bf16.mxu0 0
    %2570 = vmatmul.mubr.bf16.gmra.mrb[0].mxu0 %v2494
    %v2571 = vpop.f32.mrb[0].mxu0
    %v2572 = vadd.f32 0.0, %v2571
    %v2573 = vpop.f32.mrb[0].mxu0
    %v2574 = vpop.f32.mrb[0].mxu0
    %v2575 = vadd.f32 0.0, %v2574
    %v2576 = vpop.f32.mrb[0].mxu0
    %2577 = vmatprep.mubr.bf16.mxu0 0
    %2578 = vmatmul.mubr.bf16.gmra.mrb[0].mxu0 %v2497
    %v2579 = vpop.f32.mrb[0].mxu0
    %v2580 = vadd.f32 0.0, %v2579
    %v2581 = vpop.f32.mrb[0].mxu0
    %v2582 = vpop.f32.mrb[0].mxu0
    %v2583 = vadd.f32 0.0, %v2582
    %v2584 = vpop.f32.mrb[0].mxu0
    %2585 = vmatprep.mubr.bf16.mxu0 0
    %2586 = vmatmul.mubr.bf16.gmra.mrb[0].mxu0 %v2500
    %v2587 = vpop.f32.mrb[0].mxu0
    %v2588 = vadd.f32 0.0, %v2587
    %v2589 = vpop.f32.mrb[0].mxu0
    %v2590 = vpop.f32.mrb[0].mxu0
    %v2591 = vadd.f32 0.0, %v2590
    %v2592 = vpop.f32.mrb[0].mxu0
    %2593 = vmatprep.mubr.bf16.mxu0 0
    %2594 = vmatmul.mubr.bf16.gmra.mrb[0].mxu0 %v2503
    %v2595 = vpop.f32.mrb[0].mxu0
    %v2596 = vadd.f32 0.0, %v2595
    %v2597 = vpop.f32.mrb[0].mxu0
    %v2598 = vpop.f32.mrb[0].mxu0
    %v2599 = vadd.f32 0.0, %v2598
    %v2600 = vpop.f32.mrb[0].mxu0
    %2601 = vdwg.mxu0
    %v2602 = vadd.f32 %v2393, %v2540
    %v2603 = vadd.f32 %v2394, %v2543
    %v2604 = vadd.f32 %v2395, %v2548
    %v2605 = vadd.f32 %v2396, %v2551
    %v2606 = vadd.f32 %v2397, %v2556
    %v2607 = vadd.f32 %v2398, %v2559
    %v2608 = vadd.f32 %v2399, %v2564
    %v2609 = vadd.f32 %v2400, %v2567
    %v2610 = vadd.f32 %v2401, %v2572
    %v2611 = vadd.f32 %v2402, %v2575
    %v2612 = vadd.f32 %v2403, %v2580
    %v2613 = vadd.f32 %v2404, %v2583
    %v2614 = vadd.f32 %v2405, %v2588
    %v2615 = vadd.f32 %v2406, %v2591
    %v2616 = vadd.f32 %v2407, %v2596
    %v2617 = vadd.f32 %v2408, %v2599
    %v2618 = vld [vmem:[%s25] sm:$0xf]
    %v2619 = vld [vmem:[%s25 + $0x4] sm:$0xf]
    %v2620 = vld [vmem:[%s25 + $0x8] sm:$0xf]
    %v2621 = vld [vmem:[%s25 + $0xc] sm:$0xf]
    %v2622 = vld [vmem:[%s25 + $0x10] sm:$0xf]
    %v2623 = vld [vmem:[%s25 + $0x14] sm:$0xf]
    %v2624 = vld [vmem:[%s25 + $0x18] sm:$0xf]
    %v2625 = vld [vmem:[%s25 + $0x1c] sm:$0xf]
    %v2626 = vld [vmem:[%s25 + $0x20] sm:$0xf]
    %v2627 = vld [vmem:[%s25 + $0x24] sm:$0xf]
    %v2628 = vld [vmem:[%s25 + $0x28] sm:$0xf]
    %v2629 = vld [vmem:[%s25 + $0x2c] sm:$0xf]
    %v2630 = vld [vmem:[%s25 + $0x30] sm:$0xf]
    %v2631 = vld [vmem:[%s25 + $0x34] sm:$0xf]
    %v2632 = vld [vmem:[%s25 + $0x38] sm:$0xf]
    %v2633 = vld [vmem:[%s25 + $0x3c] sm:$0xf]
    %v2634 = vld [vmem:[%s57] sm:$0xf]
    %v2635 = vld [vmem:[%s57 + $0x4] sm:$0xf]
    %v2636 = vld [vmem:[%s57 + $0x8] sm:$0xf]
    %v2637 = vld [vmem:[%s57 + $0xc] sm:$0xf]
    %v2654 = vunpack.c.l.b16 %v2618
    %v2655 = vunpack.c.l.b16 %v2619
    %v2656 = vunpack.c.l.b16 %v2620
    %v2657 = vunpack.c.l.b16 %v2621
    %v2658 = vunpack.c.l.b16 %v2622
    %v2659 = vunpack.c.l.b16 %v2623
    %v2660 = vunpack.c.l.b16 %v2624
    %v2661 = vunpack.c.l.b16 %v2625
    %v2662 = vunpack.c.l.b16 %v2626
    %v2663 = vunpack.c.l.b16 %v2627
    %v2664 = vunpack.c.l.b16 %v2628
    %v2665 = vunpack.c.l.b16 %v2629
    %v2666 = vunpack.c.l.b16 %v2630
    %v2667 = vunpack.c.l.b16 %v2631
    %v2668 = vunpack.c.l.b16 %v2632
    %v2669 = vunpack.c.l.b16 %v2633
    %v2670 = vpack.c.b16 %v2655, %v2654
    %v2671 = vpack.c.b16 %v2657, %v2656
    %v2672 = vpack.c.b16 %v2659, %v2658
    %v2673 = vpack.c.b16 %v2661, %v2660
    %v2674 = vpack.c.b16 %v2663, %v2662
    %v2675 = vpack.c.b16 %v2665, %v2664
    %v2676 = vpack.c.b16 %v2667, %v2666
    %v2677 = vpack.c.b16 %v2669, %v2668
    %v2682 = vunpack.c.l.b16 %v2634
    %v2683 = vunpack.c.l.b16 %v2635
    %v2684 = vunpack.c.l.b16 %v2636
    %v2685 = vunpack.c.l.b16 %v2637
    %v2686 = vpack.c.b16 %v2683, %v2682
    %v2687 = vpack.c.b16 %v2685, %v2684
    %v2691 = vsel %vm233, %v2670, 0
    %v2694 = vsel %vm233, %v2671, 0
    %v2697 = vsel %vm233, %v2672, 0
    %v2700 = vsel %vm233, %v2673, 0
    %v2703 = vsel %vm233, %v2674, 0
    %v2706 = vsel %vm233, %v2675, 0
    %v2709 = vsel %vm233, %v2676, 0
    %v2712 = vsel %vm233, %v2677, 0
    %2714 = vmatprep.subr.bf16.mxu0 0
    %2715 = vmatpush1.bf16.msra.mxu0 %v2686
    %2716 = vmatprep.subr.bf16.mxu0 0
    %2717 = vmatpush1.bf16.msra.mxu0 %v2687
    %2718 = vmatprep.subr.bf16.mxu0 0
    %2719 = vmatpush1.bf16.msra.mxu0 0
    %2720 = vmatprep.subr.bf16.mxu0 0
    %2721 = vmatpush1.bf16.msra.mxu0 0
    %2722 = vmatprep.subr.bf16.mxu0 0
    %2723 = vmatpush1.bf16.msra.mxu0 0
    %2724 = vmatprep.subr.bf16.mxu0 0
    %2725 = vmatpush1.bf16.msra.mxu0 0
    %2726 = vmatprep.subr.bf16.mxu0 0
    %2727 = vmatpush1.bf16.msra.mxu0 0
    %2728 = vmatprep.subr.bf16.mxu0 0
    %2729 = vmatpush1.bf16.msra.mxu0 0
    %2730 = vmatprep.subr.bf16.mxu0 0
    %2731 = vmatpush1.bf16.msra.mxu0 0
    %2732 = vmatprep.subr.bf16.mxu0 0
    %2733 = vmatpush1.bf16.msra.mxu0 0
    %2734 = vmatprep.subr.bf16.mxu0 0
    %2735 = vmatpush1.bf16.msra.mxu0 0
    %2736 = vmatprep.subr.bf16.mxu0 0
    %2737 = vmatpush1.bf16.msra.mxu0 0
    %2738 = vmatprep.subr.bf16.mxu0 0
    %2739 = vmatpush1.bf16.msra.mxu0 0
    %2740 = vmatprep.subr.bf16.mxu0 0
    %2741 = vmatpush1.bf16.msra.mxu0 0
    %2742 = vmatprep.subr.bf16.mxu0 0
    %2743 = vmatpush1.bf16.msra.mxu0 0
    %2744 = vmatprep.subr.bf16.mxu0 0
    %2745 = vmatpush1.bf16.msra.mxu0 0
    %2746 = vmatprep.mubr.bf16.mxu0 0
    %2747 = vmatmul.mubr.bf16.gmra.mrb[0].mxu0 %v2691
    %v2748 = vpop.f32.mrb[0].mxu0
    %v2749 = vadd.f32 0.0, %v2748
    %v2750 = vpop.f32.mrb[0].mxu0
    %v2751 = vpop.f32.mrb[0].mxu0
    %v2752 = vadd.f32 0.0, %v2751
    %v2753 = vpop.f32.mrb[0].mxu0
    %2754 = vmatprep.mubr.bf16.mxu0 0
    %2755 = vmatmul.mubr.bf16.gmra.mrb[0].mxu0 %v2694
    %v2756 = vpop.f32.mrb[0].mxu0
    %v2757 = vadd.f32 0.0, %v2756
    %v2758 = vpop.f32.mrb[0].mxu0
    %v2759 = vpop.f32.mrb[0].mxu0
    %v2760 = vadd.f32 0.0, %v2759
    %v2761 = vpop.f32.mrb[0].mxu0
    %2762 = vmatprep.mubr.bf16.mxu0 0
    %2763 = vmatmul.mubr.bf16.gmra.mrb[0].mxu0 %v2697
    %v2764 = vpop.f32.mrb[0].mxu0
    %v2765 = vadd.f32 0.0, %v2764
    %v2766 = vpop.f32.mrb[0].mxu0
    %v2767 = vpop.f32.mrb[0].mxu0
    %v2768 = vadd.f32 0.0, %v2767
    %v2769 = vpop.f32.mrb[0].mxu0
    %2770 = vmatprep.mubr.bf16.mxu0 0
    %2771 = vmatmul.mubr.bf16.gmra.mrb[0].mxu0 %v2700
    %v2772 = vpop.f32.mrb[0].mxu0
    %v2773 = vadd.f32 0.0, %v2772
    %v2774 = vpop.f32.mrb[0].mxu0
    %v2775 = vpop.f32.mrb[0].mxu0
    %v2776 = vadd.f32 0.0, %v2775
    %v2777 = vpop.f32.mrb[0].mxu0
    %2778 = vmatprep.mubr.bf16.mxu0 0
    %2779 = vmatmul.mubr.bf16.gmra.mrb[0].mxu0 %v2703
    %v2780 = vpop.f32.mrb[0].mxu0
    %v2781 = vadd.f32 0.0, %v2780
    %v2782 = vpop.f32.mrb[0].mxu0
    %v2783 = vpop.f32.mrb[0].mxu0
    %v2784 = vadd.f32 0.0, %v2783
    %v2785 = vpop.f32.mrb[0].mxu0
    %2786 = vmatprep.mubr.bf16.mxu0 0
    %2787 = vmatmul.mubr.bf16.gmra.mrb[0].mxu0 %v2706
    %v2788 = vpop.f32.mrb[0].mxu0
    %v2789 = vadd.f32 0.0, %v2788
    %v2790 = vpop.f32.mrb[0].mxu0
    %v2791 = vpop.f32.mrb[0].mxu0
    %v2792 = vadd.f32 0.0, %v2791
    %v2793 = vpop.f32.mrb[0].mxu0
    %2794 = vmatprep.mubr.bf16.mxu0 0
    %2795 = vmatmul.mubr.bf16.gmra.mrb[0].mxu0 %v2709
    %v2796 = vpop.f32.mrb[0].mxu0
    %v2797 = vadd.f32 0.0, %v2796
    %v2798 = vpop.f32.mrb[0].mxu0
    %v2799 = vpop.f32.mrb[0].mxu0
    %v2800 = vadd.f32 0.0, %v2799
    %v2801 = vpop.f32.mrb[0].mxu0
    %2802 = vmatprep.mubr.bf16.mxu0 0
    %2803 = vmatmul.mubr.bf16.gmra.mrb[0].mxu0 %v2712
    %v2804 = vpop.f32.mrb[0].mxu0
    %v2805 = vadd.f32 0.0, %v2804
    %v2806 = vpop.f32.mrb[0].mxu0
    %v2807 = vpop.f32.mrb[0].mxu0
    %v2808 = vadd.f32 0.0, %v2807
    %v2809 = vpop.f32.mrb[0].mxu0
    %2810 = vdwg.mxu0
    %v2811 = vadd.f32 %v2602, %v2749
    %v2812 = vadd.f32 %v2603, %v2752
    %v2813 = vadd.f32 %v2604, %v2757
    %v2814 = vadd.f32 %v2605, %v2760
    %v2815 = vadd.f32 %v2606, %v2765
    %v2816 = vadd.f32 %v2607, %v2768
    %v2817 = vadd.f32 %v2608, %v2773
    %v2818 = vadd.f32 %v2609, %v2776
    %v2819 = vadd.f32 %v2610, %v2781
    %v2820 = vadd.f32 %v2611, %v2784
    %v2821 = vadd.f32 %v2612, %v2789
    %v2822 = vadd.f32 %v2613, %v2792
    %v2823 = vadd.f32 %v2614, %v2797
    %v2824 = vadd.f32 %v2615, %v2800
    %v2825 = vadd.f32 %v2616, %v2805
    %v2826 = vadd.f32 %v2617, %v2808
    %v2827 = vld [vmem:[%s27] sm:$0xf]
    %v2828 = vld [vmem:[%s27 + $0x4] sm:$0xf]
    %v2829 = vld [vmem:[%s27 + $0x8] sm:$0xf]
    %v2830 = vld [vmem:[%s27 + $0xc] sm:$0xf]
    %v2831 = vld [vmem:[%s27 + $0x10] sm:$0xf]
    %v2832 = vld [vmem:[%s27 + $0x14] sm:$0xf]
    %v2833 = vld [vmem:[%s27 + $0x18] sm:$0xf]
    %v2834 = vld [vmem:[%s27 + $0x1c] sm:$0xf]
    %v2835 = vld [vmem:[%s27 + $0x20] sm:$0xf]
    %v2836 = vld [vmem:[%s27 + $0x24] sm:$0xf]
    %v2837 = vld [vmem:[%s27 + $0x28] sm:$0xf]
    %v2838 = vld [vmem:[%s27 + $0x2c] sm:$0xf]
    %v2839 = vld [vmem:[%s27 + $0x30] sm:$0xf]
    %v2840 = vld [vmem:[%s27 + $0x34] sm:$0xf]
    %v2841 = vld [vmem:[%s27 + $0x38] sm:$0xf]
    %v2842 = vld [vmem:[%s27 + $0x3c] sm:$0xf]
    %v2843 = vld [vmem:[%s59] sm:$0xf]
    %v2844 = vld [vmem:[%s59 + $0x4] sm:$0xf]
    %v2845 = vld [vmem:[%s59 + $0x8] sm:$0xf]
    %v2846 = vld [vmem:[%s59 + $0xc] sm:$0xf]
    %v2863 = vunpack.c.l.b16 %v2827
    %v2864 = vunpack.c.l.b16 %v2828
    %v2865 = vunpack.c.l.b16 %v2829
    %v2866 = vunpack.c.l.b16 %v2830
    %v2867 = vunpack.c.l.b16 %v2831
    %v2868 = vunpack.c.l.b16 %v2832
    %v2869 = vunpack.c.l.b16 %v2833
    %v2870 = vunpack.c.l.b16 %v2834
    %v2871 = vunpack.c.l.b16 %v2835
    %v2872 = vunpack.c.l.b16 %v2836
    %v2873 = vunpack.c.l.b16 %v2837
    %v2874 = vunpack.c.l.b16 %v2838
    %v2875 = vunpack.c.l.b16 %v2839
    %v2876 = vunpack.c.l.b16 %v2840
    %v2877 = vunpack.c.l.b16 %v2841
    %v2878 = vunpack.c.l.b16 %v2842
    %v2879 = vpack.c.b16 %v2864, %v2863
    %v2880 = vpack.c.b16 %v2866, %v2865
    %v2881 = vpack.c.b16 %v2868, %v2867
    %v2882 = vpack.c.b16 %v2870, %v2869
    %v2883 = vpack.c.b16 %v2872, %v2871
    %v2884 = vpack.c.b16 %v2874, %v2873
    %v2885 = vpack.c.b16 %v2876, %v2875
    %v2886 = vpack.c.b16 %v2878, %v2877
    %v2891 = vunpack.c.l.b16 %v2843
    %v2892 = vunpack.c.l.b16 %v2844
    %v2893 = vunpack.c.l.b16 %v2845
    %v2894 = vunpack.c.l.b16 %v2846
    %v2895 = vpack.c.b16 %v2892, %v2891
    %v2896 = vpack.c.b16 %v2894, %v2893
    %v2900 = vsel %vm233, %v2879, 0
    %v2903 = vsel %vm233, %v2880, 0
    %v2906 = vsel %vm233, %v2881, 0
    %v2909 = vsel %vm233, %v2882, 0
    %v2912 = vsel %vm233, %v2883, 0
    %v2915 = vsel %vm233, %v2884, 0
    %v2918 = vsel %vm233, %v2885, 0
    %v2921 = vsel %vm233, %v2886, 0
    %2923 = vmatprep.subr.bf16.mxu0 0
    %2924 = vmatpush1.bf16.msra.mxu0 %v2895
    %2925 = vmatprep.subr.bf16.mxu0 0
    %2926 = vmatpush1.bf16.msra.mxu0 %v2896
    %2927 = vmatprep.subr.bf16.mxu0 0
    %2928 = vmatpush1.bf16.msra.mxu0 0
    %2929 = vmatprep.subr.bf16.mxu0 0
    %2930 = vmatpush1.bf16.msra.mxu0 0
    %2931 = vmatprep.subr.bf16.mxu0 0
    %2932 = vmatpush1.bf16.msra.mxu0 0
    %2933 = vmatprep.subr.bf16.mxu0 0
    %2934 = vmatpush1.bf16.msra.mxu0 0
    %2935 = vmatprep.subr.bf16.mxu0 0
    %2936 = vmatpush1.bf16.msra.mxu0 0
    %2937 = vmatprep.subr.bf16.mxu0 0
    %2938 = vmatpush1.bf16.msra.mxu0 0
    %2939 = vmatprep.subr.bf16.mxu0 0
    %2940 = vmatpush1.bf16.msra.mxu0 0
    %2941 = vmatprep.subr.bf16.mxu0 0
    %2942 = vmatpush1.bf16.msra.mxu0 0
    %2943 = vmatprep.subr.bf16.mxu0 0
    %2944 = vmatpush1.bf16.msra.mxu0 0
    %2945 = vmatprep.subr.bf16.mxu0 0
    %2946 = vmatpush1.bf16.msra.mxu0 0
    %2947 = vmatprep.subr.bf16.mxu0 0
    %2948 = vmatpush1.bf16.msra.mxu0 0
    %2949 = vmatprep.subr.bf16.mxu0 0
    %2950 = vmatpush1.bf16.msra.mxu0 0
    %2951 = vmatprep.subr.bf16.mxu0 0
    %2952 = vmatpush1.bf16.msra.mxu0 0
    %2953 = vmatprep.subr.bf16.mxu0 0
    %2954 = vmatpush1.bf16.msra.mxu0 0
    %2955 = vmatprep.mubr.bf16.mxu0 0
    %2956 = vmatmul.mubr.bf16.gmra.mrb[0].mxu0 %v2900
    %v2957 = vpop.f32.mrb[0].mxu0
    %v2958 = vadd.f32 0.0, %v2957
    %v2959 = vpop.f32.mrb[0].mxu0
    %v2960 = vpop.f32.mrb[0].mxu0
    %v2961 = vadd.f32 0.0, %v2960
    %v2962 = vpop.f32.mrb[0].mxu0
    %2963 = vmatprep.mubr.bf16.mxu0 0
    %2964 = vmatmul.mubr.bf16.gmra.mrb[0].mxu0 %v2903
    %v2965 = vpop.f32.mrb[0].mxu0
    %v2966 = vadd.f32 0.0, %v2965
    %v2967 = vpop.f32.mrb[0].mxu0
    %v2968 = vpop.f32.mrb[0].mxu0
    %v2969 = vadd.f32 0.0, %v2968
    %v2970 = vpop.f32.mrb[0].mxu0
    %2971 = vmatprep.mubr.bf16.mxu0 0
    %2972 = vmatmul.mubr.bf16.gmra.mrb[0].mxu0 %v2906
    %v2973 = vpop.f32.mrb[0].mxu0
    %v2974 = vadd.f32 0.0, %v2973
    %v2975 = vpop.f32.mrb[0].mxu0
    %v2976 = vpop.f32.mrb[0].mxu0
    %v2977 = vadd.f32 0.0, %v2976
    %v2978 = vpop.f32.mrb[0].mxu0
    %2979 = vmatprep.mubr.bf16.mxu0 0
    %2980 = vmatmul.mubr.bf16.gmra.mrb[0].mxu0 %v2909
    %v2981 = vpop.f32.mrb[0].mxu0
    %v2982 = vadd.f32 0.0, %v2981
    %v2983 = vpop.f32.mrb[0].mxu0
    %v2984 = vpop.f32.mrb[0].mxu0
    %v2985 = vadd.f32 0.0, %v2984
    %v2986 = vpop.f32.mrb[0].mxu0
    %2987 = vmatprep.mubr.bf16.mxu0 0
    %2988 = vmatmul.mubr.bf16.gmra.mrb[0].mxu0 %v2912
    %v2989 = vpop.f32.mrb[0].mxu0
    %v2990 = vadd.f32 0.0, %v2989
    %v2991 = vpop.f32.mrb[0].mxu0
    %v2992 = vpop.f32.mrb[0].mxu0
    %v2993 = vadd.f32 0.0, %v2992
    %v2994 = vpop.f32.mrb[0].mxu0
    %2995 = vmatprep.mubr.bf16.mxu0 0
    %2996 = vmatmul.mubr.bf16.gmra.mrb[0].mxu0 %v2915
    %v2997 = vpop.f32.mrb[0].mxu0
    %v2998 = vadd.f32 0.0, %v2997
    %v2999 = vpop.f32.mrb[0].mxu0
    %v3000 = vpop.f32.mrb[0].mxu0
    %v3001 = vadd.f32 0.0, %v3000
    %v3002 = vpop.f32.mrb[0].mxu0
    %3003 = vmatprep.mubr.bf16.mxu0 0
    %3004 = vmatmul.mubr.bf16.gmra.mrb[0].mxu0 %v2918
    %v3005 = vpop.f32.mrb[0].mxu0
    %v3006 = vadd.f32 0.0, %v3005
    %v3007 = vpop.f32.mrb[0].mxu0
    %v3008 = vpop.f32.mrb[0].mxu0
    %v3009 = vadd.f32 0.0, %v3008
    %v3010 = vpop.f32.mrb[0].mxu0
    %3011 = vmatprep.mubr.bf16.mxu0 0
    %3012 = vmatmul.mubr.bf16.gmra.mrb[0].mxu0 %v2921
    %v3013 = vpop.f32.mrb[0].mxu0
    %v3014 = vadd.f32 0.0, %v3013
    %v3015 = vpop.f32.mrb[0].mxu0
    %v3016 = vpop.f32.mrb[0].mxu0
    %v3017 = vadd.f32 0.0, %v3016
    %v3018 = vpop.f32.mrb[0].mxu0
    %3019 = vdwg.mxu0
    %v3020 = vadd.f32 %v2811, %v2958
    %v3021 = vadd.f32 %v2812, %v2961
    %v3022 = vadd.f32 %v2813, %v2966
    %v3023 = vadd.f32 %v2814, %v2969
    %v3024 = vadd.f32 %v2815, %v2974
    %v3025 = vadd.f32 %v2816, %v2977
    %v3026 = vadd.f32 %v2817, %v2982
    %v3027 = vadd.f32 %v2818, %v2985
    %v3028 = vadd.f32 %v2819, %v2990
    %v3029 = vadd.f32 %v2820, %v2993
    %v3030 = vadd.f32 %v2821, %v2998
    %v3031 = vadd.f32 %v2822, %v3001
    %v3032 = vadd.f32 %v2823, %v3006
    %v3033 = vadd.f32 %v2824, %v3009
    %v3034 = vadd.f32 %v2825, %v3014
    %v3035 = vadd.f32 %v2826, %v3017
    %v3036 = vld [vmem:[%s29] sm:$0xf]
    %v3037 = vld [vmem:[%s29 + $0x4] sm:$0xf]
    %v3038 = vld [vmem:[%s29 + $0x8] sm:$0xf]
    %v3039 = vld [vmem:[%s29 + $0xc] sm:$0xf]
    %v3040 = vld [vmem:[%s29 + $0x10] sm:$0xf]
    %v3041 = vld [vmem:[%s29 + $0x14] sm:$0xf]
    %v3042 = vld [vmem:[%s29 + $0x18] sm:$0xf]
    %v3043 = vld [vmem:[%s29 + $0x1c] sm:$0xf]
    %v3044 = vld [vmem:[%s29 + $0x20] sm:$0xf]
    %v3045 = vld [vmem:[%s29 + $0x24] sm:$0xf]
    %v3046 = vld [vmem:[%s29 + $0x28] sm:$0xf]
    %v3047 = vld [vmem:[%s29 + $0x2c] sm:$0xf]
    %v3048 = vld [vmem:[%s29 + $0x30] sm:$0xf]
    %v3049 = vld [vmem:[%s29 + $0x34] sm:$0xf]
    %v3050 = vld [vmem:[%s29 + $0x38] sm:$0xf]
    %v3051 = vld [vmem:[%s29 + $0x3c] sm:$0xf]
    %v3052 = vld [vmem:[%s61] sm:$0xf]
    %v3053 = vld [vmem:[%s61 + $0x4] sm:$0xf]
    %v3054 = vld [vmem:[%s61 + $0x8] sm:$0xf]
    %v3055 = vld [vmem:[%s61 + $0xc] sm:$0xf]
    %v3072 = vunpack.c.l.b16 %v3036
    %v3073 = vunpack.c.l.b16 %v3037
    %v3074 = vunpack.c.l.b16 %v3038
    %v3075 = vunpack.c.l.b16 %v3039
    %v3076 = vunpack.c.l.b16 %v3040
    %v3077 = vunpack.c.l.b16 %v3041
    %v3078 = vunpack.c.l.b16 %v3042
    %v3079 = vunpack.c.l.b16 %v3043
    %v3080 = vunpack.c.l.b16 %v3044
    %v3081 = vunpack.c.l.b16 %v3045
    %v3082 = vunpack.c.l.b16 %v3046
    %v3083 = vunpack.c.l.b16 %v3047
    %v3084 = vunpack.c.l.b16 %v3048
    %v3085 = vunpack.c.l.b16 %v3049
    %v3086 = vunpack.c.l.b16 %v3050
    %v3087 = vunpack.c.l.b16 %v3051
    %v3088 = vpack.c.b16 %v3073, %v3072
    %v3089 = vpack.c.b16 %v3075, %v3074
    %v3090 = vpack.c.b16 %v3077, %v3076
    %v3091 = vpack.c.b16 %v3079, %v3078
    %v3092 = vpack.c.b16 %v3081, %v3080
    %v3093 = vpack.c.b16 %v3083, %v3082
    %v3094 = vpack.c.b16 %v3085, %v3084
    %v3095 = vpack.c.b16 %v3087, %v3086
    %v3100 = vunpack.c.l.b16 %v3052
    %v3101 = vunpack.c.l.b16 %v3053
    %v3102 = vunpack.c.l.b16 %v3054
    %v3103 = vunpack.c.l.b16 %v3055
    %v3104 = vpack.c.b16 %v3101, %v3100
    %v3105 = vpack.c.b16 %v3103, %v3102
    %v3109 = vsel %vm233, %v3088, 0
    %v3112 = vsel %vm233, %v3089, 0
    %v3115 = vsel %vm233, %v3090, 0
    %v3118 = vsel %vm233, %v3091, 0
    %v3121 = vsel %vm233, %v3092, 0
    %v3124 = vsel %vm233, %v3093, 0
    %v3127 = vsel %vm233, %v3094, 0
    %v3130 = vsel %vm233, %v3095, 0
    %3132 = vmatprep.subr.bf16.mxu0 0
    %3133 = vmatpush1.bf16.msra.mxu0 %v3104
    %3134 = vmatprep.subr.bf16.mxu0 0
    %3135 = vmatpush1.bf16.msra.mxu0 %v3105
    %3136 = vmatprep.subr.bf16.mxu0 0
    %3137 = vmatpush1.bf16.msra.mxu0 0
    %3138 = vmatprep.subr.bf16.mxu0 0
    %3139 = vmatpush1.bf16.msra.mxu0 0
    %3140 = vmatprep.subr.bf16.mxu0 0
    %3141 = vmatpush1.bf16.msra.mxu0 0
    %3142 = vmatprep.subr.bf16.mxu0 0
    %3143 = vmatpush1.bf16.msra.mxu0 0
    %3144 = vmatprep.subr.bf16.mxu0 0
    %3145 = vmatpush1.bf16.msra.mxu0 0
    %3146 = vmatprep.subr.bf16.mxu0 0
    %3147 = vmatpush1.bf16.msra.mxu0 0
    %3148 = vmatprep.subr.bf16.mxu0 0
    %3149 = vmatpush1.bf16.msra.mxu0 0
    %3150 = vmatprep.subr.bf16.mxu0 0
    %3151 = vmatpush1.bf16.msra.mxu0 0
    %3152 = vmatprep.subr.bf16.mxu0 0
    %3153 = vmatpush1.bf16.msra.mxu0 0
    %3154 = vmatprep.subr.bf16.mxu0 0
    %3155 = vmatpush1.bf16.msra.mxu0 0
    %3156 = vmatprep.subr.bf16.mxu0 0
    %3157 = vmatpush1.bf16.msra.mxu0 0
    %3158 = vmatprep.subr.bf16.mxu0 0
    %3159 = vmatpush1.bf16.msra.mxu0 0
    %3160 = vmatprep.subr.bf16.mxu0 0
    %3161 = vmatpush1.bf16.msra.mxu0 0
    %3162 = vmatprep.subr.bf16.mxu0 0
    %3163 = vmatpush1.bf16.msra.mxu0 0
    %3164 = vmatprep.mubr.bf16.mxu0 0
    %3165 = vmatmul.mubr.bf16.gmra.mrb[0].mxu0 %v3109
    %v3166 = vpop.f32.mrb[0].mxu0
    %v3167 = vadd.f32 0.0, %v3166
    %v3168 = vpop.f32.mrb[0].mxu0
    %v3169 = vpop.f32.mrb[0].mxu0
    %v3170 = vadd.f32 0.0, %v3169
    %v3171 = vpop.f32.mrb[0].mxu0
    %3172 = vmatprep.mubr.bf16.mxu0 0
    %3173 = vmatmul.mubr.bf16.gmra.mrb[0].mxu0 %v3112
    %v3174 = vpop.f32.mrb[0].mxu0
    %v3175 = vadd.f32 0.0, %v3174
    %v3176 = vpop.f32.mrb[0].mxu0
    %v3177 = vpop.f32.mrb[0].mxu0
    %v3178 = vadd.f32 0.0, %v3177
    %v3179 = vpop.f32.mrb[0].mxu0
    %3180 = vmatprep.mubr.bf16.mxu0 0
    %3181 = vmatmul.mubr.bf16.gmra.mrb[0].mxu0 %v3115
    %v3182 = vpop.f32.mrb[0].mxu0
    %v3183 = vadd.f32 0.0, %v3182
    %v3184 = vpop.f32.mrb[0].mxu0
    %v3185 = vpop.f32.mrb[0].mxu0
    %v3186 = vadd.f32 0.0, %v3185
    %v3187 = vpop.f32.mrb[0].mxu0
    %3188 = vmatprep.mubr.bf16.mxu0 0
    %3189 = vmatmul.mubr.bf16.gmra.mrb[0].mxu0 %v3118
    %v3190 = vpop.f32.mrb[0].mxu0
    %v3191 = vadd.f32 0.0, %v3190
    %v3192 = vpop.f32.mrb[0].mxu0
    %v3193 = vpop.f32.mrb[0].mxu0
    %v3194 = vadd.f32 0.0, %v3193
    %v3195 = vpop.f32.mrb[0].mxu0
    %3196 = vmatprep.mubr.bf16.mxu0 0
    %3197 = vmatmul.mubr.bf16.gmra.mrb[0].mxu0 %v3121
    %v3198 = vpop.f32.mrb[0].mxu0
    %v3199 = vadd.f32 0.0, %v3198
    %v3200 = vpop.f32.mrb[0].mxu0
    %v3201 = vpop.f32.mrb[0].mxu0
    %v3202 = vadd.f32 0.0, %v3201
    %v3203 = vpop.f32.mrb[0].mxu0
    %3204 = vmatprep.mubr.bf16.mxu0 0
    %3205 = vmatmul.mubr.bf16.gmra.mrb[0].mxu0 %v3124
    %v3206 = vpop.f32.mrb[0].mxu0
    %v3207 = vadd.f32 0.0, %v3206
    %v3208 = vpop.f32.mrb[0].mxu0
    %v3209 = vpop.f32.mrb[0].mxu0
    %v3210 = vadd.f32 0.0, %v3209
    %v3211 = vpop.f32.mrb[0].mxu0
    %3212 = vmatprep.mubr.bf16.mxu0 0
    %3213 = vmatmul.mubr.bf16.gmra.mrb[0].mxu0 %v3127
    %v3214 = vpop.f32.mrb[0].mxu0
    %v3215 = vadd.f32 0.0, %v3214
    %v3216 = vpop.f32.mrb[0].mxu0
    %v3217 = vpop.f32.mrb[0].mxu0
    %v3218 = vadd.f32 0.0, %v3217
    %v3219 = vpop.f32.mrb[0].mxu0
    %3220 = vmatprep.mubr.bf16.mxu0 0
    %3221 = vmatmul.mubr.bf16.gmra.mrb[0].mxu0 %v3130
    %v3222 = vpop.f32.mrb[0].mxu0
    %v3223 = vadd.f32 0.0, %v3222
    %v3224 = vpop.f32.mrb[0].mxu0
    %v3225 = vpop.f32.mrb[0].mxu0
    %v3226 = vadd.f32 0.0, %v3225
    %v3227 = vpop.f32.mrb[0].mxu0
    %3228 = vdwg.mxu0
    %v3229 = vadd.f32 %v3020, %v3167
    %v3230 = vadd.f32 %v3021, %v3170
    %v3231 = vadd.f32 %v3022, %v3175
    %v3232 = vadd.f32 %v3023, %v3178
    %v3233 = vadd.f32 %v3024, %v3183
    %v3234 = vadd.f32 %v3025, %v3186
    %v3235 = vadd.f32 %v3026, %v3191
    %v3236 = vadd.f32 %v3027, %v3194
    %v3237 = vadd.f32 %v3028, %v3199
    %v3238 = vadd.f32 %v3029, %v3202
    %v3239 = vadd.f32 %v3030, %v3207
    %v3240 = vadd.f32 %v3031, %v3210
    %v3241 = vadd.f32 %v3032, %v3215
    %v3242 = vadd.f32 %v3033, %v3218
    %v3243 = vadd.f32 %v3034, %v3223
    %v3244 = vadd.f32 %v3035, %v3226
    %v3245 = vld [vmem:[%s31] sm:$0xf]
    %v3246 = vld [vmem:[%s31 + $0x4] sm:$0xf]
    %v3247 = vld [vmem:[%s31 + $0x8] sm:$0xf]
    %v3248 = vld [vmem:[%s31 + $0xc] sm:$0xf]
    %v3249 = vld [vmem:[%s31 + $0x10] sm:$0xf]
    %v3250 = vld [vmem:[%s31 + $0x14] sm:$0xf]
    %v3251 = vld [vmem:[%s31 + $0x18] sm:$0xf]
    %v3252 = vld [vmem:[%s31 + $0x1c] sm:$0xf]
    %v3253 = vld [vmem:[%s31 + $0x20] sm:$0xf]
    %v3254 = vld [vmem:[%s31 + $0x24] sm:$0xf]
    %v3255 = vld [vmem:[%s31 + $0x28] sm:$0xf]
    %v3256 = vld [vmem:[%s31 + $0x2c] sm:$0xf]
    %v3257 = vld [vmem:[%s31 + $0x30] sm:$0xf]
    %v3258 = vld [vmem:[%s31 + $0x34] sm:$0xf]
    %v3259 = vld [vmem:[%s31 + $0x38] sm:$0xf]
    %v3260 = vld [vmem:[%s31 + $0x3c] sm:$0xf]
    %v3261 = vld [vmem:[%s63] sm:$0xf]
    %v3262 = vld [vmem:[%s63 + $0x4] sm:$0xf]
    %v3263 = vld [vmem:[%s63 + $0x8] sm:$0xf]
    %v3264 = vld [vmem:[%s63 + $0xc] sm:$0xf]
    %v3281 = vunpack.c.l.b16 %v3245
    %v3282 = vunpack.c.l.b16 %v3246
    %v3283 = vunpack.c.l.b16 %v3247
    %v3284 = vunpack.c.l.b16 %v3248
    %v3285 = vunpack.c.l.b16 %v3249
    %v3286 = vunpack.c.l.b16 %v3250
    %v3287 = vunpack.c.l.b16 %v3251
    %v3288 = vunpack.c.l.b16 %v3252
    %v3289 = vunpack.c.l.b16 %v3253
    %v3290 = vunpack.c.l.b16 %v3254
    %v3291 = vunpack.c.l.b16 %v3255
    %v3292 = vunpack.c.l.b16 %v3256
    %v3293 = vunpack.c.l.b16 %v3257
    %v3294 = vunpack.c.l.b16 %v3258
    %v3295 = vunpack.c.l.b16 %v3259
    %v3296 = vunpack.c.l.b16 %v3260
    %v3297 = vpack.c.b16 %v3282, %v3281
    %v3298 = vpack.c.b16 %v3284, %v3283
    %v3299 = vpack.c.b16 %v3286, %v3285
    %v3300 = vpack.c.b16 %v3288, %v3287
    %v3301 = vpack.c.b16 %v3290, %v3289
    %v3302 = vpack.c.b16 %v3292, %v3291
    %v3303 = vpack.c.b16 %v3294, %v3293
    %v3304 = vpack.c.b16 %v3296, %v3295
    %v3309 = vunpack.c.l.b16 %v3261
    %v3310 = vunpack.c.l.b16 %v3262
    %v3311 = vunpack.c.l.b16 %v3263
    %v3312 = vunpack.c.l.b16 %v3264
    %v3313 = vpack.c.b16 %v3310, %v3309
    %v3314 = vpack.c.b16 %v3312, %v3311
    %v3318 = vsel %vm233, %v3297, 0
    %v3321 = vsel %vm233, %v3298, 0
    %v3324 = vsel %vm233, %v3299, 0
    %v3327 = vsel %vm233, %v3300, 0
    %v3330 = vsel %vm233, %v3301, 0
    %v3333 = vsel %vm233, %v3302, 0
    %v3336 = vsel %vm233, %v3303, 0
    %v3339 = vsel %vm233, %v3304, 0
    %3341 = vmatprep.subr.bf16.mxu0 0
    %3342 = vmatpush1.bf16.msra.mxu0 %v3313
    %3343 = vmatprep.subr.bf16.mxu0 0
    %3344 = vmatpush1.bf16.msra.mxu0 %v3314
    %3345 = vmatprep.subr.bf16.mxu0 0
    %3346 = vmatpush1.bf16.msra.mxu0 0
    %3347 = vmatprep.subr.bf16.mxu0 0
    %3348 = vmatpush1.bf16.msra.mxu0 0
    %3349 = vmatprep.subr.bf16.mxu0 0
    %3350 = vmatpush1.bf16.msra.mxu0 0
    %3351 = vmatprep.subr.bf16.mxu0 0
    %3352 = vmatpush1.bf16.msra.mxu0 0
    %3353 = vmatprep.subr.bf16.mxu0 0
    %3354 = vmatpush1.bf16.msra.mxu0 0
    %3355 = vmatprep.subr.bf16.mxu0 0
    %3356 = vmatpush1.bf16.msra.mxu0 0
    %3357 = vmatprep.subr.bf16.mxu0 0
    %3358 = vmatpush1.bf16.msra.mxu0 0
    %3359 = vmatprep.subr.bf16.mxu0 0
    %3360 = vmatpush1.bf16.msra.mxu0 0
    %3361 = vmatprep.subr.bf16.mxu0 0
    %3362 = vmatpush1.bf16.msra.mxu0 0
    %3363 = vmatprep.subr.bf16.mxu0 0
    %3364 = vmatpush1.bf16.msra.mxu0 0
    %3365 = vmatprep.subr.bf16.mxu0 0
    %3366 = vmatpush1.bf16.msra.mxu0 0
    %3367 = vmatprep.subr.bf16.mxu0 0
    %3368 = vmatpush1.bf16.msra.mxu0 0
    %3369 = vmatprep.subr.bf16.mxu0 0
    %3370 = vmatpush1.bf16.msra.mxu0 0
    %3371 = vmatprep.subr.bf16.mxu0 0
    %3372 = vmatpush1.bf16.msra.mxu0 0
    %3373 = vmatprep.mubr.bf16.mxu0 0
    %3374 = vmatmul.mubr.bf16.gmra.mrb[0].mxu0 %v3318
    %v3375 = vpop.f32.mrb[0].mxu0
    %v3376 = vadd.f32 0.0, %v3375
    %v3377 = vpop.f32.mrb[0].mxu0
    %v3378 = vpop.f32.mrb[0].mxu0
    %v3379 = vadd.f32 0.0, %v3378
    %v3380 = vpop.f32.mrb[0].mxu0
    %3381 = vmatprep.mubr.bf16.mxu0 0
    %3382 = vmatmul.mubr.bf16.gmra.mrb[0].mxu0 %v3321
    %v3383 = vpop.f32.mrb[0].mxu0
    %v3384 = vadd.f32 0.0, %v3383
    %v3385 = vpop.f32.mrb[0].mxu0
    %v3386 = vpop.f32.mrb[0].mxu0
    %v3387 = vadd.f32 0.0, %v3386
    %v3388 = vpop.f32.mrb[0].mxu0
    %3389 = vmatprep.mubr.bf16.mxu0 0
    %3390 = vmatmul.mubr.bf16.gmra.mrb[0].mxu0 %v3324
    %v3391 = vpop.f32.mrb[0].mxu0
    %v3392 = vadd.f32 0.0, %v3391
    %v3393 = vpop.f32.mrb[0].mxu0
    %v3394 = vpop.f32.mrb[0].mxu0
    %v3395 = vadd.f32 0.0, %v3394
    %v3396 = vpop.f32.mrb[0].mxu0
    %3397 = vmatprep.mubr.bf16.mxu0 0
    %3398 = vmatmul.mubr.bf16.gmra.mrb[0].mxu0 %v3327
    %v3399 = vpop.f32.mrb[0].mxu0
    %v3400 = vadd.f32 0.0, %v3399
    %v3401 = vpop.f32.mrb[0].mxu0
    %v3402 = vpop.f32.mrb[0].mxu0
    %v3403 = vadd.f32 0.0, %v3402
    %v3404 = vpop.f32.mrb[0].mxu0
    %3405 = vmatprep.mubr.bf16.mxu0 0
    %3406 = vmatmul.mubr.bf16.gmra.mrb[0].mxu0 %v3330
    %v3407 = vpop.f32.mrb[0].mxu0
    %v3408 = vadd.f32 0.0, %v3407
    %v3409 = vpop.f32.mrb[0].mxu0
    %v3410 = vpop.f32.mrb[0].mxu0
    %v3411 = vadd.f32 0.0, %v3410
    %v3412 = vpop.f32.mrb[0].mxu0
    %3413 = vmatprep.mubr.bf16.mxu0 0
    %3414 = vmatmul.mubr.bf16.gmra.mrb[0].mxu0 %v3333
    %v3415 = vpop.f32.mrb[0].mxu0
    %v3416 = vadd.f32 0.0, %v3415
    %v3417 = vpop.f32.mrb[0].mxu0
    %v3418 = vpop.f32.mrb[0].mxu0
    %v3419 = vadd.f32 0.0, %v3418
    %v3420 = vpop.f32.mrb[0].mxu0
    %3421 = vmatprep.mubr.bf16.mxu0 0
    %3422 = vmatmul.mubr.bf16.gmra.mrb[0].mxu0 %v3336
    %v3423 = vpop.f32.mrb[0].mxu0
    %v3424 = vadd.f32 0.0, %v3423
    %v3425 = vpop.f32.mrb[0].mxu0
    %v3426 = vpop.f32.mrb[0].mxu0
    %v3427 = vadd.f32 0.0, %v3426
    %v3428 = vpop.f32.mrb[0].mxu0
    %3429 = vmatprep.mubr.bf16.mxu0 0
    %3430 = vmatmul.mubr.bf16.gmra.mrb[0].mxu0 %v3339
    %v3431 = vpop.f32.mrb[0].mxu0
    %v3432 = vadd.f32 0.0, %v3431
    %v3433 = vpop.f32.mrb[0].mxu0
    %v3434 = vpop.f32.mrb[0].mxu0
    %v3435 = vadd.f32 0.0, %v3434
    %v3436 = vpop.f32.mrb[0].mxu0
    %3437 = vdwg.mxu0
    %v3438 = vadd.f32 %v3229, %v3376
    %v3439 = vadd.f32 %v3230, %v3379
    %v3440 = vadd.f32 %v3231, %v3384
    %v3441 = vadd.f32 %v3232, %v3387
    %v3442 = vadd.f32 %v3233, %v3392
    %v3443 = vadd.f32 %v3234, %v3395
    %v3444 = vadd.f32 %v3235, %v3400
    %v3445 = vadd.f32 %v3236, %v3403
    %v3446 = vadd.f32 %v3237, %v3408
    %v3447 = vadd.f32 %v3238, %v3411
    %v3448 = vadd.f32 %v3239, %v3416
    %v3449 = vadd.f32 %v3240, %v3419
    %v3450 = vadd.f32 %v3241, %v3424
    %v3451 = vadd.f32 %v3242, %v3427
    %v3452 = vadd.f32 %v3243, %v3432
    %v3453 = vadd.f32 %v3244, %v3435
    %v3455 = vlaneseq
    %v3456 = vshrl.u32 %v3455, 7
    %v3457 = vsub.s32 0, %v3456
    %v3458 = vrot.slane %v140, %v3457
    %v3460 = vadd.f32 %v3438, %v3458
    %v3461 = vadd.f32 %v3439, %v3458
    %v3462 = vadd.f32 %v3440, %v3458
    %v3463 = vadd.f32 %v3441, %v3458
    %v3464 = vadd.f32 %v3442, %v3458
    %v3465 = vadd.f32 %v3443, %v3458
    %v3466 = vadd.f32 %v3444, %v3458
    %v3467 = vadd.f32 %v3445, %v3458
    %v3468 = vadd.f32 %v3446, %v3458
    %v3469 = vadd.f32 %v3447, %v3458
    %v3470 = vadd.f32 %v3448, %v3458
    %v3471 = vadd.f32 %v3449, %v3458
    %v3472 = vadd.f32 %v3450, %v3458
    %v3473 = vadd.f32 %v3451, %v3458
    %v3474 = vadd.f32 %v3452, %v3458
    %v3475 = vadd.f32 %v3453, %v3458
    %3476 = vst [vmem:[#allocation2] sm:$0xff] %v3460
    %3477 = vst [vmem:[#allocation2 + $0x8] sm:$0xff] %v3461
    %3478 = vst [vmem:[#allocation2 + $0x10] sm:$0xff] %v3462
    %3479 = vst [vmem:[#allocation2 + $0x18] sm:$0xff] %v3463
    %3480 = vst [vmem:[#allocation2 + $0x20] sm:$0xff] %v3464
    %3481 = vst [vmem:[#allocation2 + $0x28] sm:$0xff] %v3465
    %3482 = vst [vmem:[#allocation2 + $0x30] sm:$0xff] %v3466
    %3483 = vst [vmem:[#allocation2 + $0x38] sm:$0xff] %v3467
    %3484 = vst [vmem:[#allocation2 + $0x40] sm:$0xff] %v3468
    %3485 = vst [vmem:[#allocation2 + $0x48] sm:$0xff] %v3469
    %3486 = vst [vmem:[#allocation2 + $0x50] sm:$0xff] %v3470
    %3487 = vst [vmem:[#allocation2 + $0x58] sm:$0xff] %v3471
    %3488 = vst [vmem:[#allocation2 + $0x60] sm:$0xff] %v3472
    %3489 = vst [vmem:[#allocation2 + $0x68] sm:$0xff] %v3473
    %3490 = vst [vmem:[#allocation2 + $0x70] sm:$0xff] %v3474
    %3491 = vst [vmem:[#allocation2 + $0x78] sm:$0xff] %v3475
    // Predicated region
    $region134: #{tpu_custom_call.1} parent=1 // pred_check
      _
    $region135: #{tpu_custom_call.1} parent=1 // pred_check_branch
      %3493 = sbr.rel (0) target = $region137
    $region136: #{tpu_custom_call.1} parent=1 // pred_region
      %s3495 = ssub.s32 2048, 2048
      %3496 = vsyncadd [#allocation3], %s3495
      %s3497 = sshll.u32 [#allocation2], 4
      %s3498 = int_to_ptr.vmem [resolvable:$true] %s3497
      %3503 = dma.vmem_to_hbm [thread:$0]  %s3498, 2048, %s67, [#allocation3], 128, 128, 8
    $region137: #{tpu_custom_call.1} parent=1 // pred_fallthru
      _
    // Predicated region
    $region138: #{tpu_custom_call.1} parent=1 // pred_check
      _
    $region139: #{tpu_custom_call.1} parent=1 // pred_check_branch
      %3505 = sbr.rel (0) target = $region141
    $region140: #{tpu_custom_call.1} parent=1 // pred_region
      %3506 = dma.done [#allocation3], 2048
    $region141: #{tpu_custom_call.1} parent=1 // pred_fallthru
      _
    %3507 = vsyncpa [#allocation3], 1

</llo_original>
